<compile_context>
chip_gen: v5e
topology: v5e:2x2
jax: 0.10.0
libtpu: 0.0.40
codegen_flags: <defaults>
</compile_context>

<pallas_src>
import functools

import jax
import jax.numpy as jnp
from jax.experimental import pallas as pl
from jax.experimental.pallas import tpu as pltpu


# ----------------------------------------------------------------------------
# kernel
# ----------------------------------------------------------------------------
def _encoder_kernel(tb, n_proc, hid_dim, n_heads, n_layers,
                    x_ref, wes_ref, add_ref,
                    wq_ref, bq_ref, wk_ref, bk_ref, wv_ref, bv_ref,
                    wo_ref, bo_ref, w1_ref, b1_ref, w2_ref, b2_ref,
                    lng_ref, lnb_ref, out_ref):
    f32 = jnp.float32
    bf16 = jnp.bfloat16
    head_dim = hid_dim // n_heads
    n_bin = add_ref.shape[0]
    inv_scale = 1.0 / (float(head_dim) ** 0.5)
    win_rows = tb + n_proc - 1

    # ---- folded conv + tok-embedding (+ *sqrt(hid) + pos-emb) ---------------
    # x_ref is [T, n_bin] (time on sublanes); the TB frame windows for this grid
    # step live in rows [f0, f0 + TB + n_proc - 1).
    f0 = pl.multiple_of(pl.program_id(1) * tb, tb)
    xb = x_ref[pl.ds(f0, win_rows), :]                       # [win_rows, n_bin] f32

    wes = wes_ref[...]                                       # [n_proc, hid]  f32
    add = add_ref[...]                                       # [n_bin, hid]   f32
    embs = []
    for t in range(tb):                                      # static unroll
        w_t = xb[t:t + n_proc, :]                            # [n_proc, n_bin]
        e_t = jax.lax.dot_general(                           # contract n_proc, no .T
            w_t, wes, dimension_numbers=(((0,), (0,)), ((), ())),
            preferred_element_type=f32)                      # [n_bin, hid]
        embs.append(e_t + add)
    src = jnp.concatenate(embs, axis=0)                      # [tb*n_bin, hid] f32

    def layer_norm(v, g, b):
        mu = jnp.mean(v, axis=-1, keepdims=True)
        var = jnp.mean((v - mu) ** 2, axis=-1, keepdims=True)
        return (v - mu) * jax.lax.rsqrt(var + 1e-5) * g + b

    # ---- transformer encoder layers (static unroll) --------------------------
    for l in range(n_layers):
        g = lng_ref[l]                                       # [1, hid]
        b = lnb_ref[l]

        src_b = src.astype(bf16)                             # bf16 into the MXU
        q = jnp.dot(src_b, wq_ref[l], preferred_element_type=f32) + bq_ref[l]
        k = jnp.dot(src_b, wk_ref[l], preferred_element_type=f32) + bk_ref[l]
        v = jnp.dot(src_b, wv_ref[l], preferred_element_type=f32) + bv_ref[l]
        q3 = q.reshape(tb, n_bin, hid_dim)
        k3 = k.reshape(tb, n_bin, hid_dim)
        v3 = v.reshape(tb, n_bin, hid_dim)

        wo_l = wo_ref[l]                                     # [hid, hid] bf16
        attn = jnp.zeros((tb * n_bin, hid_dim), f32)
        for h in range(n_heads):
            hs = h * head_dim
            qh = q3[:, :, hs:hs + head_dim].astype(bf16)
            kh = k3[:, :, hs:hs + head_dim].astype(bf16)
            vh = v3[:, :, hs:hs + head_dim].astype(bf16)
            # energy contracts head_dim directly (no explicit transpose of kh)
            e = jnp.einsum('tqd,tkd->tqk', qh, kh,
                           preferred_element_type=f32) * inv_scale
            e = e - jnp.max(e, axis=-1, keepdims=True)
            p = jnp.exp(e)
            a = p * pl.reciprocal(jnp.sum(p, axis=-1, keepdims=True), approx=True)
            ctx = jnp.einsum('tqk,tkd->tqd', a.astype(bf16), vh,
                             preferred_element_type=f32)     # [tb, n_bin, head_dim]
            # per-head output-projection accumulation (no lane concatenate)
            attn = attn + jnp.dot(
                ctx.reshape(tb * n_bin, head_dim).astype(bf16),
                wo_l[hs:hs + head_dim, :], preferred_element_type=f32)
        attn = attn + bo_ref[l]

        src = layer_norm(src + attn, g, b)

        # positionwise feedforward (shared LayerNorm within a layer, as in PyTorch)
        h1 = jnp.maximum(
            jnp.dot(src.astype(bf16), w1_ref[l], preferred_element_type=f32)
            + b1_ref[l], 0.0)
        ff = jnp.dot(h1.astype(bf16), w2_ref[l],
                     preferred_element_type=f32) + b2_ref[l]

        src = layer_norm(src + ff, g, b)

    out_ref[...] = src.reshape(tb, n_bin, hid_dim)


# ----------------------------------------------------------------------------
# parameter utilities
# ----------------------------------------------------------------------------
def init_params(key, *, n_bin, cnn_channel, cnn_kernel, n_proc, hid_dim,
                n_layers, pf_dim):
    cnn_dim = cnn_channel * (n_proc - cnn_kernel + 1)
    keys = iter(jax.random.split(key, 8 + 12 * n_layers))

    def w(shape, scale=0.05):
        return (scale * jax.random.normal(next(keys), shape)).astype(jnp.float32)

    params = {
        "conv_w": w((cnn_channel, cnn_kernel)),      # Conv2d weight [C,1,1,K] squeezed
        "conv_b": w((cnn_channel,)),
        "tok_w": w((hid_dim, cnn_dim)),              # Linear weight (PyTorch [out,in])
        "tok_b": w((hid_dim,)),
        "pos_emb": w((n_bin, hid_dim), scale=0.1),   # Embedding table
        "layers": [],
    }
    for _ in range(n_layers):
        params["layers"].append({
            "wq": w((hid_dim, hid_dim)), "bq": w((hid_dim,), 0.01),
            "wk": w((hid_dim, hid_dim)), "bk": w((hid_dim,), 0.01),
            "wv": w((hid_dim, hid_dim)), "bv": w((hid_dim,), 0.01),
            "wo": w((hid_dim, hid_dim)), "bo": w((hid_dim,), 0.01),
            "w1": w((pf_dim, hid_dim)), "b1": w((pf_dim,), 0.01),
            "w2": w((hid_dim, pf_dim)), "b2": w((hid_dim,), 0.01),
            "ln_g": jnp.ones((hid_dim,), jnp.float32),
            "ln_b": jnp.zeros((hid_dim,), jnp.float32),
        })
    return params


def _fold_conv_tok(conv_w, conv_b, tok_w, tok_b, *, n_proc, cnn_kernel,
                   cnn_channel, hid_dim):
    """Fold Conv2d(1,C,(1,K)) + tok_embedding Linear into W_eff[n_proc,hid], b_eff[hid]."""
    w_out = n_proc - cnn_kernel + 1
    tok_w_r = tok_w.reshape(hid_dim, cnn_channel, w_out)       # [H, C, Wout]
    b_eff = tok_b + jnp.einsum('hcw,c->h', tok_w_r, conv_b)    # [H]
    w_eff = jnp.zeros((n_proc, hid_dim), jnp.float32)
    for k in range(cnn_kernel):
        contrib = jnp.einsum('hcw,c->wh', tok_w_r, conv_w[:, k])   # [Wout, H]
        w_eff = w_eff.at[k:k + w_out].add(contrib)
    return w_eff, b_eff


# ----------------------------------------------------------------------------
# wrapper
# ----------------------------------------------------------------------------
def encoder_spec2midi(spec_in, params, *, n_margin, n_frame, n_bin,
                      cnn_channel, cnn_kernel, hid_dim, n_layers, n_heads,
                      pf_dim, frames_per_step=8):
    batch = spec_in.shape[0]
    n_proc = 2 * n_margin + 1
    total_t = n_frame + n_proc - 1
    f32, bf16 = jnp.float32, jnp.bfloat16

    # frames per grid step: largest divisor of n_frame not exceeding the request.
    # (use frames_per_step=8 on v5e/v6e; 4 is recommended on v7x due to 64 MiB VMEM)
    tb = max(d for d in range(1, min(frames_per_step, n_frame) + 1)
             if n_frame % d == 0)
    n_ftiles = n_frame // tb

    # --- glue: time axis on sublanes; the unfold is done inside the kernel ----
    spec_t = jnp.transpose(spec_in[:, :, :total_t], (0, 2, 1)).astype(f32)   # [B,T,n_bin]

    # --- glue: fold conv + tok-embedding (+ sqrt(hid) scale + pos emb) --------
    scale_freq = float(hid_dim) ** 0.5
    w_eff, b_eff = _fold_conv_tok(params["conv_w"], params["conv_b"],
                                  params["tok_w"], params["tok_b"],
                                  n_proc=n_proc, cnn_kernel=cnn_kernel,
                                  cnn_channel=cnn_channel, hid_dim=hid_dim)
    wes = (w_eff * scale_freq).astype(f32)                        # [n_proc, hid]
    add = (params["pos_emb"].astype(f32)
           + (b_eff * scale_freq)[None, :]).astype(f32)           # [n_bin, hid]

    def stack(name):
        return jnp.stack([lp[name] for lp in params["layers"]], axis=0)

    # weight matrices in bf16 (MXU-native inputs, half the VMEM residency);
    # biases / LayerNorm params stay f32.
    wq = jnp.transpose(stack("wq"), (0, 2, 1)).astype(bf16)
    wk = jnp.transpose(stack("wk"), (0, 2, 1)).astype(bf16)
    wv = jnp.transpose(stack("wv"), (0, 2, 1)).astype(bf16)
    wo = jnp.transpose(stack("wo"), (0, 2, 1)).astype(bf16)
    w1 = jnp.transpose(stack("w1"), (0, 2, 1)).astype(bf16)       # [L, hid, pf]
    w2 = jnp.transpose(stack("w2"), (0, 2, 1)).astype(bf16)       # [L, pf, hid]
    bq = stack("bq")[:, None, :].astype(f32)
    bk = stack("bk")[:, None, :].astype(f32)
    bv = stack("bv")[:, None, :].astype(f32)
    bo = stack("bo")[:, None, :].astype(f32)
    b1 = stack("b1")[:, None, :].astype(f32)
    b2 = stack("b2")[:, None, :].astype(f32)
    lng = stack("ln_g")[:, None, :].astype(f32)
    lnb = stack("ln_b")[:, None, :].astype(f32)

    def const_spec(arr):
        nd = arr.ndim
        return pl.BlockSpec(arr.shape, lambda b, f, _nd=nd: (0,) * _nd)

    in_specs = [
        pl.BlockSpec((None, total_t, n_bin), lambda b, f: (b, 0, 0)),
        const_spec(wes), const_spec(add),
        const_spec(wq), const_spec(bq), const_spec(wk), const_spec(bk),
        const_spec(wv), const_spec(bv), const_spec(wo), const_spec(bo),
        const_spec(w1), const_spec(b1), const_spec(w2), const_spec(b2),
        const_spec(lng), const_spec(lnb),
    ]
    out_specs = pl.BlockSpec((None, tb, n_bin, hid_dim), lambda b, f: (b, f, 0, 0))

    # advisory cost estimate so XLA can schedule neighbors around the long call
    bf_total = batch * n_frame
    flops_layer = (8 * n_bin * hid_dim * hid_dim
                   + 4 * n_bin * hid_dim * pf_dim
                   + 4 * n_bin * n_bin * hid_dim)
    flops = bf_total * (n_layers * flops_layer + 2 * n_bin * n_proc * hid_dim)
    transcendentals = bf_total * n_layers * (n_heads * n_bin * n_bin + 2 * n_bin)
    weight_bytes = sum(int(a.size) * a.dtype.itemsize
                       for a in (wes, add, wq, bq, wk, bk, wv, bv, wo, bo,
                                 w1, b1, w2, b2, lng, lnb))
    bytes_accessed = (int(spec_t.size) * 4
                      + batch * n_frame * n_bin * hid_dim * 4 + weight_bytes)
    cost = pl.CostEstimate(flops=int(flops), transcendentals=int(transcendentals),
                           bytes_accessed=int(bytes_accessed))

    kernel = functools.partial(_encoder_kernel, tb, n_proc, hid_dim, n_heads,
                               n_layers)

    # TODO(synk): for production-sized configs (hid=256, pf=512, n_bin=256) set
    # pltpu.CompilerParams(vmem_limit_bytes=...) from the measured footprint.
    out = pl.pallas_call(
        kernel,
        out_shape=jax.ShapeDtypeStruct((batch, n_frame, n_bin, hid_dim), f32),
        grid_spec=pltpu.PrefetchScalarGridSpec(
            num_scalar_prefetch=0,
            grid=(batch, n_ftiles),
            in_specs=in_specs,
            out_specs=out_specs,
        ),
        compiler_params=pltpu.CompilerParams(
            dimension_semantics=("parallel", "parallel")),
        cost_estimate=cost,
    )(spec_t, wes, add, wq, bq, wk, bk, wv, bv, wo, bo, w1, b1, w2, b2, lng, lnb)

    return out


# ----------------------------------------------------------------------------
# pure-JAX f32 reference (mirrors the PyTorch forward, eval mode)
# ----------------------------------------------------------------------------
def _reference_forward(spec_in, params, *, n_margin, n_frame, n_bin,
                       cnn_channel, cnn_kernel, hid_dim, n_layers, n_heads,
                       pf_dim):
    f32 = jnp.float32
    n_proc = 2 * n_margin + 1
    w_out = n_proc - cnn_kernel + 1
    batch = spec_in.shape[0]
    bf = batch * n_frame
    head_dim = hid_dim // n_heads

    idx = jnp.arange(n_frame)[:, None] + jnp.arange(n_proc)[None, :]
    win = spec_in[:, :, idx]                                   # [B, n_bin, F, P]
    win = jnp.transpose(win, (0, 2, 1, 3)).reshape(bf, n_bin, n_proc).astype(f32)

    conv = jnp.zeros((bf, cnn_channel, n_bin, w_out), f32)
    conv = conv + params["conv_b"][None, :, None, None]
    for k in range(cnn_kernel):
        conv = conv + (win[:, None, :, k:k + w_out]
                       * params["conv_w"][None, :, None, k:k + 1])
    conv = jnp.transpose(conv, (0, 2, 1, 3)).reshape(bf, n_bin, cnn_channel * w_out)
    emb = conv @ params["tok_w"].T + params["tok_b"]
    src = emb * (float(hid_dim) ** 0.5) + params["pos_emb"][None]

    def layer_norm(v, g, b):
        mu = jnp.mean(v, axis=-1, keepdims=True)
        var = jnp.mean((v - mu) ** 2, axis=-1, keepdims=True)
        return (v - mu) * jax.lax.rsqrt(var + 1e-5) * g + b

    def split(x):
        return jnp.transpose(x.reshape(bf, n_bin, n_heads, head_dim), (0, 2, 1, 3))

    for lp in params["layers"]:
        q = src @ lp["wq"].T + lp["bq"]
        k = src @ lp["wk"].T + lp["bk"]
        v = src @ lp["wv"].T + lp["bv"]
        qh, kh, vh = split(q), split(k), split(v)
        energy = jnp.einsum('bhqd,bhkd->bhqk', qh, kh) / (float(head_dim) ** 0.5)
        att = jax.nn.softmax(energy, axis=-1)
        ctx = jnp.einsum('bhqk,bhkd->bhqd', att, vh)
        ctx = jnp.transpose(ctx, (0, 2, 1, 3)).reshape(bf, n_bin, hid_dim)
        attn = ctx @ lp["wo"].T + lp["bo"]
        src = layer_norm(src + attn, lp["ln_g"], lp["ln_b"])
        h1 = jnp.maximum(src @ lp["w1"].T + lp["b1"], 0.0)
        ff = h1 @ lp["w2"].T + lp["b2"]
        src = layer_norm(src + ff, lp["ln_g"], lp["ln_b"])

    return src.reshape(batch, n_frame, n_bin, hid_dim)


if __name__ == "__main__":
    # small, self-consistent config
    batch = 2
    n_margin = 2                      # n_proc = 5
    n_frame = 4
    n_bin = 16
    cnn_channel = 4
    cnn_kernel = 3                    # cnn_dim = 4 * 3 = 12
    hid_dim = 32
    n_layers = 2
    n_heads = 4
    pf_dim = 64
    n_proc = 2 * n_margin + 1
    total_t = n_frame + n_proc - 1    # so unfold yields exactly n_frame windows

    key = jax.random.PRNGKey(0)
    k_in, k_par = jax.random.split(key)
    spec_in = jax.random.normal(k_in, (batch, n_bin, total_t), dtype=jnp.float32)
    params = init_params(k_par, n_bin=n_bin, cnn_channel=cnn_channel,
                         cnn_kernel=cnn_kernel, n_proc=n_proc, hid_dim=hid_dim,
                         n_layers=n_layers, pf_dim=pf_dim)

    cfg = dict(n_margin=n_margin, n_frame=n_frame, n_bin=n_bin,
               cnn_channel=cnn_channel, cnn_kernel=cnn_kernel, hid_dim=hid_dim,
               n_layers=n_layers, n_heads=n_heads, pf_dim=pf_dim)

    out = encoder_spec2midi(spec_in, params, **cfg)
    out = jax.block_until_ready(out)

    assert out.shape == (batch, n_frame, n_bin, hid_dim), out.shape
    assert bool(jnp.all(jnp.isfinite(out)))

    # loose tolerance: kernel feeds bf16 into the MXU (f32 accumulation) while
    # the reference is pure f32.
    ref = _reference_forward(spec_in, params, **cfg)
    max_err = float(jnp.max(jnp.abs(out - ref)))
    assert max_err < 0.1, max_err

    print("KERNEL_OK")
</pallas_src>

<mosaic_0001>
module attributes {stable_mosaic.version = 11 : i64} {
  func.func @_encoder_kernel(%arg0: i32, %arg1: i32, %arg2: memref<1x8x16xf32, #tpu.memory_space<vmem>>, %arg3: memref<5x32xf32, #tpu.memory_space<vmem>>, %arg4: memref<16x32xf32, #tpu.memory_space<vmem>>, %arg5: memref<2x32x32xbf16, #tpu.memory_space<vmem>>, %arg6: memref<2x1x32xf32, #tpu.memory_space<vmem>>, %arg7: memref<2x32x32xbf16, #tpu.memory_space<vmem>>, %arg8: memref<2x1x32xf32, #tpu.memory_space<vmem>>, %arg9: memref<2x32x32xbf16, #tpu.memory_space<vmem>>, %arg10: memref<2x1x32xf32, #tpu.memory_space<vmem>>, %arg11: memref<2x32x32xbf16, #tpu.memory_space<vmem>>, %arg12: memref<2x1x32xf32, #tpu.memory_space<vmem>>, %arg13: memref<2x32x64xbf16, #tpu.memory_space<vmem>>, %arg14: memref<2x1x64xf32, #tpu.memory_space<vmem>>, %arg15: memref<2x64x32xbf16, #tpu.memory_space<vmem>>, %arg16: memref<2x1x32xf32, #tpu.memory_space<vmem>>, %arg17: memref<2x1x32xf32, #tpu.memory_space<vmem>>, %arg18: memref<2x1x32xf32, #tpu.memory_space<vmem>>, %arg19: memref<1x4x16x32xf32, #tpu.memory_space<vmem>>) attributes {dimension_semantics = [#tpu.dimension_semantics<parallel>, #tpu.dimension_semantics<parallel>], iteration_bounds = array<i64: 2, 1>, scalar_prefetch = 0 : i64, scratch_operands = 0 : i64, tpu.core_type = #tpu.core_type<tc>, window_params = [{transform_indices = @transform_0, window_bounds = array<i64: 1, 8, 16>}, {pipeline_mode = #tpu.pipeline_mode<synchronous>, transform_indices = @transform_1, window_bounds = array<i64: 5, 32>}, {pipeline_mode = #tpu.pipeline_mode<synchronous>, transform_indices = @transform_2, window_bounds = array<i64: 16, 32>}, {pipeline_mode = #tpu.pipeline_mode<synchronous>, transform_indices = @transform_3, window_bounds = array<i64: 2, 32, 32>}, {pipeline_mode = #tpu.pipeline_mode<synchronous>, transform_indices = @transform_4, window_bounds = array<i64: 2, 1, 32>}, {pipeline_mode = #tpu.pipeline_mode<synchronous>, transform_indices = @transform_5, window_bounds = array<i64: 2, 32, 32>}, {pipeline_mode = #tpu.pipeline_mode<synchronous>, transform_indices = @transform_6, window_bounds = array<i64: 2, 1, 32>}, {pipeline_mode = #tpu.pipeline_mode<synchronous>, transform_indices = @transform_7, window_bounds = array<i64: 2, 32, 32>}, {pipeline_mode = #tpu.pipeline_mode<synchronous>, transform_indices = @transform_8, window_bounds = array<i64: 2, 1, 32>}, {pipeline_mode = #tpu.pipeline_mode<synchronous>, transform_indices = @transform_9, window_bounds = array<i64: 2, 32, 32>}, {pipeline_mode = #tpu.pipeline_mode<synchronous>, transform_indices = @transform_10, window_bounds = array<i64: 2, 1, 32>}, {pipeline_mode = #tpu.pipeline_mode<synchronous>, transform_indices = @transform_11, window_bounds = array<i64: 2, 32, 64>}, {pipeline_mode = #tpu.pipeline_mode<synchronous>, transform_indices = @transform_12, window_bounds = array<i64: 2, 1, 64>}, {pipeline_mode = #tpu.pipeline_mode<synchronous>, transform_indices = @transform_13, window_bounds = array<i64: 2, 64, 32>}, {pipeline_mode = #tpu.pipeline_mode<synchronous>, transform_indices = @transform_14, window_bounds = array<i64: 2, 1, 32>}, {pipeline_mode = #tpu.pipeline_mode<synchronous>, transform_indices = @transform_15, window_bounds = array<i64: 2, 1, 32>}, {pipeline_mode = #tpu.pipeline_mode<synchronous>, transform_indices = @transform_16, window_bounds = array<i64: 2, 1, 32>}, {transform_indices = @transform_17, window_bounds = array<i64: 1, 4, 16, 32>}]} {
    %c4_i32 = arith.constant 4 : i32
    %0 = arith.muli %arg1, %c4_i32 : i32
    %1 = tpu.assume_multiple %0, 4 : i32
    %c0 = arith.constant 0 : index
    %2 = arith.index_cast %1 : i32 to index
    %c0_0 = arith.constant 0 : index
    %3 = vector.load %arg2[%c0, %2, %c0_0] : memref<1x8x16xf32, #tpu.memory_space<vmem>>, vector<1x8x16xf32>
    %4 = vector.shape_cast %3 : vector<1x8x16xf32> to vector<8x16xf32>
    %c0_1 = arith.constant 0 : index
    %c0_2 = arith.constant 0 : index
    %5 = vector.load %arg3[%c0_1, %c0_2] : memref<5x32xf32, #tpu.memory_space<vmem>>, vector<5x32xf32>
    %c0_3 = arith.constant 0 : index
    %c0_4 = arith.constant 0 : index
    %6 = vector.load %arg4[%c0_3, %c0_4] : memref<16x32xf32, #tpu.memory_space<vmem>>, vector<16x32xf32>
    %7 = vector.extract_strided_slice %4 {offsets = [0, 0], sizes = [5, 16], strides = [1, 1]} : vector<8x16xf32> to vector<5x16xf32>
    %cst = arith.constant dense<0.000000e+00> : vector<16x32xf32>
    %8 = tpu.matmul %7, %5, %cst {dimension_numbers = #tpu.dot_dimension_numbers<[0], [0], [1], [1], [0, 1, 1, 1], [], []>} : vector<5x16xf32>, vector<5x32xf32>, vector<16x32xf32> -> vector<16x32xf32>
    %9 = arith.addf %8, %6 : vector<16x32xf32>
    %10 = vector.extract_strided_slice %4 {offsets = [1, 0], sizes = [5, 16], strides = [1, 1]} : vector<8x16xf32> to vector<5x16xf32>
    %cst_5 = arith.constant dense<0.000000e+00> : vector<16x32xf32>
    %11 = tpu.matmul %10, %5, %cst_5 {dimension_numbers = #tpu.dot_dimension_numbers<[0], [0], [1], [1], [0, 1, 1, 1], [], []>} : vector<5x16xf32>, vector<5x32xf32>, vector<16x32xf32> -> vector<16x32xf32>
    %12 = arith.addf %11, %6 : vector<16x32xf32>
    %13 = vector.extract_strided_slice %4 {offsets = [2, 0], sizes = [5, 16], strides = [1, 1]} : vector<8x16xf32> to vector<5x16xf32>
    %cst_6 = arith.constant dense<0.000000e+00> : vector<16x32xf32>
    %14 = tpu.matmul %13, %5, %cst_6 {dimension_numbers = #tpu.dot_dimension_numbers<[0], [0], [1], [1], [0, 1, 1, 1], [], []>} : vector<5x16xf32>, vector<5x32xf32>, vector<16x32xf32> -> vector<16x32xf32>
    %15 = arith.addf %14, %6 : vector<16x32xf32>
    %16 = vector.extract_strided_slice %4 {offsets = [3, 0], sizes = [5, 16], strides = [1, 1]} : vector<8x16xf32> to vector<5x16xf32>
    %cst_7 = arith.constant dense<0.000000e+00> : vector<16x32xf32>
    %17 = tpu.matmul %16, %5, %cst_7 {dimension_numbers = #tpu.dot_dimension_numbers<[0], [0], [1], [1], [0, 1, 1, 1], [], []>} : vector<5x16xf32>, vector<5x32xf32>, vector<16x32xf32> -> vector<16x32xf32>
    %18 = arith.addf %17, %6 : vector<16x32xf32>
    %19 = tpu.concatenate %9, %12, %15, %18 in 0 : vector<16x32xf32>, vector<16x32xf32>, vector<16x32xf32>, vector<16x32xf32> -> vector<64x32xf32>
    %c0_8 = arith.constant 0 : index
    %c0_9 = arith.constant 0 : index
    %c0_10 = arith.constant 0 : index
    %20 = vector.load %arg17[%c0_8, %c0_9, %c0_10] : memref<2x1x32xf32, #tpu.memory_space<vmem>>, vector<1x1x32xf32>
    %21 = vector.shape_cast %20 : vector<1x1x32xf32> to vector<1x32xf32>
    %c0_11 = arith.constant 0 : index
    %c0_12 = arith.constant 0 : index
    %c0_13 = arith.constant 0 : index
    %22 = vector.load %arg18[%c0_11, %c0_12, %c0_13] : memref<2x1x32xf32, #tpu.memory_space<vmem>>, vector<1x1x32xf32>
    %23 = vector.shape_cast %22 : vector<1x1x32xf32> to vector<1x32xf32>
    %24 = arith.truncf %19 : vector<64x32xf32> to vector<64x32xbf16>
    %c0_14 = arith.constant 0 : index
    %c0_15 = arith.constant 0 : index
    %c0_16 = arith.constant 0 : index
    %25 = vector.load %arg5[%c0_14, %c0_15, %c0_16] : memref<2x32x32xbf16, #tpu.memory_space<vmem>>, vector<1x32x32xbf16>
    %26 = vector.shape_cast %25 : vector<1x32x32xbf16> to vector<32x32xbf16>
    %cst_17 = arith.constant dense<0.000000e+00> : vector<64x32xf32>
    %27 = tpu.matmul %24, %26, %cst_17 {dimension_numbers = #tpu.dot_dimension_numbers<[1], [0], [0], [1], [0, 0, 1, 1], [], []>} : vector<64x32xbf16>, vector<32x32xbf16>, vector<64x32xf32> -> vector<64x32xf32>
    %c0_18 = arith.constant 0 : index
    %c0_19 = arith.constant 0 : index
    %c0_20 = arith.constant 0 : index
    %28 = vector.load %arg6[%c0_18, %c0_19, %c0_20] : memref<2x1x32xf32, #tpu.memory_space<vmem>>, vector<1x1x32xf32>
    %29 = vector.shape_cast %28 : vector<1x1x32xf32> to vector<1x32xf32>
    %30 = vector.broadcast %29 : vector<1x32xf32> to vector<64x32xf32>
    %31 = arith.addf %27, %30 : vector<64x32xf32>
    %c0_21 = arith.constant 0 : index
    %c0_22 = arith.constant 0 : index
    %c0_23 = arith.constant 0 : index
    %32 = vector.load %arg7[%c0_21, %c0_22, %c0_23] : memref<2x32x32xbf16, #tpu.memory_space<vmem>>, vector<1x32x32xbf16>
    %33 = vector.shape_cast %32 : vector<1x32x32xbf16> to vector<32x32xbf16>
    %cst_24 = arith.constant dense<0.000000e+00> : vector<64x32xf32>
    %34 = tpu.matmul %24, %33, %cst_24 {dimension_numbers = #tpu.dot_dimension_numbers<[1], [0], [0], [1], [0, 0, 1, 1], [], []>} : vector<64x32xbf16>, vector<32x32xbf16>, vector<64x32xf32> -> vector<64x32xf32>
    %c0_25 = arith.constant 0 : index
    %c0_26 = arith.constant 0 : index
    %c0_27 = arith.constant 0 : index
    %35 = vector.load %arg8[%c0_25, %c0_26, %c0_27] : memref<2x1x32xf32, #tpu.memory_space<vmem>>, vector<1x1x32xf32>
    %36 = vector.shape_cast %35 : vector<1x1x32xf32> to vector<1x32xf32>
    %37 = vector.broadcast %36 : vector<1x32xf32> to vector<64x32xf32>
    %38 = arith.addf %34, %37 : vector<64x32xf32>
    %c0_28 = arith.constant 0 : index
    %c0_29 = arith.constant 0 : index
    %c0_30 = arith.constant 0 : index
    %39 = vector.load %arg9[%c0_28, %c0_29, %c0_30] : memref<2x32x32xbf16, #tpu.memory_space<vmem>>, vector<1x32x32xbf16>
    %40 = vector.shape_cast %39 : vector<1x32x32xbf16> to vector<32x32xbf16>
    %cst_31 = arith.constant dense<0.000000e+00> : vector<64x32xf32>
    %41 = tpu.matmul %24, %40, %cst_31 {dimension_numbers = #tpu.dot_dimension_numbers<[1], [0], [0], [1], [0, 0, 1, 1], [], []>} : vector<64x32xbf16>, vector<32x32xbf16>, vector<64x32xf32> -> vector<64x32xf32>
    %c0_32 = arith.constant 0 : index
    %c0_33 = arith.constant 0 : index
    %c0_34 = arith.constant 0 : index
    %42 = vector.load %arg10[%c0_32, %c0_33, %c0_34] : memref<2x1x32xf32, #tpu.memory_space<vmem>>, vector<1x1x32xf32>
    %43 = vector.shape_cast %42 : vector<1x1x32xf32> to vector<1x32xf32>
    %44 = vector.broadcast %43 : vector<1x32xf32> to vector<64x32xf32>
    %45 = arith.addf %41, %44 : vector<64x32xf32>
    %46 = vector.shape_cast %31 : vector<64x32xf32> to vector<4x16x32xf32>
    %47 = vector.shape_cast %38 : vector<64x32xf32> to vector<4x16x32xf32>
    %48 = vector.shape_cast %45 : vector<64x32xf32> to vector<4x16x32xf32>
    %c0_35 = arith.constant 0 : index
    %c0_36 = arith.constant 0 : index
    %c0_37 = arith.constant 0 : index
    %49 = vector.load %arg11[%c0_35, %c0_36, %c0_37] : memref<2x32x32xbf16, #tpu.memory_space<vmem>>, vector<1x32x32xbf16>
    %50 = vector.shape_cast %49 : vector<1x32x32xbf16> to vector<32x32xbf16>
    %cst_38 = arith.constant 0.000000e+00 : f32
    %51 = vector.broadcast %cst_38 : f32 to vector<64x32xf32>
    %52 = vector.extract_strided_slice %46 {offsets = [0, 0, 0], sizes = [4, 16, 8], strides = [1, 1, 1]} : vector<4x16x32xf32> to vector<4x16x8xf32>
    %53 = arith.truncf %52 : vector<4x16x8xf32> to vector<4x16x8xbf16>
    %54 = vector.extract_strided_slice %47 {offsets = [0, 0, 0], sizes = [4, 16, 8], strides = [1, 1, 1]} : vector<4x16x32xf32> to vector<4x16x8xf32>
    %55 = arith.truncf %54 : vector<4x16x8xf32> to vector<4x16x8xbf16>
    %56 = vector.extract_strided_slice %48 {offsets = [0, 0, 0], sizes = [4, 16, 8], strides = [1, 1, 1]} : vector<4x16x32xf32> to vector<4x16x8xf32>
    %57 = arith.truncf %56 : vector<4x16x8xf32> to vector<4x16x8xbf16>
    "tpu.trace_start"() <{level = 10 : i32, message = "tqd,tkd->tqk"}> : () -> ()
    %cst_39 = arith.constant dense<0.000000e+00> : vector<4x16x16xf32>
    %58 = tpu.matmul %53, %55, %cst_39 {dimension_numbers = #tpu.dot_dimension_numbers<[2], [2], [1], [1], [0, 0, 0, 1, 1, 1], [0], [0]>} : vector<4x16x8xbf16>, vector<4x16x8xbf16>, vector<4x16x16xf32> -> vector<4x16x16xf32>
    "tpu.trace_stop"() : () -> ()
    %cst_40 = arith.constant 0.353553385 : f32
    %59 = vector.broadcast %cst_40 : f32 to vector<4x16x16xf32>
    %60 = arith.mulf %58, %59 : vector<4x16x16xf32>
    %cst_41 = arith.constant dense<0xFF800000> : vector<4x16xf32>
    %61 = vector.multi_reduction <maximumf>, %60, %cst_41 [2] : vector<4x16x16xf32> to vector<4x16xf32>
    %62 = vector.shape_cast %61 : vector<4x16xf32> to vector<4x16x1xf32>
    %63 = vector.broadcast %62 : vector<4x16x1xf32> to vector<4x16x16xf32>
    %64 = arith.subf %60, %63 : vector<4x16x16xf32>
    %65 = math.exp %64 : vector<4x16x16xf32>
    %cst_42 = arith.constant dense<0.000000e+00> : vector<4x16xf32>
    %66 = vector.multi_reduction <add>, %65, %cst_42 [2] : vector<4x16x16xf32> to vector<4x16xf32>
    %67 = vector.shape_cast %66 : vector<4x16xf32> to vector<4x16x1xf32>
    %68 = tpu.reciprocal %67 {approx = true} : vector<4x16x1xf32> -> vector<4x16x1xf32>
    %69 = vector.broadcast %68 : vector<4x16x1xf32> to vector<4x16x16xf32>
    %70 = arith.mulf %65, %69 : vector<4x16x16xf32>
    %71 = arith.truncf %70 : vector<4x16x16xf32> to vector<4x16x16xbf16>
    "tpu.trace_start"() <{level = 10 : i32, message = "tqk,tkd->tqd"}> : () -> ()
    %cst_43 = arith.constant dense<0.000000e+00> : vector<4x16x8xf32>
    %72 = tpu.matmul %71, %57, %cst_43 {dimension_numbers = #tpu.dot_dimension_numbers<[2], [1], [1], [2], [0, 0, 0, 1, 1, 2], [0], [0]>} : vector<4x16x16xbf16>, vector<4x16x8xbf16>, vector<4x16x8xf32> -> vector<4x16x8xf32>
    "tpu.trace_stop"() : () -> ()
    %73 = vector.shape_cast %72 : vector<4x16x8xf32> to vector<64x8xf32>
    %74 = arith.truncf %73 : vector<64x8xf32> to vector<64x8xbf16>
    %75 = vector.extract_strided_slice %50 {offsets = [0, 0], sizes = [8, 32], strides = [1, 1]} : vector<32x32xbf16> to vector<8x32xbf16>
    %cst_44 = arith.constant dense<0.000000e+00> : vector<64x32xf32>
    %76 = tpu.matmul %74, %75, %cst_44 {dimension_numbers = #tpu.dot_dimension_numbers<[1], [0], [0], [1], [0, 0, 1, 1], [], []>} : vector<64x8xbf16>, vector<8x32xbf16>, vector<64x32xf32> -> vector<64x32xf32>
    %77 = arith.addf %51, %76 : vector<64x32xf32>
    %78 = vector.extract_strided_slice %46 {offsets = [0, 0, 8], sizes = [4, 16, 8], strides = [1, 1, 1]} : vector<4x16x32xf32> to vector<4x16x8xf32>
    %79 = arith.truncf %78 : vector<4x16x8xf32> to vector<4x16x8xbf16>
    %80 = vector.extract_strided_slice %47 {offsets = [0, 0, 8], sizes = [4, 16, 8], strides = [1, 1, 1]} : vector<4x16x32xf32> to vector<4x16x8xf32>
    %81 = arith.truncf %80 : vector<4x16x8xf32> to vector<4x16x8xbf16>
    %82 = vector.extract_strided_slice %48 {offsets = [0, 0, 8], sizes = [4, 16, 8], strides = [1, 1, 1]} : vector<4x16x32xf32> to vector<4x16x8xf32>
    %83 = arith.truncf %82 : vector<4x16x8xf32> to vector<4x16x8xbf16>
    "tpu.trace_start"() <{level = 10 : i32, message = "tqd,tkd->tqk"}> : () -> ()
    %cst_45 = arith.constant dense<0.000000e+00> : vector<4x16x16xf32>
    %84 = tpu.matmul %79, %81, %cst_45 {dimension_numbers = #tpu.dot_dimension_numbers<[2], [2], [1], [1], [0, 0, 0, 1, 1, 1], [0], [0]>} : vector<4x16x8xbf16>, vector<4x16x8xbf16>, vector<4x16x16xf32> -> vector<4x16x16xf32>
    "tpu.trace_stop"() : () -> ()
    %cst_46 = arith.constant 0.353553385 : f32
    %85 = vector.broadcast %cst_46 : f32 to vector<4x16x16xf32>
    %86 = arith.mulf %84, %85 : vector<4x16x16xf32>
    %cst_47 = arith.constant dense<0xFF800000> : vector<4x16xf32>
    %87 = vector.multi_reduction <maximumf>, %86, %cst_47 [2] : vector<4x16x16xf32> to vector<4x16xf32>
    %88 = vector.shape_cast %87 : vector<4x16xf32> to vector<4x16x1xf32>
    %89 = vector.broadcast %88 : vector<4x16x1xf32> to vector<4x16x16xf32>
    %90 = arith.subf %86, %89 : vector<4x16x16xf32>
    %91 = math.exp %90 : vector<4x16x16xf32>
    %cst_48 = arith.constant dense<0.000000e+00> : vector<4x16xf32>
    %92 = vector.multi_reduction <add>, %91, %cst_48 [2] : vector<4x16x16xf32> to vector<4x16xf32>
    %93 = vector.shape_cast %92 : vector<4x16xf32> to vector<4x16x1xf32>
    %94 = tpu.reciprocal %93 {approx = true} : vector<4x16x1xf32> -> vector<4x16x1xf32>
    %95 = vector.broadcast %94 : vector<4x16x1xf32> to vector<4x16x16xf32>
    %96 = arith.mulf %91, %95 : vector<4x16x16xf32>
    %97 = arith.truncf %96 : vector<4x16x16xf32> to vector<4x16x16xbf16>
    "tpu.trace_start"() <{level = 10 : i32, message = "tqk,tkd->tqd"}> : () -> ()
    %cst_49 = arith.constant dense<0.000000e+00> : vector<4x16x8xf32>
    %98 = tpu.matmul %97, %83, %cst_49 {dimension_numbers = #tpu.dot_dimension_numbers<[2], [1], [1], [2], [0, 0, 0, 1, 1, 2], [0], [0]>} : vector<4x16x16xbf16>, vector<4x16x8xbf16>, vector<4x16x8xf32> -> vector<4x16x8xf32>
    "tpu.trace_stop"() : () -> ()
    %99 = vector.shape_cast %98 : vector<4x16x8xf32> to vector<64x8xf32>
    %100 = arith.truncf %99 : vector<64x8xf32> to vector<64x8xbf16>
    %101 = vector.extract_strided_slice %50 {offsets = [8, 0], sizes = [8, 32], strides = [1, 1]} : vector<32x32xbf16> to vector<8x32xbf16>
    %cst_50 = arith.constant dense<0.000000e+00> : vector<64x32xf32>
    %102 = tpu.matmul %100, %101, %cst_50 {dimension_numbers = #tpu.dot_dimension_numbers<[1], [0], [0], [1], [0, 0, 1, 1], [], []>} : vector<64x8xbf16>, vector<8x32xbf16>, vector<64x32xf32> -> vector<64x32xf32>
    %103 = arith.addf %77, %102 : vector<64x32xf32>
    %104 = vector.extract_strided_slice %46 {offsets = [0, 0, 16], sizes = [4, 16, 8], strides = [1, 1, 1]} : vector<4x16x32xf32> to vector<4x16x8xf32>
    %105 = arith.truncf %104 : vector<4x16x8xf32> to vector<4x16x8xbf16>
    %106 = vector.extract_strided_slice %47 {offsets = [0, 0, 16], sizes = [4, 16, 8], strides = [1, 1, 1]} : vector<4x16x32xf32> to vector<4x16x8xf32>
    %107 = arith.truncf %106 : vector<4x16x8xf32> to vector<4x16x8xbf16>
    %108 = vector.extract_strided_slice %48 {offsets = [0, 0, 16], sizes = [4, 16, 8], strides = [1, 1, 1]} : vector<4x16x32xf32> to vector<4x16x8xf32>
    %109 = arith.truncf %108 : vector<4x16x8xf32> to vector<4x16x8xbf16>
    "tpu.trace_start"() <{level = 10 : i32, message = "tqd,tkd->tqk"}> : () -> ()
    %cst_51 = arith.constant dense<0.000000e+00> : vector<4x16x16xf32>
    %110 = tpu.matmul %105, %107, %cst_51 {dimension_numbers = #tpu.dot_dimension_numbers<[2], [2], [1], [1], [0, 0, 0, 1, 1, 1], [0], [0]>} : vector<4x16x8xbf16>, vector<4x16x8xbf16>, vector<4x16x16xf32> -> vector<4x16x16xf32>
    "tpu.trace_stop"() : () -> ()
    %cst_52 = arith.constant 0.353553385 : f32
    %111 = vector.broadcast %cst_52 : f32 to vector<4x16x16xf32>
    %112 = arith.mulf %110, %111 : vector<4x16x16xf32>
    %cst_53 = arith.constant dense<0xFF800000> : vector<4x16xf32>
    %113 = vector.multi_reduction <maximumf>, %112, %cst_53 [2] : vector<4x16x16xf32> to vector<4x16xf32>
    %114 = vector.shape_cast %113 : vector<4x16xf32> to vector<4x16x1xf32>
    %115 = vector.broadcast %114 : vector<4x16x1xf32> to vector<4x16x16xf32>
    %116 = arith.subf %112, %115 : vector<4x16x16xf32>
    %117 = math.exp %116 : vector<4x16x16xf32>
    %cst_54 = arith.constant dense<0.000000e+00> : vector<4x16xf32>
    %118 = vector.multi_reduction <add>, %117, %cst_54 [2] : vector<4x16x16xf32> to vector<4x16xf32>
    %119 = vector.shape_cast %118 : vector<4x16xf32> to vector<4x16x1xf32>
    %120 = tpu.reciprocal %119 {approx = true} : vector<4x16x1xf32> -> vector<4x16x1xf32>
    %121 = vector.broadcast %120 : vector<4x16x1xf32> to vector<4x16x16xf32>
    %122 = arith.mulf %117, %121 : vector<4x16x16xf32>
    %123 = arith.truncf %122 : vector<4x16x16xf32> to vector<4x16x16xbf16>
    "tpu.trace_start"() <{level = 10 : i32, message = "tqk,tkd->tqd"}> : () -> ()
    %cst_55 = arith.constant dense<0.000000e+00> : vector<4x16x8xf32>
    %124 = tpu.matmul %123, %109, %cst_55 {dimension_numbers = #tpu.dot_dimension_numbers<[2], [1], [1], [2], [0, 0, 0, 1, 1, 2], [0], [0]>} : vector<4x16x16xbf16>, vector<4x16x8xbf16>, vector<4x16x8xf32> -> vector<4x16x8xf32>
    "tpu.trace_stop"() : () -> ()
    %125 = vector.shape_cast %124 : vector<4x16x8xf32> to vector<64x8xf32>
    %126 = arith.truncf %125 : vector<64x8xf32> to vector<64x8xbf16>
    %127 = vector.extract_strided_slice %50 {offsets = [16, 0], sizes = [8, 32], strides = [1, 1]} : vector<32x32xbf16> to vector<8x32xbf16>
    %cst_56 = arith.constant dense<0.000000e+00> : vector<64x32xf32>
    %128 = tpu.matmul %126, %127, %cst_56 {dimension_numbers = #tpu.dot_dimension_numbers<[1], [0], [0], [1], [0, 0, 1, 1], [], []>} : vector<64x8xbf16>, vector<8x32xbf16>, vector<64x32xf32> -> vector<64x32xf32>
    %129 = arith.addf %103, %128 : vector<64x32xf32>
    %130 = vector.extract_strided_slice %46 {offsets = [0, 0, 24], sizes = [4, 16, 8], strides = [1, 1, 1]} : vector<4x16x32xf32> to vector<4x16x8xf32>
    %131 = arith.truncf %130 : vector<4x16x8xf32> to vector<4x16x8xbf16>
    %132 = vector.extract_strided_slice %47 {offsets = [0, 0, 24], sizes = [4, 16, 8], strides = [1, 1, 1]} : vector<4x16x32xf32> to vector<4x16x8xf32>
    %133 = arith.truncf %132 : vector<4x16x8xf32> to vector<4x16x8xbf16>
    %134 = vector.extract_strided_slice %48 {offsets = [0, 0, 24], sizes = [4, 16, 8], strides = [1, 1, 1]} : vector<4x16x32xf32> to vector<4x16x8xf32>
    %135 = arith.truncf %134 : vector<4x16x8xf32> to vector<4x16x8xbf16>
    "tpu.trace_start"() <{level = 10 : i32, message = "tqd,tkd->tqk"}> : () -> ()
    %cst_57 = arith.constant dense<0.000000e+00> : vector<4x16x16xf32>
    %136 = tpu.matmul %131, %133, %cst_57 {dimension_numbers = #tpu.dot_dimension_numbers<[2], [2], [1], [1], [0, 0, 0, 1, 1, 1], [0], [0]>} : vector<4x16x8xbf16>, vector<4x16x8xbf16>, vector<4x16x16xf32> -> vector<4x16x16xf32>
    "tpu.trace_stop"() : () -> ()
    %cst_58 = arith.constant 0.353553385 : f32
    %137 = vector.broadcast %cst_58 : f32 to vector<4x16x16xf32>
    %138 = arith.mulf %136, %137 : vector<4x16x16xf32>
    %cst_59 = arith.constant dense<0xFF800000> : vector<4x16xf32>
    %139 = vector.multi_reduction <maximumf>, %138, %cst_59 [2] : vector<4x16x16xf32> to vector<4x16xf32>
    %140 = vector.shape_cast %139 : vector<4x16xf32> to vector<4x16x1xf32>
    %141 = vector.broadcast %140 : vector<4x16x1xf32> to vector<4x16x16xf32>
    %142 = arith.subf %138, %141 : vector<4x16x16xf32>
    %143 = math.exp %142 : vector<4x16x16xf32>
    %cst_60 = arith.constant dense<0.000000e+00> : vector<4x16xf32>
    %144 = vector.multi_reduction <add>, %143, %cst_60 [2] : vector<4x16x16xf32> to vector<4x16xf32>
    %145 = vector.shape_cast %144 : vector<4x16xf32> to vector<4x16x1xf32>
    %146 = tpu.reciprocal %145 {approx = true} : vector<4x16x1xf32> -> vector<4x16x1xf32>
    %147 = vector.broadcast %146 : vector<4x16x1xf32> to vector<4x16x16xf32>
    %148 = arith.mulf %143, %147 : vector<4x16x16xf32>
    %149 = arith.truncf %148 : vector<4x16x16xf32> to vector<4x16x16xbf16>
    "tpu.trace_start"() <{level = 10 : i32, message = "tqk,tkd->tqd"}> : () -> ()
    %cst_61 = arith.constant dense<0.000000e+00> : vector<4x16x8xf32>
    %150 = tpu.matmul %149, %135, %cst_61 {dimension_numbers = #tpu.dot_dimension_numbers<[2], [1], [1], [2], [0, 0, 0, 1, 1, 2], [0], [0]>} : vector<4x16x16xbf16>, vector<4x16x8xbf16>, vector<4x16x8xf32> -> vector<4x16x8xf32>
    "tpu.trace_stop"() : () -> ()
    %151 = vector.shape_cast %150 : vector<4x16x8xf32> to vector<64x8xf32>
    %152 = arith.truncf %151 : vector<64x8xf32> to vector<64x8xbf16>
    %153 = vector.extract_strided_slice %50 {offsets = [24, 0], sizes = [8, 32], strides = [1, 1]} : vector<32x32xbf16> to vector<8x32xbf16>
    %cst_62 = arith.constant dense<0.000000e+00> : vector<64x32xf32>
    %154 = tpu.matmul %152, %153, %cst_62 {dimension_numbers = #tpu.dot_dimension_numbers<[1], [0], [0], [1], [0, 0, 1, 1], [], []>} : vector<64x8xbf16>, vector<8x32xbf16>, vector<64x32xf32> -> vector<64x32xf32>
    %155 = arith.addf %129, %154 : vector<64x32xf32>
    %c0_63 = arith.constant 0 : index
    %c0_64 = arith.constant 0 : index
    %c0_65 = arith.constant 0 : index
    %156 = vector.load %arg12[%c0_63, %c0_64, %c0_65] : memref<2x1x32xf32, #tpu.memory_space<vmem>>, vector<1x1x32xf32>
    %157 = vector.shape_cast %156 : vector<1x1x32xf32> to vector<1x32xf32>
    %158 = vector.broadcast %157 : vector<1x32xf32> to vector<64x32xf32>
    %159 = arith.addf %155, %158 : vector<64x32xf32>
    %160 = arith.addf %19, %159 : vector<64x32xf32>
    %cst_66 = arith.constant dense<0.000000e+00> : vector<64xf32>
    %161 = vector.multi_reduction <add>, %160, %cst_66 [1] : vector<64x32xf32> to vector<64xf32>
    %162 = vector.shape_cast %161 : vector<64xf32> to vector<64x1xf32>
    %cst_67 = arith.constant 3.200000e+01 : f32
    %163 = vector.broadcast %cst_67 : f32 to vector<64x1xf32>
    %164 = arith.divf %162, %163 : vector<64x1xf32>
    %165 = vector.broadcast %164 : vector<64x1xf32> to vector<64x32xf32>
    %166 = arith.subf %160, %165 : vector<64x32xf32>
    %167 = arith.mulf %166, %166 : vector<64x32xf32>
    %cst_68 = arith.constant dense<0.000000e+00> : vector<64xf32>
    %168 = vector.multi_reduction <add>, %167, %cst_68 [1] : vector<64x32xf32> to vector<64xf32>
    %169 = vector.shape_cast %168 : vector<64xf32> to vector<64x1xf32>
    %cst_69 = arith.constant 3.200000e+01 : f32
    %170 = vector.broadcast %cst_69 : f32 to vector<64x1xf32>
    %171 = arith.divf %169, %170 : vector<64x1xf32>
    %172 = vector.broadcast %164 : vector<64x1xf32> to vector<64x32xf32>
    %173 = arith.subf %160, %172 : vector<64x32xf32>
    %cst_70 = arith.constant 9.99999974E-6 : f32
    %174 = vector.broadcast %cst_70 : f32 to vector<64x1xf32>
    %175 = arith.addf %171, %174 : vector<64x1xf32>
    %176 = math.rsqrt %175 : vector<64x1xf32>
    %177 = vector.broadcast %176 : vector<64x1xf32> to vector<64x32xf32>
    %178 = arith.mulf %173, %177 : vector<64x32xf32>
    %179 = vector.broadcast %21 : vector<1x32xf32> to vector<64x32xf32>
    %180 = arith.mulf %178, %179 : vector<64x32xf32>
    %181 = vector.broadcast %23 : vector<1x32xf32> to vector<64x32xf32>
    %182 = arith.addf %180, %181 : vector<64x32xf32>
    %183 = arith.truncf %182 : vector<64x32xf32> to vector<64x32xbf16>
    %c0_71 = arith.constant 0 : index
    %c0_72 = arith.constant 0 : index
    %c0_73 = arith.constant 0 : index
    %184 = vector.load %arg13[%c0_71, %c0_72, %c0_73] : memref<2x32x64xbf16, #tpu.memory_space<vmem>>, vector<1x32x64xbf16>
    %185 = vector.shape_cast %184 : vector<1x32x64xbf16> to vector<32x64xbf16>
    %cst_74 = arith.constant dense<0.000000e+00> : vector<64x64xf32>
    %186 = tpu.matmul %183, %185, %cst_74 {dimension_numbers = #tpu.dot_dimension_numbers<[1], [0], [0], [1], [0, 0, 1, 1], [], []>} : vector<64x32xbf16>, vector<32x64xbf16>, vector<64x64xf32> -> vector<64x64xf32>
    %c0_75 = arith.constant 0 : index
    %c0_76 = arith.constant 0 : index
    %c0_77 = arith.constant 0 : index
    %187 = vector.load %arg14[%c0_75, %c0_76, %c0_77] : memref<2x1x64xf32, #tpu.memory_space<vmem>>, vector<1x1x64xf32>
    %188 = vector.shape_cast %187 : vector<1x1x64xf32> to vector<1x64xf32>
    %189 = vector.broadcast %188 : vector<1x64xf32> to vector<64x64xf32>
    %190 = arith.addf %186, %189 : vector<64x64xf32>
    %cst_78 = arith.constant 0.000000e+00 : f32
    %191 = vector.broadcast %cst_78 : f32 to vector<64x64xf32>
    %192 = arith.maximumf %190, %191 : vector<64x64xf32>
    %193 = arith.truncf %192 : vector<64x64xf32> to vector<64x64xbf16>
    %c0_79 = arith.constant 0 : index
    %c0_80 = arith.constant 0 : index
    %c0_81 = arith.constant 0 : index
    %194 = vector.load %arg15[%c0_79, %c0_80, %c0_81] : memref<2x64x32xbf16, #tpu.memory_space<vmem>>, vector<1x64x32xbf16>
    %195 = vector.shape_cast %194 : vector<1x64x32xbf16> to vector<64x32xbf16>
    %cst_82 = arith.constant dense<0.000000e+00> : vector<64x32xf32>
    %196 = tpu.matmul %193, %195, %cst_82 {dimension_numbers = #tpu.dot_dimension_numbers<[1], [0], [0], [1], [0, 0, 1, 1], [], []>} : vector<64x64xbf16>, vector<64x32xbf16>, vector<64x32xf32> -> vector<64x32xf32>
    %c0_83 = arith.constant 0 : index
    %c0_84 = arith.constant 0 : index
    %c0_85 = arith.constant 0 : index
    %197 = vector.load %arg16[%c0_83, %c0_84, %c0_85] : memref<2x1x32xf32, #tpu.memory_space<vmem>>, vector<1x1x32xf32>
    %198 = vector.shape_cast %197 : vector<1x1x32xf32> to vector<1x32xf32>
    %199 = vector.broadcast %198 : vector<1x32xf32> to vector<64x32xf32>
    %200 = arith.addf %196, %199 : vector<64x32xf32>
    %201 = arith.addf %182, %200 : vector<64x32xf32>
    %cst_86 = arith.constant dense<0.000000e+00> : vector<64xf32>
    %202 = vector.multi_reduction <add>, %201, %cst_86 [1] : vector<64x32xf32> to vector<64xf32>
    %203 = vector.shape_cast %202 : vector<64xf32> to vector<64x1xf32>
    %cst_87 = arith.constant 3.200000e+01 : f32
    %204 = vector.broadcast %cst_87 : f32 to vector<64x1xf32>
    %205 = arith.divf %203, %204 : vector<64x1xf32>
    %206 = vector.broadcast %205 : vector<64x1xf32> to vector<64x32xf32>
    %207 = arith.subf %201, %206 : vector<64x32xf32>
    %208 = arith.mulf %207, %207 : vector<64x32xf32>
    %cst_88 = arith.constant dense<0.000000e+00> : vector<64xf32>
    %209 = vector.multi_reduction <add>, %208, %cst_88 [1] : vector<64x32xf32> to vector<64xf32>
    %210 = vector.shape_cast %209 : vector<64xf32> to vector<64x1xf32>
    %cst_89 = arith.constant 3.200000e+01 : f32
    %211 = vector.broadcast %cst_89 : f32 to vector<64x1xf32>
    %212 = arith.divf %210, %211 : vector<64x1xf32>
    %213 = vector.broadcast %205 : vector<64x1xf32> to vector<64x32xf32>
    %214 = arith.subf %201, %213 : vector<64x32xf32>
    %cst_90 = arith.constant 9.99999974E-6 : f32
    %215 = vector.broadcast %cst_90 : f32 to vector<64x1xf32>
    %216 = arith.addf %212, %215 : vector<64x1xf32>
    %217 = math.rsqrt %216 : vector<64x1xf32>
    %218 = vector.broadcast %217 : vector<64x1xf32> to vector<64x32xf32>
    %219 = arith.mulf %214, %218 : vector<64x32xf32>
    %220 = vector.broadcast %21 : vector<1x32xf32> to vector<64x32xf32>
    %221 = arith.mulf %219, %220 : vector<64x32xf32>
    %222 = vector.broadcast %23 : vector<1x32xf32> to vector<64x32xf32>
    %223 = arith.addf %221, %222 : vector<64x32xf32>
    %c1 = arith.constant 1 : index
    %c0_91 = arith.constant 0 : index
    %c0_92 = arith.constant 0 : index
    %224 = vector.load %arg17[%c1, %c0_91, %c0_92] : memref<2x1x32xf32, #tpu.memory_space<vmem>>, vector<1x1x32xf32>
    %225 = vector.shape_cast %224 : vector<1x1x32xf32> to vector<1x32xf32>
    %c1_93 = arith.constant 1 : index
    %c0_94 = arith.constant 0 : index
    %c0_95 = arith.constant 0 : index
    %226 = vector.load %arg18[%c1_93, %c0_94, %c0_95] : memref<2x1x32xf32, #tpu.memory_space<vmem>>, vector<1x1x32xf32>
    %227 = vector.shape_cast %226 : vector<1x1x32xf32> to vector<1x32xf32>
    %228 = arith.truncf %223 : vector<64x32xf32> to vector<64x32xbf16>
    %c1_96 = arith.constant 1 : index
    %c0_97 = arith.constant 0 : index
    %c0_98 = arith.constant 0 : index
    %229 = vector.load %arg5[%c1_96, %c0_97, %c0_98] : memref<2x32x32xbf16, #tpu.memory_space<vmem>>, vector<1x32x32xbf16>
    %230 = vector.shape_cast %229 : vector<1x32x32xbf16> to vector<32x32xbf16>
    %cst_99 = arith.constant dense<0.000000e+00> : vector<64x32xf32>
    %231 = tpu.matmul %228, %230, %cst_99 {dimension_numbers = #tpu.dot_dimension_numbers<[1], [0], [0], [1], [0, 0, 1, 1], [], []>} : vector<64x32xbf16>, vector<32x32xbf16>, vector<64x32xf32> -> vector<64x32xf32>
    %c1_100 = arith.constant 1 : index
    %c0_101 = arith.constant 0 : index
    %c0_102 = arith.constant 0 : index
    %232 = vector.load %arg6[%c1_100, %c0_101, %c0_102] : memref<2x1x32xf32, #tpu.memory_space<vmem>>, vector<1x1x32xf32>
    %233 = vector.shape_cast %232 : vector<1x1x32xf32> to vector<1x32xf32>
    %234 = vector.broadcast %233 : vector<1x32xf32> to vector<64x32xf32>
    %235 = arith.addf %231, %234 : vector<64x32xf32>
    %c1_103 = arith.constant 1 : index
    %c0_104 = arith.constant 0 : index
    %c0_105 = arith.constant 0 : index
    %236 = vector.load %arg7[%c1_103, %c0_104, %c0_105] : memref<2x32x32xbf16, #tpu.memory_space<vmem>>, vector<1x32x32xbf16>
    %237 = vector.shape_cast %236 : vector<1x32x32xbf16> to vector<32x32xbf16>
    %cst_106 = arith.constant dense<0.000000e+00> : vector<64x32xf32>
    %238 = tpu.matmul %228, %237, %cst_106 {dimension_numbers = #tpu.dot_dimension_numbers<[1], [0], [0], [1], [0, 0, 1, 1], [], []>} : vector<64x32xbf16>, vector<32x32xbf16>, vector<64x32xf32> -> vector<64x32xf32>
    %c1_107 = arith.constant 1 : index
    %c0_108 = arith.constant 0 : index
    %c0_109 = arith.constant 0 : index
    %239 = vector.load %arg8[%c1_107, %c0_108, %c0_109] : memref<2x1x32xf32, #tpu.memory_space<vmem>>, vector<1x1x32xf32>
    %240 = vector.shape_cast %239 : vector<1x1x32xf32> to vector<1x32xf32>
    %241 = vector.broadcast %240 : vector<1x32xf32> to vector<64x32xf32>
    %242 = arith.addf %238, %241 : vector<64x32xf32>
    %c1_110 = arith.constant 1 : index
    %c0_111 = arith.constant 0 : index
    %c0_112 = arith.constant 0 : index
    %243 = vector.load %arg9[%c1_110, %c0_111, %c0_112] : memref<2x32x32xbf16, #tpu.memory_space<vmem>>, vector<1x32x32xbf16>
    %244 = vector.shape_cast %243 : vector<1x32x32xbf16> to vector<32x32xbf16>
    %cst_113 = arith.constant dense<0.000000e+00> : vector<64x32xf32>
    %245 = tpu.matmul %228, %244, %cst_113 {dimension_numbers = #tpu.dot_dimension_numbers<[1], [0], [0], [1], [0, 0, 1, 1], [], []>} : vector<64x32xbf16>, vector<32x32xbf16>, vector<64x32xf32> -> vector<64x32xf32>
    %c1_114 = arith.constant 1 : index
    %c0_115 = arith.constant 0 : index
    %c0_116 = arith.constant 0 : index
    %246 = vector.load %arg10[%c1_114, %c0_115, %c0_116] : memref<2x1x32xf32, #tpu.memory_space<vmem>>, vector<1x1x32xf32>
    %247 = vector.shape_cast %246 : vector<1x1x32xf32> to vector<1x32xf32>
    %248 = vector.broadcast %247 : vector<1x32xf32> to vector<64x32xf32>
    %249 = arith.addf %245, %248 : vector<64x32xf32>
    %250 = vector.shape_cast %235 : vector<64x32xf32> to vector<4x16x32xf32>
    %251 = vector.shape_cast %242 : vector<64x32xf32> to vector<4x16x32xf32>
    %252 = vector.shape_cast %249 : vector<64x32xf32> to vector<4x16x32xf32>
    %c1_117 = arith.constant 1 : index
    %c0_118 = arith.constant 0 : index
    %c0_119 = arith.constant 0 : index
    %253 = vector.load %arg11[%c1_117, %c0_118, %c0_119] : memref<2x32x32xbf16, #tpu.memory_space<vmem>>, vector<1x32x32xbf16>
    %254 = vector.shape_cast %253 : vector<1x32x32xbf16> to vector<32x32xbf16>
    %cst_120 = arith.constant 0.000000e+00 : f32
    %255 = vector.broadcast %cst_120 : f32 to vector<64x32xf32>
    %256 = vector.extract_strided_slice %250 {offsets = [0, 0, 0], sizes = [4, 16, 8], strides = [1, 1, 1]} : vector<4x16x32xf32> to vector<4x16x8xf32>
    %257 = arith.truncf %256 : vector<4x16x8xf32> to vector<4x16x8xbf16>
    %258 = vector.extract_strided_slice %251 {offsets = [0, 0, 0], sizes = [4, 16, 8], strides = [1, 1, 1]} : vector<4x16x32xf32> to vector<4x16x8xf32>
    %259 = arith.truncf %258 : vector<4x16x8xf32> to vector<4x16x8xbf16>
    %260 = vector.extract_strided_slice %252 {offsets = [0, 0, 0], sizes = [4, 16, 8], strides = [1, 1, 1]} : vector<4x16x32xf32> to vector<4x16x8xf32>
    %261 = arith.truncf %260 : vector<4x16x8xf32> to vector<4x16x8xbf16>
    "tpu.trace_start"() <{level = 10 : i32, message = "tqd,tkd->tqk"}> : () -> ()
    %cst_121 = arith.constant dense<0.000000e+00> : vector<4x16x16xf32>
    %262 = tpu.matmul %257, %259, %cst_121 {dimension_numbers = #tpu.dot_dimension_numbers<[2], [2], [1], [1], [0, 0, 0, 1, 1, 1], [0], [0]>} : vector<4x16x8xbf16>, vector<4x16x8xbf16>, vector<4x16x16xf32> -> vector<4x16x16xf32>
    "tpu.trace_stop"() : () -> ()
    %cst_122 = arith.constant 0.353553385 : f32
    %263 = vector.broadcast %cst_122 : f32 to vector<4x16x16xf32>
    %264 = arith.mulf %262, %263 : vector<4x16x16xf32>
    %cst_123 = arith.constant dense<0xFF800000> : vector<4x16xf32>
    %265 = vector.multi_reduction <maximumf>, %264, %cst_123 [2] : vector<4x16x16xf32> to vector<4x16xf32>
    %266 = vector.shape_cast %265 : vector<4x16xf32> to vector<4x16x1xf32>
    %267 = vector.broadcast %266 : vector<4x16x1xf32> to vector<4x16x16xf32>
    %268 = arith.subf %264, %267 : vector<4x16x16xf32>
    %269 = math.exp %268 : vector<4x16x16xf32>
    %cst_124 = arith.constant dense<0.000000e+00> : vector<4x16xf32>
    %270 = vector.multi_reduction <add>, %269, %cst_124 [2] : vector<4x16x16xf32> to vector<4x16xf32>
    %271 = vector.shape_cast %270 : vector<4x16xf32> to vector<4x16x1xf32>
    %272 = tpu.reciprocal %271 {approx = true} : vector<4x16x1xf32> -> vector<4x16x1xf32>
    %273 = vector.broadcast %272 : vector<4x16x1xf32> to vector<4x16x16xf32>
    %274 = arith.mulf %269, %273 : vector<4x16x16xf32>
    %275 = arith.truncf %274 : vector<4x16x16xf32> to vector<4x16x16xbf16>
    "tpu.trace_start"() <{level = 10 : i32, message = "tqk,tkd->tqd"}> : () -> ()
    %cst_125 = arith.constant dense<0.000000e+00> : vector<4x16x8xf32>
    %276 = tpu.matmul %275, %261, %cst_125 {dimension_numbers = #tpu.dot_dimension_numbers<[2], [1], [1], [2], [0, 0, 0, 1, 1, 2], [0], [0]>} : vector<4x16x16xbf16>, vector<4x16x8xbf16>, vector<4x16x8xf32> -> vector<4x16x8xf32>
    "tpu.trace_stop"() : () -> ()
    %277 = vector.shape_cast %276 : vector<4x16x8xf32> to vector<64x8xf32>
    %278 = arith.truncf %277 : vector<64x8xf32> to vector<64x8xbf16>
    %279 = vector.extract_strided_slice %254 {offsets = [0, 0], sizes = [8, 32], strides = [1, 1]} : vector<32x32xbf16> to vector<8x32xbf16>
    %cst_126 = arith.constant dense<0.000000e+00> : vector<64x32xf32>
    %280 = tpu.matmul %278, %279, %cst_126 {dimension_numbers = #tpu.dot_dimension_numbers<[1], [0], [0], [1], [0, 0, 1, 1], [], []>} : vector<64x8xbf16>, vector<8x32xbf16>, vector<64x32xf32> -> vector<64x32xf32>
    %281 = arith.addf %255, %280 : vector<64x32xf32>
    %282 = vector.extract_strided_slice %250 {offsets = [0, 0, 8], sizes = [4, 16, 8], strides = [1, 1, 1]} : vector<4x16x32xf32> to vector<4x16x8xf32>
    %283 = arith.truncf %282 : vector<4x16x8xf32> to vector<4x16x8xbf16>
    %284 = vector.extract_strided_slice %251 {offsets = [0, 0, 8], sizes = [4, 16, 8], strides = [1, 1, 1]} : vector<4x16x32xf32> to vector<4x16x8xf32>
    %285 = arith.truncf %284 : vector<4x16x8xf32> to vector<4x16x8xbf16>
    %286 = vector.extract_strided_slice %252 {offsets = [0, 0, 8], sizes = [4, 16, 8], strides = [1, 1, 1]} : vector<4x16x32xf32> to vector<4x16x8xf32>
    %287 = arith.truncf %286 : vector<4x16x8xf32> to vector<4x16x8xbf16>
    "tpu.trace_start"() <{level = 10 : i32, message = "tqd,tkd->tqk"}> : () -> ()
    %cst_127 = arith.constant dense<0.000000e+00> : vector<4x16x16xf32>
    %288 = tpu.matmul %283, %285, %cst_127 {dimension_numbers = #tpu.dot_dimension_numbers<[2], [2], [1], [1], [0, 0, 0, 1, 1, 1], [0], [0]>} : vector<4x16x8xbf16>, vector<4x16x8xbf16>, vector<4x16x16xf32> -> vector<4x16x16xf32>
    "tpu.trace_stop"() : () -> ()
    %cst_128 = arith.constant 0.353553385 : f32
    %289 = vector.broadcast %cst_128 : f32 to vector<4x16x16xf32>
    %290 = arith.mulf %288, %289 : vector<4x16x16xf32>
    %cst_129 = arith.constant dense<0xFF800000> : vector<4x16xf32>
    %291 = vector.multi_reduction <maximumf>, %290, %cst_129 [2] : vector<4x16x16xf32> to vector<4x16xf32>
    %292 = vector.shape_cast %291 : vector<4x16xf32> to vector<4x16x1xf32>
    %293 = vector.broadcast %292 : vector<4x16x1xf32> to vector<4x16x16xf32>
    %294 = arith.subf %290, %293 : vector<4x16x16xf32>
    %295 = math.exp %294 : vector<4x16x16xf32>
    %cst_130 = arith.constant dense<0.000000e+00> : vector<4x16xf32>
    %296 = vector.multi_reduction <add>, %295, %cst_130 [2] : vector<4x16x16xf32> to vector<4x16xf32>
    %297 = vector.shape_cast %296 : vector<4x16xf32> to vector<4x16x1xf32>
    %298 = tpu.reciprocal %297 {approx = true} : vector<4x16x1xf32> -> vector<4x16x1xf32>
    %299 = vector.broadcast %298 : vector<4x16x1xf32> to vector<4x16x16xf32>
    %300 = arith.mulf %295, %299 : vector<4x16x16xf32>
    %301 = arith.truncf %300 : vector<4x16x16xf32> to vector<4x16x16xbf16>
    "tpu.trace_start"() <{level = 10 : i32, message = "tqk,tkd->tqd"}> : () -> ()
    %cst_131 = arith.constant dense<0.000000e+00> : vector<4x16x8xf32>
    %302 = tpu.matmul %301, %287, %cst_131 {dimension_numbers = #tpu.dot_dimension_numbers<[2], [1], [1], [2], [0, 0, 0, 1, 1, 2], [0], [0]>} : vector<4x16x16xbf16>, vector<4x16x8xbf16>, vector<4x16x8xf32> -> vector<4x16x8xf32>
    "tpu.trace_stop"() : () -> ()
    %303 = vector.shape_cast %302 : vector<4x16x8xf32> to vector<64x8xf32>
    %304 = arith.truncf %303 : vector<64x8xf32> to vector<64x8xbf16>
    %305 = vector.extract_strided_slice %254 {offsets = [8, 0], sizes = [8, 32], strides = [1, 1]} : vector<32x32xbf16> to vector<8x32xbf16>
    %cst_132 = arith.constant dense<0.000000e+00> : vector<64x32xf32>
    %306 = tpu.matmul %304, %305, %cst_132 {dimension_numbers = #tpu.dot_dimension_numbers<[1], [0], [0], [1], [0, 0, 1, 1], [], []>} : vector<64x8xbf16>, vector<8x32xbf16>, vector<64x32xf32> -> vector<64x32xf32>
    %307 = arith.addf %281, %306 : vector<64x32xf32>
    %308 = vector.extract_strided_slice %250 {offsets = [0, 0, 16], sizes = [4, 16, 8], strides = [1, 1, 1]} : vector<4x16x32xf32> to vector<4x16x8xf32>
    %309 = arith.truncf %308 : vector<4x16x8xf32> to vector<4x16x8xbf16>
    %310 = vector.extract_strided_slice %251 {offsets = [0, 0, 16], sizes = [4, 16, 8], strides = [1, 1, 1]} : vector<4x16x32xf32> to vector<4x16x8xf32>
    %311 = arith.truncf %310 : vector<4x16x8xf32> to vector<4x16x8xbf16>
    %312 = vector.extract_strided_slice %252 {offsets = [0, 0, 16], sizes = [4, 16, 8], strides = [1, 1, 1]} : vector<4x16x32xf32> to vector<4x16x8xf32>
    %313 = arith.truncf %312 : vector<4x16x8xf32> to vector<4x16x8xbf16>
    "tpu.trace_start"() <{level = 10 : i32, message = "tqd,tkd->tqk"}> : () -> ()
    %cst_133 = arith.constant dense<0.000000e+00> : vector<4x16x16xf32>
    %314 = tpu.matmul %309, %311, %cst_133 {dimension_numbers = #tpu.dot_dimension_numbers<[2], [2], [1], [1], [0, 0, 0, 1, 1, 1], [0], [0]>} : vector<4x16x8xbf16>, vector<4x16x8xbf16>, vector<4x16x16xf32> -> vector<4x16x16xf32>
    "tpu.trace_stop"() : () -> ()
    %cst_134 = arith.constant 0.353553385 : f32
    %315 = vector.broadcast %cst_134 : f32 to vector<4x16x16xf32>
    %316 = arith.mulf %314, %315 : vector<4x16x16xf32>
    %cst_135 = arith.constant dense<0xFF800000> : vector<4x16xf32>
    %317 = vector.multi_reduction <maximumf>, %316, %cst_135 [2] : vector<4x16x16xf32> to vector<4x16xf32>
    %318 = vector.shape_cast %317 : vector<4x16xf32> to vector<4x16x1xf32>
    %319 = vector.broadcast %318 : vector<4x16x1xf32> to vector<4x16x16xf32>
    %320 = arith.subf %316, %319 : vector<4x16x16xf32>
    %321 = math.exp %320 : vector<4x16x16xf32>
    %cst_136 = arith.constant dense<0.000000e+00> : vector<4x16xf32>
    %322 = vector.multi_reduction <add>, %321, %cst_136 [2] : vector<4x16x16xf32> to vector<4x16xf32>
    %323 = vector.shape_cast %322 : vector<4x16xf32> to vector<4x16x1xf32>
    %324 = tpu.reciprocal %323 {approx = true} : vector<4x16x1xf32> -> vector<4x16x1xf32>
    %325 = vector.broadcast %324 : vector<4x16x1xf32> to vector<4x16x16xf32>
    %326 = arith.mulf %321, %325 : vector<4x16x16xf32>
    %327 = arith.truncf %326 : vector<4x16x16xf32> to vector<4x16x16xbf16>
    "tpu.trace_start"() <{level = 10 : i32, message = "tqk,tkd->tqd"}> : () -> ()
    %cst_137 = arith.constant dense<0.000000e+00> : vector<4x16x8xf32>
    %328 = tpu.matmul %327, %313, %cst_137 {dimension_numbers = #tpu.dot_dimension_numbers<[2], [1], [1], [2], [0, 0, 0, 1, 1, 2], [0], [0]>} : vector<4x16x16xbf16>, vector<4x16x8xbf16>, vector<4x16x8xf32> -> vector<4x16x8xf32>
    "tpu.trace_stop"() : () -> ()
    %329 = vector.shape_cast %328 : vector<4x16x8xf32> to vector<64x8xf32>
    %330 = arith.truncf %329 : vector<64x8xf32> to vector<64x8xbf16>
    %331 = vector.extract_strided_slice %254 {offsets = [16, 0], sizes = [8, 32], strides = [1, 1]} : vector<32x32xbf16> to vector<8x32xbf16>
    %cst_138 = arith.constant dense<0.000000e+00> : vector<64x32xf32>
    %332 = tpu.matmul %330, %331, %cst_138 {dimension_numbers = #tpu.dot_dimension_numbers<[1], [0], [0], [1], [0, 0, 1, 1], [], []>} : vector<64x8xbf16>, vector<8x32xbf16>, vector<64x32xf32> -> vector<64x32xf32>
    %333 = arith.addf %307, %332 : vector<64x32xf32>
    %334 = vector.extract_strided_slice %250 {offsets = [0, 0, 24], sizes = [4, 16, 8], strides = [1, 1, 1]} : vector<4x16x32xf32> to vector<4x16x8xf32>
    %335 = arith.truncf %334 : vector<4x16x8xf32> to vector<4x16x8xbf16>
    %336 = vector.extract_strided_slice %251 {offsets = [0, 0, 24], sizes = [4, 16, 8], strides = [1, 1, 1]} : vector<4x16x32xf32> to vector<4x16x8xf32>
    %337 = arith.truncf %336 : vector<4x16x8xf32> to vector<4x16x8xbf16>
    %338 = vector.extract_strided_slice %252 {offsets = [0, 0, 24], sizes = [4, 16, 8], strides = [1, 1, 1]} : vector<4x16x32xf32> to vector<4x16x8xf32>
    %339 = arith.truncf %338 : vector<4x16x8xf32> to vector<4x16x8xbf16>
    "tpu.trace_start"() <{level = 10 : i32, message = "tqd,tkd->tqk"}> : () -> ()
    %cst_139 = arith.constant dense<0.000000e+00> : vector<4x16x16xf32>
    %340 = tpu.matmul %335, %337, %cst_139 {dimension_numbers = #tpu.dot_dimension_numbers<[2], [2], [1], [1], [0, 0, 0, 1, 1, 1], [0], [0]>} : vector<4x16x8xbf16>, vector<4x16x8xbf16>, vector<4x16x16xf32> -> vector<4x16x16xf32>
    "tpu.trace_stop"() : () -> ()
    %cst_140 = arith.constant 0.353553385 : f32
    %341 = vector.broadcast %cst_140 : f32 to vector<4x16x16xf32>
    %342 = arith.mulf %340, %341 : vector<4x16x16xf32>
    %cst_141 = arith.constant dense<0xFF800000> : vector<4x16xf32>
    %343 = vector.multi_reduction <maximumf>, %342, %cst_141 [2] : vector<4x16x16xf32> to vector<4x16xf32>
    %344 = vector.shape_cast %343 : vector<4x16xf32> to vector<4x16x1xf32>
    %345 = vector.broadcast %344 : vector<4x16x1xf32> to vector<4x16x16xf32>
    %346 = arith.subf %342, %345 : vector<4x16x16xf32>
    %347 = math.exp %346 : vector<4x16x16xf32>
    %cst_142 = arith.constant dense<0.000000e+00> : vector<4x16xf32>
    %348 = vector.multi_reduction <add>, %347, %cst_142 [2] : vector<4x16x16xf32> to vector<4x16xf32>
    %349 = vector.shape_cast %348 : vector<4x16xf32> to vector<4x16x1xf32>
    %350 = tpu.reciprocal %349 {approx = true} : vector<4x16x1xf32> -> vector<4x16x1xf32>
    %351 = vector.broadcast %350 : vector<4x16x1xf32> to vector<4x16x16xf32>
    %352 = arith.mulf %347, %351 : vector<4x16x16xf32>
    %353 = arith.truncf %352 : vector<4x16x16xf32> to vector<4x16x16xbf16>
    "tpu.trace_start"() <{level = 10 : i32, message = "tqk,tkd->tqd"}> : () -> ()
    %cst_143 = arith.constant dense<0.000000e+00> : vector<4x16x8xf32>
    %354 = tpu.matmul %353, %339, %cst_143 {dimension_numbers = #tpu.dot_dimension_numbers<[2], [1], [1], [2], [0, 0, 0, 1, 1, 2], [0], [0]>} : vector<4x16x16xbf16>, vector<4x16x8xbf16>, vector<4x16x8xf32> -> vector<4x16x8xf32>
    "tpu.trace_stop"() : () -> ()
    %355 = vector.shape_cast %354 : vector<4x16x8xf32> to vector<64x8xf32>
    %356 = arith.truncf %355 : vector<64x8xf32> to vector<64x8xbf16>
    %357 = vector.extract_strided_slice %254 {offsets = [24, 0], sizes = [8, 32], strides = [1, 1]} : vector<32x32xbf16> to vector<8x32xbf16>
    %cst_144 = arith.constant dense<0.000000e+00> : vector<64x32xf32>
    %358 = tpu.matmul %356, %357, %cst_144 {dimension_numbers = #tpu.dot_dimension_numbers<[1], [0], [0], [1], [0, 0, 1, 1], [], []>} : vector<64x8xbf16>, vector<8x32xbf16>, vector<64x32xf32> -> vector<64x32xf32>
    %359 = arith.addf %333, %358 : vector<64x32xf32>
    %c1_145 = arith.constant 1 : index
    %c0_146 = arith.constant 0 : index
    %c0_147 = arith.constant 0 : index
    %360 = vector.load %arg12[%c1_145, %c0_146, %c0_147] : memref<2x1x32xf32, #tpu.memory_space<vmem>>, vector<1x1x32xf32>
    %361 = vector.shape_cast %360 : vector<1x1x32xf32> to vector<1x32xf32>
    %362 = vector.broadcast %361 : vector<1x32xf32> to vector<64x32xf32>
    %363 = arith.addf %359, %362 : vector<64x32xf32>
    %364 = arith.addf %223, %363 : vector<64x32xf32>
    %cst_148 = arith.constant dense<0.000000e+00> : vector<64xf32>
    %365 = vector.multi_reduction <add>, %364, %cst_148 [1] : vector<64x32xf32> to vector<64xf32>
    %366 = vector.shape_cast %365 : vector<64xf32> to vector<64x1xf32>
    %cst_149 = arith.constant 3.200000e+01 : f32
    %367 = vector.broadcast %cst_149 : f32 to vector<64x1xf32>
    %368 = arith.divf %366, %367 : vector<64x1xf32>
    %369 = vector.broadcast %368 : vector<64x1xf32> to vector<64x32xf32>
    %370 = arith.subf %364, %369 : vector<64x32xf32>
    %371 = arith.mulf %370, %370 : vector<64x32xf32>
    %cst_150 = arith.constant dense<0.000000e+00> : vector<64xf32>
    %372 = vector.multi_reduction <add>, %371, %cst_150 [1] : vector<64x32xf32> to vector<64xf32>
    %373 = vector.shape_cast %372 : vector<64xf32> to vector<64x1xf32>
    %cst_151 = arith.constant 3.200000e+01 : f32
    %374 = vector.broadcast %cst_151 : f32 to vector<64x1xf32>
    %375 = arith.divf %373, %374 : vector<64x1xf32>
    %376 = vector.broadcast %368 : vector<64x1xf32> to vector<64x32xf32>
    %377 = arith.subf %364, %376 : vector<64x32xf32>
    %cst_152 = arith.constant 9.99999974E-6 : f32
    %378 = vector.broadcast %cst_152 : f32 to vector<64x1xf32>
    %379 = arith.addf %375, %378 : vector<64x1xf32>
    %380 = math.rsqrt %379 : vector<64x1xf32>
    %381 = vector.broadcast %380 : vector<64x1xf32> to vector<64x32xf32>
    %382 = arith.mulf %377, %381 : vector<64x32xf32>
    %383 = vector.broadcast %225 : vector<1x32xf32> to vector<64x32xf32>
    %384 = arith.mulf %382, %383 : vector<64x32xf32>
    %385 = vector.broadcast %227 : vector<1x32xf32> to vector<64x32xf32>
    %386 = arith.addf %384, %385 : vector<64x32xf32>
    %387 = arith.truncf %386 : vector<64x32xf32> to vector<64x32xbf16>
    %c1_153 = arith.constant 1 : index
    %c0_154 = arith.constant 0 : index
    %c0_155 = arith.constant 0 : index
    %388 = vector.load %arg13[%c1_153, %c0_154, %c0_155] : memref<2x32x64xbf16, #tpu.memory_space<vmem>>, vector<1x32x64xbf16>
    %389 = vector.shape_cast %388 : vector<1x32x64xbf16> to vector<32x64xbf16>
    %cst_156 = arith.constant dense<0.000000e+00> : vector<64x64xf32>
    %390 = tpu.matmul %387, %389, %cst_156 {dimension_numbers = #tpu.dot_dimension_numbers<[1], [0], [0], [1], [0, 0, 1, 1], [], []>} : vector<64x32xbf16>, vector<32x64xbf16>, vector<64x64xf32> -> vector<64x64xf32>
    %c1_157 = arith.constant 1 : index
    %c0_158 = arith.constant 0 : index
    %c0_159 = arith.constant 0 : index
    %391 = vector.load %arg14[%c1_157, %c0_158, %c0_159] : memref<2x1x64xf32, #tpu.memory_space<vmem>>, vector<1x1x64xf32>
    %392 = vector.shape_cast %391 : vector<1x1x64xf32> to vector<1x64xf32>
    %393 = vector.broadcast %392 : vector<1x64xf32> to vector<64x64xf32>
    %394 = arith.addf %390, %393 : vector<64x64xf32>
    %cst_160 = arith.constant 0.000000e+00 : f32
    %395 = vector.broadcast %cst_160 : f32 to vector<64x64xf32>
    %396 = arith.maximumf %394, %395 : vector<64x64xf32>
    %397 = arith.truncf %396 : vector<64x64xf32> to vector<64x64xbf16>
    %c1_161 = arith.constant 1 : index
    %c0_162 = arith.constant 0 : index
    %c0_163 = arith.constant 0 : index
    %398 = vector.load %arg15[%c1_161, %c0_162, %c0_163] : memref<2x64x32xbf16, #tpu.memory_space<vmem>>, vector<1x64x32xbf16>
    %399 = vector.shape_cast %398 : vector<1x64x32xbf16> to vector<64x32xbf16>
    %cst_164 = arith.constant dense<0.000000e+00> : vector<64x32xf32>
    %400 = tpu.matmul %397, %399, %cst_164 {dimension_numbers = #tpu.dot_dimension_numbers<[1], [0], [0], [1], [0, 0, 1, 1], [], []>} : vector<64x64xbf16>, vector<64x32xbf16>, vector<64x32xf32> -> vector<64x32xf32>
    %c1_165 = arith.constant 1 : index
    %c0_166 = arith.constant 0 : index
    %c0_167 = arith.constant 0 : index
    %401 = vector.load %arg16[%c1_165, %c0_166, %c0_167] : memref<2x1x32xf32, #tpu.memory_space<vmem>>, vector<1x1x32xf32>
    %402 = vector.shape_cast %401 : vector<1x1x32xf32> to vector<1x32xf32>
    %403 = vector.broadcast %402 : vector<1x32xf32> to vector<64x32xf32>
    %404 = arith.addf %400, %403 : vector<64x32xf32>
    %405 = arith.addf %386, %404 : vector<64x32xf32>
    %cst_168 = arith.constant dense<0.000000e+00> : vector<64xf32>
    %406 = vector.multi_reduction <add>, %405, %cst_168 [1] : vector<64x32xf32> to vector<64xf32>
    %407 = vector.shape_cast %406 : vector<64xf32> to vector<64x1xf32>
    %cst_169 = arith.constant 3.200000e+01 : f32
    %408 = vector.broadcast %cst_169 : f32 to vector<64x1xf32>
    %409 = arith.divf %407, %408 : vector<64x1xf32>
    %410 = vector.broadcast %409 : vector<64x1xf32> to vector<64x32xf32>
    %411 = arith.subf %405, %410 : vector<64x32xf32>
    %412 = arith.mulf %411, %411 : vector<64x32xf32>
    %cst_170 = arith.constant dense<0.000000e+00> : vector<64xf32>
    %413 = vector.multi_reduction <add>, %412, %cst_170 [1] : vector<64x32xf32> to vector<64xf32>
    %414 = vector.shape_cast %413 : vector<64xf32> to vector<64x1xf32>
    %cst_171 = arith.constant 3.200000e+01 : f32
    %415 = vector.broadcast %cst_171 : f32 to vector<64x1xf32>
    %416 = arith.divf %414, %415 : vector<64x1xf32>
    %417 = vector.broadcast %409 : vector<64x1xf32> to vector<64x32xf32>
    %418 = arith.subf %405, %417 : vector<64x32xf32>
    %cst_172 = arith.constant 9.99999974E-6 : f32
    %419 = vector.broadcast %cst_172 : f32 to vector<64x1xf32>
    %420 = arith.addf %416, %419 : vector<64x1xf32>
    %421 = math.rsqrt %420 : vector<64x1xf32>
    %422 = vector.broadcast %421 : vector<64x1xf32> to vector<64x32xf32>
    %423 = arith.mulf %418, %422 : vector<64x32xf32>
    %424 = vector.broadcast %225 : vector<1x32xf32> to vector<64x32xf32>
    %425 = arith.mulf %423, %424 : vector<64x32xf32>
    %426 = vector.broadcast %227 : vector<1x32xf32> to vector<64x32xf32>
    %427 = arith.addf %425, %426 : vector<64x32xf32>
    %428 = vector.shape_cast %427 : vector<64x32xf32> to vector<4x16x32xf32>
    %c0_173 = arith.constant 0 : index
    %c0_174 = arith.constant 0 : index
    %c0_175 = arith.constant 0 : index
    %c0_176 = arith.constant 0 : index
    %429 = vector.load %arg19[%c0_173, %c0_174, %c0_175, %c0_176] : memref<1x4x16x32xf32, #tpu.memory_space<vmem>>, vector<1x4x16x32xf32>
    %430 = vector.shape_cast %429 : vector<1x4x16x32xf32> to vector<4x16x32xf32>
    %431 = vector.shape_cast %428 : vector<4x16x32xf32> to vector<1x4x16x32xf32>
    tpu.vector_store %arg19[%c0_173, %c0_174, %c0_175, %c0_176], %431 {strides = array<i32>} : memref<1x4x16x32xf32, #tpu.memory_space<vmem>>, vector<1x4x16x32xf32>,
    return
  }
  func.func @transform_0(%arg0: i32, %arg1: i32) -> (i32, i32, i32) {
    %c0_i32 = arith.constant 0 : i32
    %c0_i32_0 = arith.constant 0 : i32
    %c0_i32_1 = arith.constant 0 : i32
    return %arg0, %c0_i32, %c0_i32_0 : i32, i32, i32
  }
  func.func @transform_1(%arg0: i32, %arg1: i32) -> (i32, i32) {
    %c0_i32 = arith.constant 0 : i32
    %c0_i32_0 = arith.constant 0 : i32
    %c0_i32_1 = arith.constant 0 : i32
    return %c0_i32, %c0_i32_0 : i32, i32
  }
  func.func @transform_2(%arg0: i32, %arg1: i32) -> (i32, i32) {
    %c0_i32 = arith.constant 0 : i32
    %c0_i32_0 = arith.constant 0 : i32
    %c0_i32_1 = arith.constant 0 : i32
    return %c0_i32, %c0_i32_0 : i32, i32
  }
  func.func @transform_3(%arg0: i32, %arg1: i32) -> (i32, i32, i32) {
    %c0_i32 = arith.constant 0 : i32
    %c0_i32_0 = arith.constant 0 : i32
    %c0_i32_1 = arith.constant 0 : i32
    %c0_i32_2 = arith.constant 0 : i32
    return %c0_i32, %c0_i32_0, %c0_i32_1 : i32, i32, i32
  }
  func.func @transform_4(%arg0: i32, %arg1: i32) -> (i32, i32, i32) {
    %c0_i32 = arith.constant 0 : i32
    %c0_i32_0 = arith.constant 0 : i32
    %c0_i32_1 = arith.constant 0 : i32
    %c0_i32_2 = arith.constant 0 : i32
    return %c0_i32, %c0_i32_0, %c0_i32_1 : i32, i32, i32
  }
  func.func @transform_5(%arg0: i32, %arg1: i32) -> (i32, i32, i32) {
    %c0_i32 = arith.constant 0 : i32
    %c0_i32_0 = arith.constant 0 : i32
    %c0_i32_1 = arith.constant 0 : i32
    %c0_i32_2 = arith.constant 0 : i32
    return %c0_i32, %c0_i32_0, %c0_i32_1 : i32, i32, i32
  }
  func.func @transform_6(%arg0: i32, %arg1: i32) -> (i32, i32, i32) {
    %c0_i32 = arith.constant 0 : i32
    %c0_i32_0 = arith.constant 0 : i32
    %c0_i32_1 = arith.constant 0 : i32
    %c0_i32_2 = arith.constant 0 : i32
    return %c0_i32, %c0_i32_0, %c0_i32_1 : i32, i32, i32
  }
  func.func @transform_7(%arg0: i32, %arg1: i32) -> (i32, i32, i32) {
    %c0_i32 = arith.constant 0 : i32
    %c0_i32_0 = arith.constant 0 : i32
    %c0_i32_1 = arith.constant 0 : i32
    %c0_i32_2 = arith.constant 0 : i32
    return %c0_i32, %c0_i32_0, %c0_i32_1 : i32, i32, i32
  }
  func.func @transform_8(%arg0: i32, %arg1: i32) -> (i32, i32, i32) {
    %c0_i32 = arith.constant 0 : i32
    %c0_i32_0 = arith.constant 0 : i32
    %c0_i32_1 = arith.constant 0 : i32
    %c0_i32_2 = arith.constant 0 : i32
    return %c0_i32, %c0_i32_0, %c0_i32_1 : i32, i32, i32
  }
  func.func @transform_9(%arg0: i32, %arg1: i32) -> (i32, i32, i32) {
    %c0_i32 = arith.constant 0 : i32
    %c0_i32_0 = arith.constant 0 : i32
    %c0_i32_1 = arith.constant 0 : i32
    %c0_i32_2 = arith.constant 0 : i32
    return %c0_i32, %c0_i32_0, %c0_i32_1 : i32, i32, i32
  }
  func.func @transform_10(%arg0: i32, %arg1: i32) -> (i32, i32, i32) {
    %c0_i32 = arith.constant 0 : i32
    %c0_i32_0 = arith.constant 0 : i32
    %c0_i32_1 = arith.constant 0 : i32
    %c0_i32_2 = arith.constant 0 : i32
    return %c0_i32, %c0_i32_0, %c0_i32_1 : i32, i32, i32
  }
  func.func @transform_11(%arg0: i32, %arg1: i32) -> (i32, i32, i32) {
    %c0_i32 = arith.constant 0 : i32
    %c0_i32_0 = arith.constant 0 : i32
    %c0_i32_1 = arith.constant 0 : i32
    %c0_i32_2 = arith.constant 0 : i32
    return %c0_i32, %c0_i32_0, %c0_i32_1 : i32, i32, i32
  }
  func.func @transform_12(%arg0: i32, %arg1: i32) -> (i32, i32, i32) {
    %c0_i32 = arith.constant 0 : i32
    %c0_i32_0 = arith.constant 0 : i32
    %c0_i32_1 = arith.constant 0 : i32
    %c0_i32_2 = arith.constant 0 : i32
    return %c0_i32, %c0_i32_0, %c0_i32_1 : i32, i32, i32
  }
  func.func @transform_13(%arg0: i32, %arg1: i32) -> (i32, i32, i32) {
    %c0_i32 = arith.constant 0 : i32
    %c0_i32_0 = arith.constant 0 : i32
    %c0_i32_1 = arith.constant 0 : i32
    %c0_i32_2 = arith.constant 0 : i32
    return %c0_i32, %c0_i32_0, %c0_i32_1 : i32, i32, i32
  }
  func.func @transform_14(%arg0: i32, %arg1: i32) -> (i32, i32, i32) {
    %c0_i32 = arith.constant 0 : i32
    %c0_i32_0 = arith.constant 0 : i32
    %c0_i32_1 = arith.constant 0 : i32
    %c0_i32_2 = arith.constant 0 : i32
    return %c0_i32, %c0_i32_0, %c0_i32_1 : i32, i32, i32
  }
  func.func @transform_15(%arg0: i32, %arg1: i32) -> (i32, i32, i32) {
    %c0_i32 = arith.constant 0 : i32
    %c0_i32_0 = arith.constant 0 : i32
    %c0_i32_1 = arith.constant 0 : i32
    %c0_i32_2 = arith.constant 0 : i32
    return %c0_i32, %c0_i32_0, %c0_i32_1 : i32, i32, i32
  }
  func.func @transform_16(%arg0: i32, %arg1: i32) -> (i32, i32, i32) {
    %c0_i32 = arith.constant 0 : i32
    %c0_i32_0 = arith.constant 0 : i32
    %c0_i32_1 = arith.constant 0 : i32
    %c0_i32_2 = arith.constant 0 : i32
    return %c0_i32, %c0_i32_0, %c0_i32_1 : i32, i32, i32
  }
  func.func @transform_17(%arg0: i32, %arg1: i32) -> (i32, i32, i32, i32) {
    %c0_i32 = arith.constant 0 : i32
    %c0_i32_0 = arith.constant 0 : i32
    %c0_i32_1 = arith.constant 0 : i32
    return %arg0, %arg1, %c0_i32, %c0_i32_0 : i32, i32, i32, i32
  }
}

</mosaic_0001>

<llo_original>
// kernel: tpu_custom_call.1
$region0: #{tpu_custom_call.1}
  #allocation0 [shape = 'u32[]', space=smem, size = 0x4, offset = 0x4, fixed_abs, tag = 'smem constant byte address 0x4 - core index']
  #allocation1 [shape = 'u32[72,128]{1,0:T(1,128)}', space=vmem, size = 0x9000, scoped, tag = 'internal scratch']
  %s0 = inlined_call_operand.hbm [shape: f32[2,8,16], index: 0, kind: input, shape index: {}]
  %s1 = inlined_call_operand.hbm [shape: f32[5,32], index: 1, kind: input, shape index: {}]
  %s2 = inlined_call_operand.hbm [shape: f32[16,32], index: 2, kind: input, shape index: {}]
  %s3 = inlined_call_operand.vmem [shape: bf16[2,32,32], index: 3, kind: input, shape index: {}]
  %s4 = inlined_call_operand.vmem [shape: f32[2,1,32], index: 4, kind: input, shape index: {}]
  %s5 = inlined_call_operand.vmem [shape: bf16[2,32,32], index: 5, kind: input, shape index: {}]
  %s6 = inlined_call_operand.vmem [shape: f32[2,1,32], index: 6, kind: input, shape index: {}]
  %s7 = inlined_call_operand.vmem [shape: bf16[2,32,32], index: 7, kind: input, shape index: {}]
  %s8 = inlined_call_operand.vmem [shape: f32[2,1,32], index: 8, kind: input, shape index: {}]
  %s9 = inlined_call_operand.hbm [shape: bf16[2,32,32], index: 9, kind: input, shape index: {}]
  %s10 = inlined_call_operand.vmem [shape: f32[2,1,32], index: 10, kind: input, shape index: {}]
  %s11 = inlined_call_operand.hbm [shape: bf16[2,32,64], index: 11, kind: input, shape index: {}]
  %s12 = inlined_call_operand.vmem [shape: f32[2,1,64], index: 12, kind: input, shape index: {}]
  %s13 = inlined_call_operand.vmem [shape: bf16[2,64,32], index: 13, kind: input, shape index: {}]
  %s14 = inlined_call_operand.vmem [shape: f32[2,1,32], index: 14, kind: input, shape index: {}]
  %s15 = inlined_call_operand.hbm [shape: f32[2,1,32], index: 15, kind: input, shape index: {}]
  %s16 = inlined_call_operand.vmem [shape: f32[2,1,32], index: 16, kind: input, shape index: {}]
  %s17 = inlined_call_operand.hbm [shape: f32[2,4,16,32], index: 17, kind: output, shape index: {}]
  %s18 = sld [smem:[#allocation0]]
  $region125: #{tpu_custom_call.1} parent=0
    _
  %s20 = ssub.s32 1, %s18
  %s21 = scalar_select 0, %s20, %s18
  $region1: #{tpu_custom_call.1} parent=0
    #allocation2 [shape = 'u8[8192]{0}', space=vmem, size = 0x2000, scoped, tag = 'input window, operand 0']
    #allocation3 [shape = 's32[2]{0}', space=sflag, size = 0x8, scoped, tag = 'scoped memory for tpu_custom_call.1']
    #allocation4 [shape = 's32[2]{0}', space=sflag, size = 0x8, scoped, tag = 'scoped memory for tpu_custom_call.1']
    #allocation5 [shape = 'u8[4096]{0}', space=vmem, size = 0x1000, scoped, tag = 'input window, operand 1, single buffered']
    #allocation6 [shape = 's32[1]{0}', space=sflag, size = 0x4, scoped, tag = 'scoped memory for tpu_custom_call.1']
    #allocation7 [shape = 'u8[8192]{0}', space=vmem, size = 0x2000, scoped, tag = 'input window, operand 2, single buffered']
    #allocation8 [shape = 'u8[16384]{0}', space=vmem, size = 0x4000, scoped, tag = 'input window, operand 9, single buffered']
    #allocation9 [shape = 's32[1]{0}', space=sflag, size = 0x4, scoped, tag = 'scoped memory for tpu_custom_call.1']
    #allocation10 [shape = 'u8[16384]{0}', space=vmem, size = 0x4000, scoped, tag = 'input window, operand 11, single buffered']
    #allocation11 [shape = 'u8[1024]{0}', space=vmem, size = 0x400, scoped, tag = 'input window, operand 15, single buffered']
    #allocation12 [shape = 's32[1]{0}', space=sflag, size = 0x4, scoped, tag = 'scoped memory for tpu_custom_call.1']
    #allocation13 [shape = 'u8[65536]{0}', space=vmem, size = 0x10000, scoped, tag = 'output window, operand 0']
    %22 = vsyncpa [#allocation3], 0
    %s23 = scalar_lea.sflag [#allocation3], 1
    %24 = vsyncpa %s23, 0
    %25 = vsyncpa [#allocation6], 0
    %26 = vsyncpa [#allocation9], 0
    %27 = vsyncpa [#allocation12], 0
    %28 = vsyncpa [#allocation4], 0
    %s29 = scalar_lea.sflag [#allocation4], 1
    %30 = vsyncpa %s29, 0
    loop: start=0, step=1, limit=4
    $region2: #{tpu_custom_call.1} parent=1 // loop_pre_header
      _
    $region3: #{tpu_custom_call.1} parent=1 // loop_header
      %s32 = sphi 0, %s36
      %p33 = scmp.ge.s32.totalorder %s32, 4
      %s39 = sphi 0, %s51
      %s40 = sphi 0, %s47
      %s41 = sphi 0, %s39
      %s42 = sphi 0, %s40
      %s43 = sphi 0, %s41
      %s44 = sphi 0, %s42
      %s54 = sphi 0, %s56
      %s57 = sphi 0, %s54
      %s58 = sphi 0, %s57
      %s74 = sphi 0, %s58
      %s78 = sphi 0, %s78
      %s80 = sphi 0, %s78
      %s81 = sphi 0, %s80
      %s95 = sphi 0, %s81
      %s99 = sphi 0, %s99
      %s101 = sphi 0, %s99
      %s102 = sphi 0, %s101
      %s116 = sphi 0, %s102
      %s120 = sphi 0, %s120
      %s122 = sphi 0, %s120
      %s123 = sphi 0, %s122
      %s137 = sphi 0, %s123
      %s141 = sphi 0, %s141
      %s143 = sphi 0, %s141
      %s144 = sphi 0, %s143
      %s158 = sphi 0, %s144
      %s162 = sphi 0, %s162
      %s164 = sphi 0, %s162
      %s165 = sphi 0, %s164
      %s179 = sphi 0, %s165
      %s183 = sphi 0, %s183
      %s185 = sphi 0, %s183
      %s186 = sphi 0, %s185
      %s200 = sphi 0, %s186
      %s204 = sphi 0, %s204
      %s206 = sphi 0, %s204
      %s207 = sphi 0, %s206
      %s221 = sphi 0, %s207
      %s225 = sphi 0, %s225
      %s227 = sphi 0, %s225
      %s228 = sphi 0, %s227
      %s242 = sphi 0, %s228
      %s246 = sphi 0, %s246
      %s248 = sphi 0, %s246
      %s249 = sphi 0, %s248
      %s263 = sphi 0, %s249
      %s267 = sphi 0, %s267
      %s269 = sphi 0, %s267
      %s270 = sphi 0, %s269
      %s284 = sphi 0, %s270
      %s288 = sphi 0, %s288
      %s290 = sphi 0, %s288
      %s291 = sphi 0, %s290
      %s305 = sphi 0, %s291
      %s309 = sphi 0, %s309
      %s311 = sphi 0, %s309
      %s312 = sphi 0, %s311
      %s326 = sphi 0, %s312
      %s330 = sphi 0, %s330
      %s332 = sphi 0, %s330
      %s333 = sphi 0, %s332
      %s347 = sphi 0, %s333
      %s351 = sphi 0, %s351
      %s353 = sphi 0, %s351
      %s354 = sphi 0, %s353
      %s368 = sphi 0, %s354
      %s372 = sphi 0, %s372
      %s374 = sphi 0, %s372
      %s375 = sphi 0, %s374
      %s389 = sphi 0, %s375
      %s393 = sphi 0, %s393
      %s395 = sphi 0, %s393
      %s396 = sphi 0, %s395
      %s410 = sphi 0, %s396
      %s418 = sphi 0, %s420
      %s421 = sphi 0, %s418
      %s422 = sphi 0, %s421
      %s438 = sphi 0, %s422
    $region4: #{tpu_custom_call.1} parent=1 // loop_header_branch
      %35 = sbr.rel (%p33) target = $region8
    $region5: #{tpu_custom_call.1} parent=1 // loop_body
      %s37 = ssub.s32 %s32, 1
      %s38 = ssub.s32 %s32, 2
      %s45 = sadd.s32 1, %s40
      %p46 = scmp.ge.s32.totalorder %s45, 1
      %s47 = scalar_select %p46, 0, %s45
      %s48 = sadd.s32 1, %s39
      %s49 = scalar_select %p46, %s48, %s39
      %p50 = scmp.ge.s32.totalorder %s49, 2
      %s51 = scalar_select %p50, 0, %s49
      %s52 = ssub.s32 %s39, %s51
      %p53 = scmp.eq.s32.totalorder %s52, 0
      %s55 = sadd.s32 %s54, 1
      %s56 = scalar_select %p53, %s54, %s55
      %p59 = pneg %p53
      %p60 = scmp.eq.s32.totalorder %s32, 1
      %p61 = por %p59, %p60
      %p62 = scmp.ne.s32.totalorder %s54, %s57
      %p63 = scmp.eq.s32.totalorder %s32, 0
      %p64 = por %p62, %p63
      %p65 = scmp.ne.s32.totalorder %s54, %s57
      %p66 = scmp.eq.s32.totalorder %s37, 1
      %p67 = por %p65, %p66
      %p68 = scmp.ne.s32.totalorder %s57, %s58
      %p69 = scmp.eq.s32.totalorder %s37, 0
      %p70 = por %p68, %p69
      %p71 = scmp.ne.s32.totalorder %s57, %s58
      %p72 = scmp.eq.s32.totalorder %s38, 1
      %p73 = por %p71, %p72
      %p75 = scmp.ne.s32.totalorder %s58, %s74
      %p76 = scmp.eq.s32.totalorder %s38, 0
      %p77 = por %p75, %p76
      %s79 = sadd.s32 %s78, 1
      %p82 = scmp.eq.s32.totalorder %s32, 1
      %p83 = scmp.ne.s32.totalorder %s78, %s80
      %p84 = scmp.eq.s32.totalorder %s32, 0
      %p85 = por %p83, %p84
      %p86 = scmp.ne.s32.totalorder %s78, %s80
      %p87 = scmp.eq.s32.totalorder %s37, 1
      %p88 = por %p86, %p87
      %p89 = scmp.ne.s32.totalorder %s80, %s81
      %p90 = scmp.eq.s32.totalorder %s37, 0
      %p91 = por %p89, %p90
      %p92 = scmp.ne.s32.totalorder %s80, %s81
      %p93 = scmp.eq.s32.totalorder %s38, 1
      %p94 = por %p92, %p93
      %p96 = scmp.ne.s32.totalorder %s81, %s95
      %p97 = scmp.eq.s32.totalorder %s38, 0
      %p98 = por %p96, %p97
      %s100 = sadd.s32 %s99, 1
      %p103 = scmp.eq.s32.totalorder %s32, 1
      %p104 = scmp.ne.s32.totalorder %s99, %s101
      %p105 = scmp.eq.s32.totalorder %s32, 0
      %p106 = por %p104, %p105
      %p107 = scmp.ne.s32.totalorder %s99, %s101
      %p108 = scmp.eq.s32.totalorder %s37, 1
      %p109 = por %p107, %p108
      %p110 = scmp.ne.s32.totalorder %s101, %s102
      %p111 = scmp.eq.s32.totalorder %s37, 0
      %p112 = por %p110, %p111
      %p113 = scmp.ne.s32.totalorder %s101, %s102
      %p114 = scmp.eq.s32.totalorder %s38, 1
      %p115 = por %p113, %p114
      %p117 = scmp.ne.s32.totalorder %s102, %s116
      %p118 = scmp.eq.s32.totalorder %s38, 0
      %p119 = por %p117, %p118
      %s121 = sadd.s32 %s120, 1
      %p124 = scmp.eq.s32.totalorder %s32, 1
      %p125 = scmp.ne.s32.totalorder %s120, %s122
      %p126 = scmp.eq.s32.totalorder %s32, 0
      %p127 = por %p125, %p126
      %p128 = scmp.ne.s32.totalorder %s120, %s122
      %p129 = scmp.eq.s32.totalorder %s37, 1
      %p130 = por %p128, %p129
      %p131 = scmp.ne.s32.totalorder %s122, %s123
      %p132 = scmp.eq.s32.totalorder %s37, 0
      %p133 = por %p131, %p132
      %p134 = scmp.ne.s32.totalorder %s122, %s123
      %p135 = scmp.eq.s32.totalorder %s38, 1
      %p136 = por %p134, %p135
      %p138 = scmp.ne.s32.totalorder %s123, %s137
      %p139 = scmp.eq.s32.totalorder %s38, 0
      %p140 = por %p138, %p139
      %s142 = sadd.s32 %s141, 1
      %p145 = scmp.eq.s32.totalorder %s32, 1
      %p146 = scmp.ne.s32.totalorder %s141, %s143
      %p147 = scmp.eq.s32.totalorder %s32, 0
      %p148 = por %p146, %p147
      %p149 = scmp.ne.s32.totalorder %s141, %s143
      %p150 = scmp.eq.s32.totalorder %s37, 1
      %p151 = por %p149, %p150
      %p152 = scmp.ne.s32.totalorder %s143, %s144
      %p153 = scmp.eq.s32.totalorder %s37, 0
      %p154 = por %p152, %p153
      %p155 = scmp.ne.s32.totalorder %s143, %s144
      %p156 = scmp.eq.s32.totalorder %s38, 1
      %p157 = por %p155, %p156
      %p159 = scmp.ne.s32.totalorder %s144, %s158
      %p160 = scmp.eq.s32.totalorder %s38, 0
      %p161 = por %p159, %p160
      %s163 = sadd.s32 %s162, 1
      %p166 = scmp.eq.s32.totalorder %s32, 1
      %p167 = scmp.ne.s32.totalorder %s162, %s164
      %p168 = scmp.eq.s32.totalorder %s32, 0
      %p169 = por %p167, %p168
      %p170 = scmp.ne.s32.totalorder %s162, %s164
      %p171 = scmp.eq.s32.totalorder %s37, 1
      %p172 = por %p170, %p171
      %p173 = scmp.ne.s32.totalorder %s164, %s165
      %p174 = scmp.eq.s32.totalorder %s37, 0
      %p175 = por %p173, %p174
      %p176 = scmp.ne.s32.totalorder %s164, %s165
      %p177 = scmp.eq.s32.totalorder %s38, 1
      %p178 = por %p176, %p177
      %p180 = scmp.ne.s32.totalorder %s165, %s179
      %p181 = scmp.eq.s32.totalorder %s38, 0
      %p182 = por %p180, %p181
      %s184 = sadd.s32 %s183, 1
      %p187 = scmp.eq.s32.totalorder %s32, 1
      %p188 = scmp.ne.s32.totalorder %s183, %s185
      %p189 = scmp.eq.s32.totalorder %s32, 0
      %p190 = por %p188, %p189
      %p191 = scmp.ne.s32.totalorder %s183, %s185
      %p192 = scmp.eq.s32.totalorder %s37, 1
      %p193 = por %p191, %p192
      %p194 = scmp.ne.s32.totalorder %s185, %s186
      %p195 = scmp.eq.s32.totalorder %s37, 0
      %p196 = por %p194, %p195
      %p197 = scmp.ne.s32.totalorder %s185, %s186
      %p198 = scmp.eq.s32.totalorder %s38, 1
      %p199 = por %p197, %p198
      %p201 = scmp.ne.s32.totalorder %s186, %s200
      %p202 = scmp.eq.s32.totalorder %s38, 0
      %p203 = por %p201, %p202
      %s205 = sadd.s32 %s204, 1
      %p208 = scmp.eq.s32.totalorder %s32, 1
      %p209 = scmp.ne.s32.totalorder %s204, %s206
      %p210 = scmp.eq.s32.totalorder %s32, 0
      %p211 = por %p209, %p210
      %p212 = scmp.ne.s32.totalorder %s204, %s206
      %p213 = scmp.eq.s32.totalorder %s37, 1
      %p214 = por %p212, %p213
      %p215 = scmp.ne.s32.totalorder %s206, %s207
      %p216 = scmp.eq.s32.totalorder %s37, 0
      %p217 = por %p215, %p216
      %p218 = scmp.ne.s32.totalorder %s206, %s207
      %p219 = scmp.eq.s32.totalorder %s38, 1
      %p220 = por %p218, %p219
      %p222 = scmp.ne.s32.totalorder %s207, %s221
      %p223 = scmp.eq.s32.totalorder %s38, 0
      %p224 = por %p222, %p223
      %s226 = sadd.s32 %s225, 1
      %p229 = scmp.eq.s32.totalorder %s32, 1
      %p230 = scmp.ne.s32.totalorder %s225, %s227
      %p231 = scmp.eq.s32.totalorder %s32, 0
      %p232 = por %p230, %p231
      %p233 = scmp.ne.s32.totalorder %s225, %s227
      %p234 = scmp.eq.s32.totalorder %s37, 1
      %p235 = por %p233, %p234
      %p236 = scmp.ne.s32.totalorder %s227, %s228
      %p237 = scmp.eq.s32.totalorder %s37, 0
      %p238 = por %p236, %p237
      %p239 = scmp.ne.s32.totalorder %s227, %s228
      %p240 = scmp.eq.s32.totalorder %s38, 1
      %p241 = por %p239, %p240
      %p243 = scmp.ne.s32.totalorder %s228, %s242
      %p244 = scmp.eq.s32.totalorder %s38, 0
      %p245 = por %p243, %p244
      %s247 = sadd.s32 %s246, 1
      %p250 = scmp.eq.s32.totalorder %s32, 1
      %p251 = scmp.ne.s32.totalorder %s246, %s248
      %p252 = scmp.eq.s32.totalorder %s32, 0
      %p253 = por %p251, %p252
      %p254 = scmp.ne.s32.totalorder %s246, %s248
      %p255 = scmp.eq.s32.totalorder %s37, 1
      %p256 = por %p254, %p255
      %p257 = scmp.ne.s32.totalorder %s248, %s249
      %p258 = scmp.eq.s32.totalorder %s37, 0
      %p259 = por %p257, %p258
      %p260 = scmp.ne.s32.totalorder %s248, %s249
      %p261 = scmp.eq.s32.totalorder %s38, 1
      %p262 = por %p260, %p261
      %p264 = scmp.ne.s32.totalorder %s249, %s263
      %p265 = scmp.eq.s32.totalorder %s38, 0
      %p266 = por %p264, %p265
      %s268 = sadd.s32 %s267, 1
      %p271 = scmp.eq.s32.totalorder %s32, 1
      %p272 = scmp.ne.s32.totalorder %s267, %s269
      %p273 = scmp.eq.s32.totalorder %s32, 0
      %p274 = por %p272, %p273
      %p275 = scmp.ne.s32.totalorder %s267, %s269
      %p276 = scmp.eq.s32.totalorder %s37, 1
      %p277 = por %p275, %p276
      %p278 = scmp.ne.s32.totalorder %s269, %s270
      %p279 = scmp.eq.s32.totalorder %s37, 0
      %p280 = por %p278, %p279
      %p281 = scmp.ne.s32.totalorder %s269, %s270
      %p282 = scmp.eq.s32.totalorder %s38, 1
      %p283 = por %p281, %p282
      %p285 = scmp.ne.s32.totalorder %s270, %s284
      %p286 = scmp.eq.s32.totalorder %s38, 0
      %p287 = por %p285, %p286
      %s289 = sadd.s32 %s288, 1
      %p292 = scmp.eq.s32.totalorder %s32, 1
      %p293 = scmp.ne.s32.totalorder %s288, %s290
      %p294 = scmp.eq.s32.totalorder %s32, 0
      %p295 = por %p293, %p294
      %p296 = scmp.ne.s32.totalorder %s288, %s290
      %p297 = scmp.eq.s32.totalorder %s37, 1
      %p298 = por %p296, %p297
      %p299 = scmp.ne.s32.totalorder %s290, %s291
      %p300 = scmp.eq.s32.totalorder %s37, 0
      %p301 = por %p299, %p300
      %p302 = scmp.ne.s32.totalorder %s290, %s291
      %p303 = scmp.eq.s32.totalorder %s38, 1
      %p304 = por %p302, %p303
      %p306 = scmp.ne.s32.totalorder %s291, %s305
      %p307 = scmp.eq.s32.totalorder %s38, 0
      %p308 = por %p306, %p307
      %s310 = sadd.s32 %s309, 1
      %p313 = scmp.eq.s32.totalorder %s32, 1
      %p314 = scmp.ne.s32.totalorder %s309, %s311
      %p315 = scmp.eq.s32.totalorder %s32, 0
      %p316 = por %p314, %p315
      %p317 = scmp.ne.s32.totalorder %s309, %s311
      %p318 = scmp.eq.s32.totalorder %s37, 1
      %p319 = por %p317, %p318
      %p320 = scmp.ne.s32.totalorder %s311, %s312
      %p321 = scmp.eq.s32.totalorder %s37, 0
      %p322 = por %p320, %p321
      %p323 = scmp.ne.s32.totalorder %s311, %s312
      %p324 = scmp.eq.s32.totalorder %s38, 1
      %p325 = por %p323, %p324
      %p327 = scmp.ne.s32.totalorder %s312, %s326
      %p328 = scmp.eq.s32.totalorder %s38, 0
      %p329 = por %p327, %p328
      %s331 = sadd.s32 %s330, 1
      %p334 = scmp.eq.s32.totalorder %s32, 1
      %p335 = scmp.ne.s32.totalorder %s330, %s332
      %p336 = scmp.eq.s32.totalorder %s32, 0
      %p337 = por %p335, %p336
      %p338 = scmp.ne.s32.totalorder %s330, %s332
      %p339 = scmp.eq.s32.totalorder %s37, 1
      %p340 = por %p338, %p339
      %p341 = scmp.ne.s32.totalorder %s332, %s333
      %p342 = scmp.eq.s32.totalorder %s37, 0
      %p343 = por %p341, %p342
      %p344 = scmp.ne.s32.totalorder %s332, %s333
      %p345 = scmp.eq.s32.totalorder %s38, 1
      %p346 = por %p344, %p345
      %p348 = scmp.ne.s32.totalorder %s333, %s347
      %p349 = scmp.eq.s32.totalorder %s38, 0
      %p350 = por %p348, %p349
      %s352 = sadd.s32 %s351, 1
      %p355 = scmp.eq.s32.totalorder %s32, 1
      %p356 = scmp.ne.s32.totalorder %s351, %s353
      %p357 = scmp.eq.s32.totalorder %s32, 0
      %p358 = por %p356, %p357
      %p359 = scmp.ne.s32.totalorder %s351, %s353
      %p360 = scmp.eq.s32.totalorder %s37, 1
      %p361 = por %p359, %p360
      %p362 = scmp.ne.s32.totalorder %s353, %s354
      %p363 = scmp.eq.s32.totalorder %s37, 0
      %p364 = por %p362, %p363
      %p365 = scmp.ne.s32.totalorder %s353, %s354
      %p366 = scmp.eq.s32.totalorder %s38, 1
      %p367 = por %p365, %p366
      %p369 = scmp.ne.s32.totalorder %s354, %s368
      %p370 = scmp.eq.s32.totalorder %s38, 0
      %p371 = por %p369, %p370
      %s373 = sadd.s32 %s372, 1
      %p376 = scmp.eq.s32.totalorder %s32, 1
      %p377 = scmp.ne.s32.totalorder %s372, %s374
      %p378 = scmp.eq.s32.totalorder %s32, 0
      %p379 = por %p377, %p378
      %p380 = scmp.ne.s32.totalorder %s372, %s374
      %p381 = scmp.eq.s32.totalorder %s37, 1
      %p382 = por %p380, %p381
      %p383 = scmp.ne.s32.totalorder %s374, %s375
      %p384 = scmp.eq.s32.totalorder %s37, 0
      %p385 = por %p383, %p384
      %p386 = scmp.ne.s32.totalorder %s374, %s375
      %p387 = scmp.eq.s32.totalorder %s38, 1
      %p388 = por %p386, %p387
      %p390 = scmp.ne.s32.totalorder %s375, %s389
      %p391 = scmp.eq.s32.totalorder %s38, 0
      %p392 = por %p390, %p391
      %s394 = sadd.s32 %s393, 1
      %p397 = scmp.eq.s32.totalorder %s32, 1
      %p398 = scmp.ne.s32.totalorder %s393, %s395
      %p399 = scmp.eq.s32.totalorder %s32, 0
      %p400 = por %p398, %p399
      %p401 = scmp.ne.s32.totalorder %s393, %s395
      %p402 = scmp.eq.s32.totalorder %s37, 1
      %p403 = por %p401, %p402
      %p404 = scmp.ne.s32.totalorder %s395, %s396
      %p405 = scmp.eq.s32.totalorder %s37, 0
      %p406 = por %p404, %p405
      %p407 = scmp.ne.s32.totalorder %s395, %s396
      %p408 = scmp.eq.s32.totalorder %s38, 1
      %p409 = por %p407, %p408
      %p411 = scmp.ne.s32.totalorder %s396, %s410
      %p412 = scmp.eq.s32.totalorder %s38, 0
      %p413 = por %p411, %p412
      %s414 = ssub.s32 %s39, %s51
      %s415 = ssub.s32 %s40, %s47
      %s416 = sor.u32 %s414, %s415
      %p417 = scmp.eq.s32.totalorder %s416, 0
      %s419 = sadd.s32 %s418, 1
      %s420 = scalar_select %p417, %s418, %s419
      %p423 = pneg %p417
      %p424 = scmp.eq.s32.totalorder %s32, 1
      %p425 = por %p423, %p424
      %p426 = scmp.ne.s32.totalorder %s418, %s421
      %p427 = scmp.eq.s32.totalorder %s32, 0
      %p428 = por %p426, %p427
      %p429 = scmp.ne.s32.totalorder %s418, %s421
      %p430 = scmp.eq.s32.totalorder %s37, 1
      %p431 = por %p429, %p430
      %p432 = scmp.ne.s32.totalorder %s421, %s422
      %p433 = scmp.eq.s32.totalorder %s37, 0
      %p434 = por %p432, %p433
      %p435 = scmp.ne.s32.totalorder %s421, %s422
      %p436 = scmp.eq.s32.totalorder %s38, 1
      %p437 = por %p435, %p436
      %p439 = scmp.ne.s32.totalorder %s422, %s438
      %p440 = scmp.eq.s32.totalorder %s38, 0
      %p441 = por %p439, %p440
      %p442 = scmp.le.s32.totalorder 1, %s32
      %p443 = scmp.lt.s32.totalorder %s32, 3
      %p444 = pnand %p442, %p443
      %p445 = pneg %p444
      // Predicated region
      $region9: #{tpu_custom_call.1} parent=5 // pred_check
        _
      $region10: #{tpu_custom_call.1} parent=5 // pred_check_branch
        %447 = sbr.rel (%p444) target = $region12
      $region11: #{tpu_custom_call.1} parent=5 // pred_region
        %s448 = ssub.s32 %s32, 1
        // Predicated region
        $region13: #{tpu_custom_call.1} parent=11 // pred_check
          %p449 = pneg %p91
        $region14: #{tpu_custom_call.1} parent=11 // pred_check_branch
          %451 = sbr.rel (%p449) target = $region16
        $region15: #{tpu_custom_call.1} parent=11 // pred_region
          %453 = vsyncadd [#allocation6], 0
          %s455 = sshll.u32 %s1, 4
          %s456 = int_to_ptr.hbm [resolvable:$true] %s455
          %s457 = sshll.u32 [#allocation5], 4
          %s458 = int_to_ptr.vmem [resolvable:$true] %s457
          %460 = dma.hbm_to_vmem [thread:$0]  %s456, 128, %s458, [#allocation6]
        $region16: #{tpu_custom_call.1} parent=11 // pred_fallthru
          _
        // Predicated region
        $region17: #{tpu_custom_call.1} parent=11 // pred_check
          %p461 = pneg %p112
        $region18: #{tpu_custom_call.1} parent=11 // pred_check_branch
          %463 = sbr.rel (%p461) target = $region20
        $region19: #{tpu_custom_call.1} parent=11 // pred_region
          %465 = vsyncadd [#allocation6], 0
          %s466 = sshll.u32 %s2, 4
          %s467 = int_to_ptr.hbm [resolvable:$true] %s466
          %s468 = sshll.u32 [#allocation7], 4
          %s469 = int_to_ptr.vmem [resolvable:$true] %s468
          %474 = dma.hbm_to_vmem [thread:$0]  %s467, 256, %s469, [#allocation6], 128, 128, 8
        $region20: #{tpu_custom_call.1} parent=11 // pred_fallthru
          _
        // Predicated region
        $region21: #{tpu_custom_call.1} parent=11 // pred_check
          %p475 = pneg %p133
        $region22: #{tpu_custom_call.1} parent=11 // pred_check_branch
          %477 = sbr.rel (%p475) target = $region24
        $region23: #{tpu_custom_call.1} parent=11 // pred_region
          _
        $region24: #{tpu_custom_call.1} parent=11 // pred_fallthru
          _
        // Predicated region
        $region25: #{tpu_custom_call.1} parent=11 // pred_check
          %p478 = pneg %p154
        $region26: #{tpu_custom_call.1} parent=11 // pred_check_branch
          %480 = sbr.rel (%p478) target = $region28
        $region27: #{tpu_custom_call.1} parent=11 // pred_region
          _
        $region28: #{tpu_custom_call.1} parent=11 // pred_fallthru
          _
        // Predicated region
        $region29: #{tpu_custom_call.1} parent=11 // pred_check
          %p481 = pneg %p175
        $region30: #{tpu_custom_call.1} parent=11 // pred_check_branch
          %483 = sbr.rel (%p481) target = $region32
        $region31: #{tpu_custom_call.1} parent=11 // pred_region
          _
        $region32: #{tpu_custom_call.1} parent=11 // pred_fallthru
          _
        // Predicated region
        $region33: #{tpu_custom_call.1} parent=11 // pred_check
          %p484 = pneg %p196
        $region34: #{tpu_custom_call.1} parent=11 // pred_check_branch
          %486 = sbr.rel (%p484) target = $region36
        $region35: #{tpu_custom_call.1} parent=11 // pred_region
          _
        $region36: #{tpu_custom_call.1} parent=11 // pred_fallthru
          _
        // Predicated region
        $region37: #{tpu_custom_call.1} parent=11 // pred_check
          %p487 = pneg %p217
        $region38: #{tpu_custom_call.1} parent=11 // pred_check_branch
          %489 = sbr.rel (%p487) target = $region40
        $region39: #{tpu_custom_call.1} parent=11 // pred_region
          _
        $region40: #{tpu_custom_call.1} parent=11 // pred_fallthru
          _
        // Predicated region
        $region41: #{tpu_custom_call.1} parent=11 // pred_check
          %p490 = pneg %p238
        $region42: #{tpu_custom_call.1} parent=11 // pred_check_branch
          %492 = sbr.rel (%p490) target = $region44
        $region43: #{tpu_custom_call.1} parent=11 // pred_region
          _
        $region44: #{tpu_custom_call.1} parent=11 // pred_fallthru
          _
        // Predicated region
        $region45: #{tpu_custom_call.1} parent=11 // pred_check
          %p493 = pneg %p259
        $region46: #{tpu_custom_call.1} parent=11 // pred_check_branch
          %495 = sbr.rel (%p493) target = $region48
        $region47: #{tpu_custom_call.1} parent=11 // pred_region
          %497 = vsyncadd [#allocation9], 0
          %s498 = sshll.u32 %s9, 4
          %s499 = int_to_ptr.hbm [resolvable:$true] %s498
          %s500 = sshll.u32 [#allocation8], 4
          %s501 = int_to_ptr.vmem [resolvable:$true] %s500
          %506 = dma.hbm_to_vmem [thread:$0]  %s499, 512, %s501, [#allocation9], 64, 64, 4
        $region48: #{tpu_custom_call.1} parent=11 // pred_fallthru
          _
        // Predicated region
        $region49: #{tpu_custom_call.1} parent=11 // pred_check
          %p507 = pneg %p280
        $region50: #{tpu_custom_call.1} parent=11 // pred_check_branch
          %509 = sbr.rel (%p507) target = $region52
        $region51: #{tpu_custom_call.1} parent=11 // pred_region
          _
        $region52: #{tpu_custom_call.1} parent=11 // pred_fallthru
          _
        // Predicated region
        $region53: #{tpu_custom_call.1} parent=11 // pred_check
          %p510 = pneg %p301
        $region54: #{tpu_custom_call.1} parent=11 // pred_check_branch
          %512 = sbr.rel (%p510) target = $region56
        $region55: #{tpu_custom_call.1} parent=11 // pred_region
          %514 = vsyncadd [#allocation9], 0
          %s515 = sshll.u32 %s11, 4
          %s516 = int_to_ptr.hbm [resolvable:$true] %s515
          %s517 = sshll.u32 [#allocation10], 4
          %s518 = int_to_ptr.vmem [resolvable:$true] %s517
          %523 = dma.hbm_to_vmem [thread:$0]  %s516, 512, %s518, [#allocation9], 64, 64, 4
        $region56: #{tpu_custom_call.1} parent=11 // pred_fallthru
          _
        // Predicated region
        $region57: #{tpu_custom_call.1} parent=11 // pred_check
          %p524 = pneg %p322
        $region58: #{tpu_custom_call.1} parent=11 // pred_check_branch
          %526 = sbr.rel (%p524) target = $region60
        $region59: #{tpu_custom_call.1} parent=11 // pred_region
          _
        $region60: #{tpu_custom_call.1} parent=11 // pred_fallthru
          _
        // Predicated region
        $region61: #{tpu_custom_call.1} parent=11 // pred_check
          %p527 = pneg %p343
        $region62: #{tpu_custom_call.1} parent=11 // pred_check_branch
          %529 = sbr.rel (%p527) target = $region64
        $region63: #{tpu_custom_call.1} parent=11 // pred_region
          _
        $region64: #{tpu_custom_call.1} parent=11 // pred_fallthru
          _
        // Predicated region
        $region65: #{tpu_custom_call.1} parent=11 // pred_check
          %p530 = pneg %p364
        $region66: #{tpu_custom_call.1} parent=11 // pred_check_branch
          %532 = sbr.rel (%p530) target = $region68
        $region67: #{tpu_custom_call.1} parent=11 // pred_region
          _
        $region68: #{tpu_custom_call.1} parent=11 // pred_fallthru
          _
        // Predicated region
        $region69: #{tpu_custom_call.1} parent=11 // pred_check
          %p533 = pneg %p385
        $region70: #{tpu_custom_call.1} parent=11 // pred_check_branch
          %535 = sbr.rel (%p533) target = $region72
        $region71: #{tpu_custom_call.1} parent=11 // pred_region
          %537 = vsyncadd [#allocation12], 0
          %s538 = sshll.u32 %s15, 4
          %s539 = int_to_ptr.hbm [resolvable:$true] %s538
          %s540 = sshll.u32 [#allocation11], 4
          %s541 = int_to_ptr.vmem [resolvable:$true] %s540
          %546 = dma.hbm_to_vmem [thread:$0]  %s539, 32, %s541, [#allocation12], 16, 16, 1
        $region72: #{tpu_custom_call.1} parent=11 // pred_fallthru
          _
        // Predicated region
        $region73: #{tpu_custom_call.1} parent=11 // pred_check
          %p547 = pneg %p406
        $region74: #{tpu_custom_call.1} parent=11 // pred_check_branch
          %549 = sbr.rel (%p547) target = $region76
        $region75: #{tpu_custom_call.1} parent=11 // pred_region
          _
        $region76: #{tpu_custom_call.1} parent=11 // pred_fallthru
          _
      $region12: #{tpu_custom_call.1} parent=5 // pred_fallthru
        _
      %p550 = scmp.lt.s32.totalorder %s32, 2
      // Predicated region
      $region77: #{tpu_custom_call.1} parent=5 // pred_check
        %p551 = pneg %p550
      $region78: #{tpu_custom_call.1} parent=5 // pred_check_branch
        %553 = sbr.rel (%p551) target = $region80
      $region79: #{tpu_custom_call.1} parent=5 // pred_region
        // Predicated region
        $region81: #{tpu_custom_call.1} parent=79 // pred_check
          %p554 = pneg %p64
        $region82: #{tpu_custom_call.1} parent=79 // pred_check_branch
          %556 = sbr.rel (%p554) target = $region84
        $region83: #{tpu_custom_call.1} parent=79 // pred_region
          %s557 = sand.u32 %s54, 1
          %s558 = scalar_lea.sflag [#allocation3], %s557
          %s559 = sand.u32 %s54, 1
          %s560 = smul.addr %s559, 8
          %s561 = scalar_lea.vmem [#allocation2], %s560
          %563 = vsyncadd %s558, 0
          %s564 = smul.addr %s39, 8
          %s565 = scalar_lea.hbm %s0, %s564
          %s567 = sshll.u32 %s565, 4
          %s568 = int_to_ptr.hbm [resolvable:$true] %s567
          %s569 = sshll.u32 %s561, 4
          %s570 = int_to_ptr.vmem [resolvable:$true] %s569
          %572 = dma.hbm_to_vmem [thread:$0]  %s568, 128, %s570, %s558
        $region84: #{tpu_custom_call.1} parent=79 // pred_fallthru
          _
      $region80: #{tpu_custom_call.1} parent=5 // pred_fallthru
        _
      %p573 = scmp.le.s32.totalorder 1, %s32
      %p574 = scmp.lt.s32.totalorder %s32, 3
      %p575 = pnand %p573, %p574
      %p576 = pneg %p575
      // Predicated region
      $region85: #{tpu_custom_call.1} parent=5 // pred_check
        _
      $region86: #{tpu_custom_call.1} parent=5 // pred_check_branch
        %578 = sbr.rel (%p575) target = $region88
      $region87: #{tpu_custom_call.1} parent=5 // pred_region
        %s579 = ssub.s32 %s32, 1
        %s580 = sand.u32 %s57, 1
        %s581 = scalar_lea.sflag [#allocation3], %s580
        %s582 = sand.u32 %s57, 1
        %s583 = smul.addr %s582, 8
        %s584 = scalar_lea.vmem [#allocation2], %s583
        // Predicated region
        $region89: #{tpu_custom_call.1} parent=87 // pred_check
          %p585 = pneg %p70
        $region90: #{tpu_custom_call.1} parent=87 // pred_check_branch
          %587 = sbr.rel (%p585) target = $region92
        $region91: #{tpu_custom_call.1} parent=87 // pred_region
          %589 = dma.done %s581, 128
        $region92: #{tpu_custom_call.1} parent=87 // pred_fallthru
          _
        // Predicated region
        $region93: #{tpu_custom_call.1} parent=87 // pred_check
          %p590 = pneg %p91
        $region94: #{tpu_custom_call.1} parent=87 // pred_check_branch
          %592 = sbr.rel (%p590) target = $region96
        $region95: #{tpu_custom_call.1} parent=87 // pred_region
          %594 = dma.done [#allocation6], 128
        $region96: #{tpu_custom_call.1} parent=87 // pred_fallthru
          _
        // Predicated region
        $region97: #{tpu_custom_call.1} parent=87 // pred_check
          %p595 = pneg %p112
        $region98: #{tpu_custom_call.1} parent=87 // pred_check_branch
          %597 = sbr.rel (%p595) target = $region100
        $region99: #{tpu_custom_call.1} parent=87 // pred_region
          %599 = dma.done [#allocation6], 256
        $region100: #{tpu_custom_call.1} parent=87 // pred_fallthru
          _
        // Predicated region
        $region101: #{tpu_custom_call.1} parent=87 // pred_check
          %p600 = pneg %p259
        $region102: #{tpu_custom_call.1} parent=87 // pred_check_branch
          %602 = sbr.rel (%p600) target = $region104
        $region103: #{tpu_custom_call.1} parent=87 // pred_region
          %604 = dma.done [#allocation9], 512
        $region104: #{tpu_custom_call.1} parent=87 // pred_fallthru
          _
        // Predicated region
        $region105: #{tpu_custom_call.1} parent=87 // pred_check
          %p605 = pneg %p301
        $region106: #{tpu_custom_call.1} parent=87 // pred_check_branch
          %607 = sbr.rel (%p605) target = $region108
        $region107: #{tpu_custom_call.1} parent=87 // pred_region
          %609 = dma.done [#allocation9], 512
        $region108: #{tpu_custom_call.1} parent=87 // pred_fallthru
          _
        // Predicated region
        $region109: #{tpu_custom_call.1} parent=87 // pred_check
          %p610 = pneg %p385
        $region110: #{tpu_custom_call.1} parent=87 // pred_check_branch
          %612 = sbr.rel (%p610) target = $region112
        $region111: #{tpu_custom_call.1} parent=87 // pred_region
          %614 = dma.done [#allocation12], 32
        $region112: #{tpu_custom_call.1} parent=87 // pred_fallthru
          _
        %s615 = sand.u32 %s57, 1
        %s616 = scalar_lea.sflag [#allocation3], %s615
        %s617 = sand.u32 %s57, 1
        %s618 = smul.addr %s617, 8
        %s619 = scalar_lea.vmem [#allocation2], %s618
        %p620 = pneg %p70
        %p621 = pneg %p67
        %p622 = pneg %p91
        %p623 = pneg %p88
        %p624 = pneg %p112
        %p625 = pneg %p109
        %p626 = pneg %p133
        %p627 = pneg %p130
        %p628 = pneg %p154
        %p629 = pneg %p151
        %p630 = pneg %p175
        %p631 = pneg %p172
        %p632 = pneg %p196
        %p633 = pneg %p193
        %p634 = pneg %p217
        %p635 = pneg %p214
        %p636 = pneg %p238
        %p637 = pneg %p235
        %p638 = pneg %p259
        %p639 = pneg %p256
        %p640 = pneg %p280
        %p641 = pneg %p277
        %p642 = pneg %p301
        %p643 = pneg %p298
        %p644 = pneg %p322
        %p645 = pneg %p319
        %p646 = pneg %p343
        %p647 = pneg %p340
        %p648 = pneg %p364
        %p649 = pneg %p361
        %p650 = pneg %p385
        %p651 = pneg %p382
        %p652 = pneg %p406
        %p653 = pneg %p403
        %p654 = pneg %p434
        %p655 = pneg %p431
        %s656 = sand.u32 %s421, 1
        %s657 = scalar_lea.sflag [#allocation4], %s656
        %s658 = sand.u32 %s421, 1
        %s659 = smul.addr %s658, 64
        %s660 = scalar_lea.vmem [#allocation13], %s659
        %s661 = smul.u32 4, %s42
        %s663 = smul.u32 %s42, 4
        %s664 = scalar_lea.vmem %s584, %s663 [#allocation2]
        %v665 = vld [vmem:[%s664] sm:$0xff]
        %v666 = vld [vmem:[#allocation5] sm:$0x1f]
        %v667 = vld [vmem:[#allocation7] sm:$0xff]
        %v668 = vld [vmem:[#allocation7 + $0x8] sm:$0xff]
        %669 = vxpose.xlu0.b32.start [1/16] %v665, 128
        %670 = vxpose.xlu0.b32.cont [2/16] 0.0, 128
        %671 = vxpose.xlu0.b32.cont [3/16] 0.0, 128
        %672 = vxpose.xlu0.b32.cont [4/16] 0.0, 128
        %673 = vxpose.xlu0.b32.cont [5/16] 0.0, 128
        %674 = vxpose.xlu0.b32.cont [6/16] 0.0, 128
        %675 = vxpose.xlu0.b32.cont [7/16] 0.0, 128
        %676 = vxpose.xlu0.b32.cont [8/16] 0.0, 128
        %677 = vxpose.xlu0.b32.cont [9/16] 0.0, 128
        %678 = vxpose.xlu0.b32.cont [10/16] 0.0, 128
        %679 = vxpose.xlu0.b32.cont [11/16] 0.0, 128
        %680 = vxpose.xlu0.b32.cont [12/16] 0.0, 128
        %681 = vxpose.xlu0.b32.cont [13/16] 0.0, 128
        %682 = vxpose.xlu0.b32.cont [14/16] 0.0, 128
        %683 = vxpose.xlu0.b32.cont [15/16] 0.0, 128
        %684 = vxpose.xlu0.b32.end [16/16] 0.0, 128
        %v685 = vpop.trf.xlu0
        %v686 = vpop.trf.xlu0
        %v687 = vpop.trf.xlu0
        %v688 = vpop.trf.xlu0
        %v689 = vpop.trf.xlu0
        %v690 = vpop.trf.xlu0
        %v691 = vpop.trf.xlu0
        %v692 = vpop.trf.xlu0
        %v693 = vpop.trf.xlu0
        %v694 = vpop.trf.xlu0
        %v695 = vpop.trf.xlu0
        %v696 = vpop.trf.xlu0
        %v697 = vpop.trf.xlu0
        %v698 = vpop.trf.xlu0
        %v699 = vpop.trf.xlu0
        %v700 = vpop.trf.xlu0
        %vm701 = vcmask 39936
        %v703 = vsel %vm701, %v685, 0
        %v706 = vsel %vm701, %v686, 0
        %vm708 = vcmask 1044480
        %v710 = vsel %vm708, %v666, 0
        %712 = vmatpush.msra.mxu0 0.0
        %713 = vmatpush.msra.mxu0 0.0
        %714 = vmatpush.msra.mxu0 0.0
        %715 = vmatpush.msra.mxu0 0.0
        %716 = vmatpush.msra.mxu0 0.0
        %717 = vmatpush.msra.mxu0 0.0
        %718 = vmatpush.msra.mxu0 0.0
        %719 = vmatpush.msra.mxu0 0.0
        %720 = vmatpush.msra.mxu0 0.0
        %721 = vmatpush.msra.mxu0 0.0
        %722 = vmatpush.msra.mxu0 0.0
        %723 = vmatpush.msra.mxu0 0.0
        %724 = vmatpush.msra.mxu0 0.0
        %725 = vmatpush.msra.mxu0 0.0
        %726 = vmatpush.msra.mxu0 0.0
        %727 = vmatpush.msra.mxu0 %v710
        %728 = vmatmul.f32.gmra.mxu0 %v703
        %v729 = vpop.f32.mrf.mxu0
        %v730 = vadd.f32 %v667, %v729
        %731 = vmatmul.f32.gmra.mxu0 %v706
        %v732 = vpop.f32.mrf.mxu0
        %v733 = vadd.f32 %v668, %v732
        %734 = vdwg.mxu0
        %v736 = vrot.slane %v665, 1
        %738 = vxpose.xlu0.b32.start [1/16] %v736, 128
        %739 = vxpose.xlu0.b32.cont [2/16] 0.0, 128
        %740 = vxpose.xlu0.b32.cont [3/16] 0.0, 128
        %741 = vxpose.xlu0.b32.cont [4/16] 0.0, 128
        %742 = vxpose.xlu0.b32.cont [5/16] 0.0, 128
        %743 = vxpose.xlu0.b32.cont [6/16] 0.0, 128
        %744 = vxpose.xlu0.b32.cont [7/16] 0.0, 128
        %745 = vxpose.xlu0.b32.cont [8/16] 0.0, 128
        %746 = vxpose.xlu0.b32.cont [9/16] 0.0, 128
        %747 = vxpose.xlu0.b32.cont [10/16] 0.0, 128
        %748 = vxpose.xlu0.b32.cont [11/16] 0.0, 128
        %749 = vxpose.xlu0.b32.cont [12/16] 0.0, 128
        %750 = vxpose.xlu0.b32.cont [13/16] 0.0, 128
        %751 = vxpose.xlu0.b32.cont [14/16] 0.0, 128
        %752 = vxpose.xlu0.b32.cont [15/16] 0.0, 128
        %753 = vxpose.xlu0.b32.end [16/16] 0.0, 128
        %v754 = vpop.trf.xlu0
        %v755 = vpop.trf.xlu0
        %v756 = vpop.trf.xlu0
        %v757 = vpop.trf.xlu0
        %v758 = vpop.trf.xlu0
        %v759 = vpop.trf.xlu0
        %v760 = vpop.trf.xlu0
        %v761 = vpop.trf.xlu0
        %v762 = vpop.trf.xlu0
        %v763 = vpop.trf.xlu0
        %v764 = vpop.trf.xlu0
        %v765 = vpop.trf.xlu0
        %v766 = vpop.trf.xlu0
        %v767 = vpop.trf.xlu0
        %v768 = vpop.trf.xlu0
        %v769 = vpop.trf.xlu0
        %v771 = vsel %vm701, %v754, 0
        %v774 = vsel %vm701, %v755, 0
        %776 = vmatpush.msra.mxu0 0.0
        %777 = vmatpush.msra.mxu0 0.0
        %778 = vmatpush.msra.mxu0 0.0
        %779 = vmatpush.msra.mxu0 0.0
        %780 = vmatpush.msra.mxu0 0.0
        %781 = vmatpush.msra.mxu0 0.0
        %782 = vmatpush.msra.mxu0 0.0
        %783 = vmatpush.msra.mxu0 0.0
        %784 = vmatpush.msra.mxu0 0.0
        %785 = vmatpush.msra.mxu0 0.0
        %786 = vmatpush.msra.mxu0 0.0
        %787 = vmatpush.msra.mxu0 0.0
        %788 = vmatpush.msra.mxu0 0.0
        %789 = vmatpush.msra.mxu0 0.0
        %790 = vmatpush.msra.mxu0 0.0
        %791 = vmatpush.msra.mxu0 %v710
        %792 = vmatmul.f32.gmra.mxu0 %v771
        %v793 = vpop.f32.mrf.mxu0
        %v794 = vadd.f32 %v667, %v793
        %795 = vmatmul.f32.gmra.mxu0 %v774
        %v796 = vpop.f32.mrf.mxu0
        %v797 = vadd.f32 %v668, %v796
        %798 = vdwg.mxu0
        %v799 = vrot.slane %v665, 2
        %801 = vxpose.xlu0.b32.start [1/16] %v799, 128
        %802 = vxpose.xlu0.b32.cont [2/16] 0.0, 128
        %803 = vxpose.xlu0.b32.cont [3/16] 0.0, 128
        %804 = vxpose.xlu0.b32.cont [4/16] 0.0, 128
        %805 = vxpose.xlu0.b32.cont [5/16] 0.0, 128
        %806 = vxpose.xlu0.b32.cont [6/16] 0.0, 128
        %807 = vxpose.xlu0.b32.cont [7/16] 0.0, 128
        %808 = vxpose.xlu0.b32.cont [8/16] 0.0, 128
        %809 = vxpose.xlu0.b32.cont [9/16] 0.0, 128
        %810 = vxpose.xlu0.b32.cont [10/16] 0.0, 128
        %811 = vxpose.xlu0.b32.cont [11/16] 0.0, 128
        %812 = vxpose.xlu0.b32.cont [12/16] 0.0, 128
        %813 = vxpose.xlu0.b32.cont [13/16] 0.0, 128
        %814 = vxpose.xlu0.b32.cont [14/16] 0.0, 128
        %815 = vxpose.xlu0.b32.cont [15/16] 0.0, 128
        %816 = vxpose.xlu0.b32.end [16/16] 0.0, 128
        %v817 = vpop.trf.xlu0
        %v818 = vpop.trf.xlu0
        %v819 = vpop.trf.xlu0
        %v820 = vpop.trf.xlu0
        %v821 = vpop.trf.xlu0
        %v822 = vpop.trf.xlu0
        %v823 = vpop.trf.xlu0
        %v824 = vpop.trf.xlu0
        %v825 = vpop.trf.xlu0
        %v826 = vpop.trf.xlu0
        %v827 = vpop.trf.xlu0
        %v828 = vpop.trf.xlu0
        %v829 = vpop.trf.xlu0
        %v830 = vpop.trf.xlu0
        %v831 = vpop.trf.xlu0
        %v832 = vpop.trf.xlu0
        %v834 = vsel %vm701, %v817, 0
        %v837 = vsel %vm701, %v818, 0
        %839 = vmatpush.msra.mxu0 0.0
        %840 = vmatpush.msra.mxu0 0.0
        %841 = vmatpush.msra.mxu0 0.0
        %842 = vmatpush.msra.mxu0 0.0
        %843 = vmatpush.msra.mxu0 0.0
        %844 = vmatpush.msra.mxu0 0.0
        %845 = vmatpush.msra.mxu0 0.0
        %846 = vmatpush.msra.mxu0 0.0
        %847 = vmatpush.msra.mxu0 0.0
        %848 = vmatpush.msra.mxu0 0.0
        %849 = vmatpush.msra.mxu0 0.0
        %850 = vmatpush.msra.mxu0 0.0
        %851 = vmatpush.msra.mxu0 0.0
        %852 = vmatpush.msra.mxu0 0.0
        %853 = vmatpush.msra.mxu0 0.0
        %854 = vmatpush.msra.mxu0 %v710
        %855 = vmatmul.f32.gmra.mxu0 %v834
        %v856 = vpop.f32.mrf.mxu0
        %v857 = vadd.f32 %v667, %v856
        %858 = vmatmul.f32.gmra.mxu0 %v837
        %v859 = vpop.f32.mrf.mxu0
        %v860 = vadd.f32 %v668, %v859
        %861 = vdwg.mxu0
        %v862 = vrot.slane %v665, 3
        %864 = vxpose.xlu0.b32.start [1/16] %v862, 128
        %865 = vxpose.xlu0.b32.cont [2/16] 0.0, 128
        %866 = vxpose.xlu0.b32.cont [3/16] 0.0, 128
        %867 = vxpose.xlu0.b32.cont [4/16] 0.0, 128
        %868 = vxpose.xlu0.b32.cont [5/16] 0.0, 128
        %869 = vxpose.xlu0.b32.cont [6/16] 0.0, 128
        %870 = vxpose.xlu0.b32.cont [7/16] 0.0, 128
        %871 = vxpose.xlu0.b32.cont [8/16] 0.0, 128
        %872 = vxpose.xlu0.b32.cont [9/16] 0.0, 128
        %873 = vxpose.xlu0.b32.cont [10/16] 0.0, 128
        %874 = vxpose.xlu0.b32.cont [11/16] 0.0, 128
        %875 = vxpose.xlu0.b32.cont [12/16] 0.0, 128
        %876 = vxpose.xlu0.b32.cont [13/16] 0.0, 128
        %877 = vxpose.xlu0.b32.cont [14/16] 0.0, 128
        %878 = vxpose.xlu0.b32.cont [15/16] 0.0, 128
        %879 = vxpose.xlu0.b32.end [16/16] 0.0, 128
        %v880 = vpop.trf.xlu0
        %v881 = vpop.trf.xlu0
        %v882 = vpop.trf.xlu0
        %v883 = vpop.trf.xlu0
        %v884 = vpop.trf.xlu0
        %v885 = vpop.trf.xlu0
        %v886 = vpop.trf.xlu0
        %v887 = vpop.trf.xlu0
        %v888 = vpop.trf.xlu0
        %v889 = vpop.trf.xlu0
        %v890 = vpop.trf.xlu0
        %v891 = vpop.trf.xlu0
        %v892 = vpop.trf.xlu0
        %v893 = vpop.trf.xlu0
        %v894 = vpop.trf.xlu0
        %v895 = vpop.trf.xlu0
        %v897 = vsel %vm701, %v880, 0
        %v900 = vsel %vm701, %v881, 0
        %902 = vmatpush.msra.mxu0 0.0
        %903 = vmatpush.msra.mxu0 0.0
        %904 = vmatpush.msra.mxu0 0.0
        %905 = vmatpush.msra.mxu0 0.0
        %906 = vmatpush.msra.mxu0 0.0
        %907 = vmatpush.msra.mxu0 0.0
        %908 = vmatpush.msra.mxu0 0.0
        %909 = vmatpush.msra.mxu0 0.0
        %910 = vmatpush.msra.mxu0 0.0
        %911 = vmatpush.msra.mxu0 0.0
        %912 = vmatpush.msra.mxu0 0.0
        %913 = vmatpush.msra.mxu0 0.0
        %914 = vmatpush.msra.mxu0 0.0
        %915 = vmatpush.msra.mxu0 0.0
        %916 = vmatpush.msra.mxu0 0.0
        %917 = vmatpush.msra.mxu0 %v710
        %918 = vmatmul.f32.gmra.mxu0 %v897
        %v919 = vpop.f32.mrf.mxu0
        %v920 = vadd.f32 %v667, %v919
        %921 = vmatmul.f32.gmra.mxu0 %v900
        %v922 = vpop.f32.mrf.mxu0
        %v923 = vadd.f32 %v668, %v922
        %924 = vdwg.mxu0
        %v925 = vld [vmem:[#allocation11] sm:$0x1]
        %v926 = vld [vmem:[%s16] sm:$0x1]
        %v927 = vpack.c.bf16 %v733, %v730
        %v928 = vpack.c.bf16 %v797, %v794
        %v929 = vpack.c.bf16 %v860, %v857
        %v930 = vpack.c.bf16 %v923, %v920
        %v931 = vld [vmem:[%s3] sm:$0xf]
        %v932 = vld [vmem:[%s3 + $0x4] sm:$0xf]
        %v933 = vld [vmem:[%s3 + $0x8] sm:$0xf]
        %v934 = vld [vmem:[%s3 + $0xc] sm:$0xf]
        %v935 = vld [vmem:[%s4] sm:$0x1]
        %v937 = vperm.slane %v935, 0
        %v943 = vunpack.c.l.b16 %v931
        %v944 = vunpack.c.l.b16 %v932
        %v945 = vunpack.c.l.b16 %v933
        %v946 = vunpack.c.l.b16 %v934
        %v947 = vpack.c.b16 %v944, %v943
        %v948 = vpack.c.b16 %v946, %v945
        %vm951 = vcmask 261120
        %v953 = vsel %vm951, %v927, 0
        %v956 = vsel %vm951, %v928, 0
        %v959 = vsel %vm951, %v929, 0
        %v962 = vsel %vm951, %v930, 0
        %964 = vmatpush.bf16.msra.mxu0 0
        %965 = vmatpush.bf16.msra.mxu0 0
        %966 = vmatpush.bf16.msra.mxu0 0
        %967 = vmatpush.bf16.msra.mxu0 0
        %968 = vmatpush.bf16.msra.mxu0 0
        %969 = vmatpush.bf16.msra.mxu0 0
        %970 = vmatpush.bf16.msra.mxu0 %v948
        %971 = vmatpush.bf16.msra.mxu0 %v947
        %972 = vmatmul.bf16.gmra.mxu0 %v953
        %v973 = vpop.f32.mrf.mxu0
        %v974 = vadd.f32 %v937, %v973
        %v975 = vpop.f32.mrf.mxu0
        %v976 = vadd.f32 %v937, %v975
        %977 = vmatmul.bf16.gmra.mxu0 %v956
        %v978 = vpop.f32.mrf.mxu0
        %v979 = vadd.f32 %v937, %v978
        %v980 = vpop.f32.mrf.mxu0
        %v981 = vadd.f32 %v937, %v980
        %982 = vmatmul.bf16.gmra.mxu0 %v959
        %v983 = vpop.f32.mrf.mxu0
        %v984 = vadd.f32 %v937, %v983
        %v985 = vpop.f32.mrf.mxu0
        %v986 = vadd.f32 %v937, %v985
        %987 = vmatmul.bf16.gmra.mxu0 %v962
        %v988 = vpop.f32.mrf.mxu0
        %v989 = vadd.f32 %v937, %v988
        %v990 = vpop.f32.mrf.mxu0
        %v991 = vadd.f32 %v937, %v990
        %992 = vdwg.mxu0
        %v993 = vld [vmem:[%s5] sm:$0xf]
        %v994 = vld [vmem:[%s5 + $0x4] sm:$0xf]
        %v995 = vld [vmem:[%s5 + $0x8] sm:$0xf]
        %v996 = vld [vmem:[%s5 + $0xc] sm:$0xf]
        %v997 = vld [vmem:[%s6] sm:$0x1]
        %v999 = vperm.slane %v997, 0
        %v1005 = vunpack.c.l.b16 %v993
        %v1006 = vunpack.c.l.b16 %v994
        %v1007 = vunpack.c.l.b16 %v995
        %v1008 = vunpack.c.l.b16 %v996
        %v1009 = vpack.c.b16 %v1006, %v1005
        %v1010 = vpack.c.b16 %v1008, %v1007
        %1013 = vmatpush.bf16.msra.mxu0 0
        %1014 = vmatpush.bf16.msra.mxu0 0
        %1015 = vmatpush.bf16.msra.mxu0 0
        %1016 = vmatpush.bf16.msra.mxu0 0
        %1017 = vmatpush.bf16.msra.mxu0 0
        %1018 = vmatpush.bf16.msra.mxu0 0
        %1019 = vmatpush.bf16.msra.mxu0 %v1010
        %1020 = vmatpush.bf16.msra.mxu0 %v1009
        %1021 = vmatmul.bf16.gmra.mxu0 %v953
        %v1022 = vpop.f32.mrf.mxu0
        %v1023 = vadd.f32 %v999, %v1022
        %v1024 = vpop.f32.mrf.mxu0
        %v1025 = vadd.f32 %v999, %v1024
        %1026 = vmatmul.bf16.gmra.mxu0 %v956
        %v1027 = vpop.f32.mrf.mxu0
        %v1028 = vadd.f32 %v999, %v1027
        %v1029 = vpop.f32.mrf.mxu0
        %v1030 = vadd.f32 %v999, %v1029
        %1031 = vmatmul.bf16.gmra.mxu0 %v959
        %v1032 = vpop.f32.mrf.mxu0
        %v1033 = vadd.f32 %v999, %v1032
        %v1034 = vpop.f32.mrf.mxu0
        %v1035 = vadd.f32 %v999, %v1034
        %1036 = vmatmul.bf16.gmra.mxu0 %v962
        %v1037 = vpop.f32.mrf.mxu0
        %v1038 = vadd.f32 %v999, %v1037
        %v1039 = vpop.f32.mrf.mxu0
        %v1040 = vadd.f32 %v999, %v1039
        %1041 = vdwg.mxu0
        %v1042 = vld [vmem:[%s7] sm:$0xf]
        %v1043 = vld [vmem:[%s7 + $0x4] sm:$0xf]
        %v1044 = vld [vmem:[%s7 + $0x8] sm:$0xf]
        %v1045 = vld [vmem:[%s7 + $0xc] sm:$0xf]
        %v1046 = vld [vmem:[%s8] sm:$0x1]
        %v1048 = vperm.slane %v1046, 0
        %v1054 = vunpack.c.l.b16 %v1042
        %v1055 = vunpack.c.l.b16 %v1043
        %v1056 = vunpack.c.l.b16 %v1044
        %v1057 = vunpack.c.l.b16 %v1045
        %v1058 = vpack.c.b16 %v1055, %v1054
        %v1059 = vpack.c.b16 %v1057, %v1056
        %1062 = vmatpush.bf16.msra.mxu0 0
        %1063 = vmatpush.bf16.msra.mxu0 0
        %1064 = vmatpush.bf16.msra.mxu0 0
        %1065 = vmatpush.bf16.msra.mxu0 0
        %1066 = vmatpush.bf16.msra.mxu0 0
        %1067 = vmatpush.bf16.msra.mxu0 0
        %1068 = vmatpush.bf16.msra.mxu0 %v1059
        %1069 = vmatpush.bf16.msra.mxu0 %v1058
        %1070 = vmatmul.bf16.gmra.mxu0 %v953
        %v1071 = vpop.f32.mrf.mxu0
        %v1072 = vadd.f32 %v1048, %v1071
        %v1073 = vpop.f32.mrf.mxu0
        %v1074 = vadd.f32 %v1048, %v1073
        %1075 = vmatmul.bf16.gmra.mxu0 %v956
        %v1076 = vpop.f32.mrf.mxu0
        %v1077 = vadd.f32 %v1048, %v1076
        %v1078 = vpop.f32.mrf.mxu0
        %v1079 = vadd.f32 %v1048, %v1078
        %1080 = vmatmul.bf16.gmra.mxu0 %v959
        %v1081 = vpop.f32.mrf.mxu0
        %v1082 = vadd.f32 %v1048, %v1081
        %v1083 = vpop.f32.mrf.mxu0
        %v1084 = vadd.f32 %v1048, %v1083
        %1085 = vmatmul.bf16.gmra.mxu0 %v962
        %v1086 = vpop.f32.mrf.mxu0
        %v1087 = vadd.f32 %v1048, %v1086
        %v1088 = vpop.f32.mrf.mxu0
        %v1089 = vadd.f32 %v1048, %v1088
        %1090 = vdwg.mxu0
        %v1091 = vld [vmem:[#allocation8] sm:$0xf]
        %v1092 = vld [vmem:[#allocation8 + $0x4] sm:$0xf]
        %v1093 = vld [vmem:[#allocation8 + $0x8] sm:$0xf]
        %v1094 = vld [vmem:[#allocation8 + $0xc] sm:$0xf]
        %v1095 = vpack.c.bf16 %v974, %v974
        %v1096 = vpack.c.bf16 %v976, %v976
        %v1097 = vpack.c.bf16 %v979, %v979
        %v1098 = vpack.c.bf16 %v981, %v981
        %v1099 = vpack.c.bf16 %v984, %v984
        %v1100 = vpack.c.bf16 %v986, %v986
        %v1101 = vpack.c.bf16 %v989, %v989
        %v1102 = vpack.c.bf16 %v991, %v991
        %v1103 = vpack.c.bf16 %v1023, %v1023
        %v1104 = vpack.c.bf16 %v1025, %v1025
        %v1105 = vpack.c.bf16 %v1028, %v1028
        %v1106 = vpack.c.bf16 %v1030, %v1030
        %v1107 = vpack.c.bf16 %v1033, %v1033
        %v1108 = vpack.c.bf16 %v1035, %v1035
        %v1109 = vpack.c.bf16 %v1038, %v1038
        %v1110 = vpack.c.bf16 %v1040, %v1040
        %v1111 = vpack.c.bf16 %v1072, %v1072
        %v1112 = vpack.c.bf16 %v1074, %v1074
        %v1113 = vpack.c.bf16 %v1077, %v1077
        %v1114 = vpack.c.bf16 %v1079, %v1079
        %v1115 = vpack.c.bf16 %v1082, %v1082
        %v1116 = vpack.c.bf16 %v1084, %v1084
        %v1117 = vpack.c.bf16 %v1087, %v1087
        %v1118 = vpack.c.bf16 %v1089, %v1089
        %v1121 = vunpack.c.l.b16 %v1095
        %v1122 = vunpack.c.l.b16 %v1096
        %v1123 = vpack.c.b16 %v1122, %v1121
        %v1126 = vunpack.c.l.b16 %v1103
        %v1127 = vunpack.c.l.b16 %v1104
        %v1128 = vpack.c.b16 %v1127, %v1126
        %vm1129 = vcmask 64512
        %v1131 = vsel %vm1129, %v1123, 0
        %v1134 = vsel %vm1129, %v1128, 0
        %1136 = vmatpush.bf16.xpose.msra.mxu0 0
        %1137 = vmatpush.bf16.xpose.msra.mxu0 0
        %1138 = vmatpush.bf16.xpose.msra.mxu0 0
        %1139 = vmatpush.bf16.xpose.msra.mxu0 0
        %1140 = vmatpush.bf16.xpose.msra.mxu0 0
        %1141 = vmatpush.bf16.xpose.msra.mxu0 0
        %1142 = vmatpush.bf16.xpose.msra.mxu0 0
        %1143 = vmatpush.bf16.xpose.msra.mxu0 %v1134
        %1144 = vmatmul.bf16.gmra.mxu0 %v1131
        %v1145 = vpop.f32.mrf.mxu0
        %v1146 = vadd.f32 0.0, %v1145
        %v1147 = vpop.f32.mrf.mxu0
        %v1148 = vadd.f32 0.0, %v1147
        %1149 = vdwg.mxu0
        %v1152 = vunpack.c.l.b16 %v1097
        %v1153 = vunpack.c.l.b16 %v1098
        %v1154 = vpack.c.b16 %v1153, %v1152
        %v1157 = vunpack.c.l.b16 %v1105
        %v1158 = vunpack.c.l.b16 %v1106
        %v1159 = vpack.c.b16 %v1158, %v1157
        %v1161 = vsel %vm1129, %v1154, 0
        %v1164 = vsel %vm1129, %v1159, 0
        %1166 = vmatpush.bf16.xpose.msra.mxu0 0
        %1167 = vmatpush.bf16.xpose.msra.mxu0 0
        %1168 = vmatpush.bf16.xpose.msra.mxu0 0
        %1169 = vmatpush.bf16.xpose.msra.mxu0 0
        %1170 = vmatpush.bf16.xpose.msra.mxu0 0
        %1171 = vmatpush.bf16.xpose.msra.mxu0 0
        %1172 = vmatpush.bf16.xpose.msra.mxu0 0
        %1173 = vmatpush.bf16.xpose.msra.mxu0 %v1164
        %1174 = vmatmul.bf16.gmra.mxu0 %v1161
        %v1175 = vpop.f32.mrf.mxu0
        %v1176 = vadd.f32 0.0, %v1175
        %v1177 = vpop.f32.mrf.mxu0
        %v1178 = vadd.f32 0.0, %v1177
        %1179 = vdwg.mxu0
        %v1182 = vunpack.c.l.b16 %v1099
        %v1183 = vunpack.c.l.b16 %v1100
        %v1184 = vpack.c.b16 %v1183, %v1182
        %v1187 = vunpack.c.l.b16 %v1107
        %v1188 = vunpack.c.l.b16 %v1108
        %v1189 = vpack.c.b16 %v1188, %v1187
        %v1191 = vsel %vm1129, %v1184, 0
        %v1194 = vsel %vm1129, %v1189, 0
        %1196 = vmatpush.bf16.xpose.msra.mxu0 0
        %1197 = vmatpush.bf16.xpose.msra.mxu0 0
        %1198 = vmatpush.bf16.xpose.msra.mxu0 0
        %1199 = vmatpush.bf16.xpose.msra.mxu0 0
        %1200 = vmatpush.bf16.xpose.msra.mxu0 0
        %1201 = vmatpush.bf16.xpose.msra.mxu0 0
        %1202 = vmatpush.bf16.xpose.msra.mxu0 0
        %1203 = vmatpush.bf16.xpose.msra.mxu0 %v1194
        %1204 = vmatmul.bf16.gmra.mxu0 %v1191
        %v1205 = vpop.f32.mrf.mxu0
        %v1206 = vadd.f32 0.0, %v1205
        %v1207 = vpop.f32.mrf.mxu0
        %v1208 = vadd.f32 0.0, %v1207
        %1209 = vdwg.mxu0
        %v1212 = vunpack.c.l.b16 %v1101
        %v1213 = vunpack.c.l.b16 %v1102
        %v1214 = vpack.c.b16 %v1213, %v1212
        %v1217 = vunpack.c.l.b16 %v1109
        %v1218 = vunpack.c.l.b16 %v1110
        %v1219 = vpack.c.b16 %v1218, %v1217
        %v1221 = vsel %vm1129, %v1214, 0
        %v1224 = vsel %vm1129, %v1219, 0
        %1226 = vmatpush.bf16.xpose.msra.mxu0 0
        %1227 = vmatpush.bf16.xpose.msra.mxu0 0
        %1228 = vmatpush.bf16.xpose.msra.mxu0 0
        %1229 = vmatpush.bf16.xpose.msra.mxu0 0
        %1230 = vmatpush.bf16.xpose.msra.mxu0 0
        %1231 = vmatpush.bf16.xpose.msra.mxu0 0
        %1232 = vmatpush.bf16.xpose.msra.mxu0 0
        %1233 = vmatpush.bf16.xpose.msra.mxu0 %v1224
        %1234 = vmatmul.bf16.gmra.mxu0 %v1221
        %v1235 = vpop.f32.mrf.mxu0
        %v1236 = vadd.f32 0.0, %v1235
        %v1237 = vpop.f32.mrf.mxu0
        %v1238 = vadd.f32 0.0, %v1237
        %1239 = vdwg.mxu0
        %v1240 = vmul.f32 %v1146, 0.35355338
        %v1241 = vmul.f32 %v1148, 0.35355338
        %v1242 = vmul.f32 %v1176, 0.35355338
        %v1243 = vmul.f32 %v1178, 0.35355338
        %v1244 = vmul.f32 %v1206, 0.35355338
        %v1245 = vmul.f32 %v1208, 0.35355338
        %v1246 = vmul.f32 %v1236, 0.35355338
        %v1247 = vmul.f32 %v1238, 0.35355338
        %vm1248 = vcmask 130048
        %v1249 = vsel %vm1248, %v1240, -inf
        %1250 = vmax.xlane.f32.xlu0 %v1249
        %v1251 = vpop.xlane.xlu0 %1250
        %v1252 = vsel %vm1248, %v1241, -inf
        %1253 = vmax.xlane.f32.xlu0 %v1252
        %v1254 = vpop.xlane.xlu0 %1253
        %v1255 = vsel %vm1248, %v1242, -inf
        %1256 = vmax.xlane.f32.xlu0 %v1255
        %v1257 = vpop.xlane.xlu0 %1256
        %v1258 = vsel %vm1248, %v1243, -inf
        %1259 = vmax.xlane.f32.xlu0 %v1258
        %v1260 = vpop.xlane.xlu0 %1259
        %v1261 = vsel %vm1248, %v1244, -inf
        %1262 = vmax.xlane.f32.xlu0 %v1261
        %v1263 = vpop.xlane.xlu0 %1262
        %v1264 = vsel %vm1248, %v1245, -inf
        %1265 = vmax.xlane.f32.xlu0 %v1264
        %v1266 = vpop.xlane.xlu0 %1265
        %v1267 = vsel %vm1248, %v1246, -inf
        %1268 = vmax.xlane.f32.xlu0 %v1267
        %v1269 = vpop.xlane.xlu0 %1268
        %v1270 = vsel %vm1248, %v1247, -inf
        %1271 = vmax.xlane.f32.xlu0 %v1270
        %v1272 = vpop.xlane.xlu0 %1271
        %v1273 = vsub.f32 %v1240, %v1251
        %v1274 = vsub.f32 %v1241, %v1254
        %v1275 = vsub.f32 %v1242, %v1257
        %v1276 = vsub.f32 %v1243, %v1260
        %v1277 = vsub.f32 %v1244, %v1263
        %v1278 = vsub.f32 %v1245, %v1266
        %v1279 = vsub.f32 %v1246, %v1269
        %v1280 = vsub.f32 %v1247, %v1272
        %v1281 = vmul.f32 %v1273, 1.442695
        %v1282 = vpow.pop %v1281
        %v1283 = vmul.f32 %v1274, 1.442695
        %v1284 = vpow.pop %v1283
        %v1285 = vmul.f32 %v1275, 1.442695
        %v1286 = vpow.pop %v1285
        %v1287 = vmul.f32 %v1276, 1.442695
        %v1288 = vpow.pop %v1287
        %v1289 = vmul.f32 %v1277, 1.442695
        %v1290 = vpow.pop %v1289
        %v1291 = vmul.f32 %v1278, 1.442695
        %v1292 = vpow.pop %v1291
        %v1293 = vmul.f32 %v1279, 1.442695
        %v1294 = vpow.pop %v1293
        %v1295 = vmul.f32 %v1280, 1.442695
        %v1296 = vpow.pop %v1295
        %v1297 = vsel %vm1248, %v1282, 0.0
        %1298 = vadd.xlane.f32.xlu0 %v1297
        %v1299 = vpop.xlane.xlu0 %1298
        %v1300 = vsel %vm1248, %v1284, 0.0
        %1301 = vadd.xlane.f32.xlu0 %v1300
        %v1302 = vpop.xlane.xlu0 %1301
        %v1303 = vsel %vm1248, %v1286, 0.0
        %1304 = vadd.xlane.f32.xlu0 %v1303
        %v1305 = vpop.xlane.xlu0 %1304
        %v1306 = vsel %vm1248, %v1288, 0.0
        %1307 = vadd.xlane.f32.xlu0 %v1306
        %v1308 = vpop.xlane.xlu0 %1307
        %v1309 = vsel %vm1248, %v1290, 0.0
        %1310 = vadd.xlane.f32.xlu0 %v1309
        %v1311 = vpop.xlane.xlu0 %1310
        %v1312 = vsel %vm1248, %v1292, 0.0
        %1313 = vadd.xlane.f32.xlu0 %v1312
        %v1314 = vpop.xlane.xlu0 %1313
        %v1315 = vsel %vm1248, %v1294, 0.0
        %1316 = vadd.xlane.f32.xlu0 %v1315
        %v1317 = vpop.xlane.xlu0 %1316
        %v1318 = vsel %vm1248, %v1296, 0.0
        %1319 = vadd.xlane.f32.xlu0 %v1318
        %v1320 = vpop.xlane.xlu0 %1319
        %v1321 = vrcp.pop %v1299
        %v1322 = vrcp.pop %v1302
        %v1323 = vrcp.pop %v1305
        %v1324 = vrcp.pop %v1308
        %v1325 = vrcp.pop %v1311
        %v1326 = vrcp.pop %v1314
        %v1327 = vrcp.pop %v1317
        %v1328 = vrcp.pop %v1320
        %v1329 = vmul.f32 %v1282, %v1321
        %v1330 = vmul.f32 %v1284, %v1322
        %v1331 = vmul.f32 %v1286, %v1323
        %v1332 = vmul.f32 %v1288, %v1324
        %v1333 = vmul.f32 %v1290, %v1325
        %v1334 = vmul.f32 %v1292, %v1326
        %v1335 = vmul.f32 %v1294, %v1327
        %v1336 = vmul.f32 %v1296, %v1328
        %v1337 = vpack.c.bf16 %v1329, %v1329
        %v1338 = vpack.c.bf16 %v1330, %v1330
        %v1339 = vpack.c.bf16 %v1331, %v1331
        %v1340 = vpack.c.bf16 %v1332, %v1332
        %v1341 = vpack.c.bf16 %v1333, %v1333
        %v1342 = vpack.c.bf16 %v1334, %v1334
        %v1343 = vpack.c.bf16 %v1335, %v1335
        %v1344 = vpack.c.bf16 %v1336, %v1336
        %v1347 = vunpack.c.l.b16 %v1337
        %v1348 = vunpack.c.l.b16 %v1338
        %v1349 = vpack.c.b16 %v1348, %v1347
        %v1352 = vunpack.c.l.b16 %v1111
        %v1353 = vunpack.c.l.b16 %v1112
        %v1354 = vpack.c.b16 %v1353, %v1352
        %v1357 = vsel %vm1248, %v1349, 0
        %1359 = vmatpush.bf16.msra.mxu0 0
        %1360 = vmatpush.bf16.msra.mxu0 0
        %1361 = vmatpush.bf16.msra.mxu0 0
        %1362 = vmatpush.bf16.msra.mxu0 0
        %1363 = vmatpush.bf16.msra.mxu0 0
        %1364 = vmatpush.bf16.msra.mxu0 0
        %1365 = vmatpush.bf16.msra.mxu0 0
        %1366 = vmatpush.bf16.msra.mxu0 %v1354
        %1367 = vmatmul.bf16.gmra.mxu0 %v1357
        %v1368 = vpop.f32.mrf.mxu0
        %v1369 = vadd.f32 0.0, %v1368
        %v1370 = vpop.f32.mrf.mxu0
        %v1371 = vadd.f32 0.0, %v1370
        %1372 = vdwg.mxu0
        %v1375 = vunpack.c.l.b16 %v1339
        %v1376 = vunpack.c.l.b16 %v1340
        %v1377 = vpack.c.b16 %v1376, %v1375
        %v1380 = vunpack.c.l.b16 %v1113
        %v1381 = vunpack.c.l.b16 %v1114
        %v1382 = vpack.c.b16 %v1381, %v1380
        %v1385 = vsel %vm1248, %v1377, 0
        %1387 = vmatpush.bf16.msra.mxu0 0
        %1388 = vmatpush.bf16.msra.mxu0 0
        %1389 = vmatpush.bf16.msra.mxu0 0
        %1390 = vmatpush.bf16.msra.mxu0 0
        %1391 = vmatpush.bf16.msra.mxu0 0
        %1392 = vmatpush.bf16.msra.mxu0 0
        %1393 = vmatpush.bf16.msra.mxu0 0
        %1394 = vmatpush.bf16.msra.mxu0 %v1382
        %1395 = vmatmul.bf16.gmra.mxu0 %v1385
        %v1396 = vpop.f32.mrf.mxu0
        %v1397 = vadd.f32 0.0, %v1396
        %v1398 = vpop.f32.mrf.mxu0
        %v1399 = vadd.f32 0.0, %v1398
        %1400 = vdwg.mxu0
        %v1403 = vunpack.c.l.b16 %v1341
        %v1404 = vunpack.c.l.b16 %v1342
        %v1405 = vpack.c.b16 %v1404, %v1403
        %v1408 = vunpack.c.l.b16 %v1115
        %v1409 = vunpack.c.l.b16 %v1116
        %v1410 = vpack.c.b16 %v1409, %v1408
        %v1413 = vsel %vm1248, %v1405, 0
        %1415 = vmatpush.bf16.msra.mxu0 0
        %1416 = vmatpush.bf16.msra.mxu0 0
        %1417 = vmatpush.bf16.msra.mxu0 0
        %1418 = vmatpush.bf16.msra.mxu0 0
        %1419 = vmatpush.bf16.msra.mxu0 0
        %1420 = vmatpush.bf16.msra.mxu0 0
        %1421 = vmatpush.bf16.msra.mxu0 0
        %1422 = vmatpush.bf16.msra.mxu0 %v1410
        %1423 = vmatmul.bf16.gmra.mxu0 %v1413
        %v1424 = vpop.f32.mrf.mxu0
        %v1425 = vadd.f32 0.0, %v1424
        %v1426 = vpop.f32.mrf.mxu0
        %v1427 = vadd.f32 0.0, %v1426
        %1428 = vdwg.mxu0
        %v1431 = vunpack.c.l.b16 %v1343
        %v1432 = vunpack.c.l.b16 %v1344
        %v1433 = vpack.c.b16 %v1432, %v1431
        %v1436 = vunpack.c.l.b16 %v1117
        %v1437 = vunpack.c.l.b16 %v1118
        %v1438 = vpack.c.b16 %v1437, %v1436
        %v1441 = vsel %vm1248, %v1433, 0
        %1443 = vmatpush.bf16.msra.mxu0 0
        %1444 = vmatpush.bf16.msra.mxu0 0
        %1445 = vmatpush.bf16.msra.mxu0 0
        %1446 = vmatpush.bf16.msra.mxu0 0
        %1447 = vmatpush.bf16.msra.mxu0 0
        %1448 = vmatpush.bf16.msra.mxu0 0
        %1449 = vmatpush.bf16.msra.mxu0 0
        %1450 = vmatpush.bf16.msra.mxu0 %v1438
        %1451 = vmatmul.bf16.gmra.mxu0 %v1441
        %v1452 = vpop.f32.mrf.mxu0
        %v1453 = vadd.f32 0.0, %v1452
        %v1454 = vpop.f32.mrf.mxu0
        %v1455 = vadd.f32 0.0, %v1454
        %1456 = vdwg.mxu0
        %v1457 = vpack.c.bf16 %v1371, %v1369
        %v1458 = vpack.c.bf16 %v1399, %v1397
        %v1459 = vpack.c.bf16 %v1427, %v1425
        %v1460 = vpack.c.bf16 %v1455, %v1453
        %1461 = vrot.lane.b32.xlu0 %v1123, 120
        %v1462 = vpop.permute.xlu0 %1461
        %1463 = vrot.lane.b32.xlu0 %v1128, 120
        %v1464 = vpop.permute.xlu0 %1463
        %v1466 = vsel %vm1129, %v1462, 0
        %v1469 = vsel %vm1129, %v1464, 0
        %1471 = vmatpush.bf16.xpose.msra.mxu0 0
        %1472 = vmatpush.bf16.xpose.msra.mxu0 0
        %1473 = vmatpush.bf16.xpose.msra.mxu0 0
        %1474 = vmatpush.bf16.xpose.msra.mxu0 0
        %1475 = vmatpush.bf16.xpose.msra.mxu0 0
        %1476 = vmatpush.bf16.xpose.msra.mxu0 0
        %1477 = vmatpush.bf16.xpose.msra.mxu0 0
        %1478 = vmatpush.bf16.xpose.msra.mxu0 %v1469
        %1479 = vmatmul.bf16.gmra.mxu0 %v1466
        %v1480 = vpop.f32.mrf.mxu0
        %v1481 = vadd.f32 0.0, %v1480
        %v1482 = vpop.f32.mrf.mxu0
        %v1483 = vadd.f32 0.0, %v1482
        %1484 = vdwg.mxu0
        %1485 = vrot.lane.b32.xlu0 %v1154, 120
        %v1486 = vpop.permute.xlu0 %1485
        %1487 = vrot.lane.b32.xlu0 %v1159, 120
        %v1488 = vpop.permute.xlu0 %1487
        %v1490 = vsel %vm1129, %v1486, 0
        %v1493 = vsel %vm1129, %v1488, 0
        %1495 = vmatpush.bf16.xpose.msra.mxu0 0
        %1496 = vmatpush.bf16.xpose.msra.mxu0 0
        %1497 = vmatpush.bf16.xpose.msra.mxu0 0
        %1498 = vmatpush.bf16.xpose.msra.mxu0 0
        %1499 = vmatpush.bf16.xpose.msra.mxu0 0
        %1500 = vmatpush.bf16.xpose.msra.mxu0 0
        %1501 = vmatpush.bf16.xpose.msra.mxu0 0
        %1502 = vmatpush.bf16.xpose.msra.mxu0 %v1493
        %1503 = vmatmul.bf16.gmra.mxu0 %v1490
        %v1504 = vpop.f32.mrf.mxu0
        %v1505 = vadd.f32 0.0, %v1504
        %v1506 = vpop.f32.mrf.mxu0
        %v1507 = vadd.f32 0.0, %v1506
        %1508 = vdwg.mxu0
        %1509 = vrot.lane.b32.xlu0 %v1184, 120
        %v1510 = vpop.permute.xlu0 %1509
        %1511 = vrot.lane.b32.xlu0 %v1189, 120
        %v1512 = vpop.permute.xlu0 %1511
        %v1514 = vsel %vm1129, %v1510, 0
        %v1517 = vsel %vm1129, %v1512, 0
        %1519 = vmatpush.bf16.xpose.msra.mxu0 0
        %1520 = vmatpush.bf16.xpose.msra.mxu0 0
        %1521 = vmatpush.bf16.xpose.msra.mxu0 0
        %1522 = vmatpush.bf16.xpose.msra.mxu0 0
        %1523 = vmatpush.bf16.xpose.msra.mxu0 0
        %1524 = vmatpush.bf16.xpose.msra.mxu0 0
        %1525 = vmatpush.bf16.xpose.msra.mxu0 0
        %1526 = vmatpush.bf16.xpose.msra.mxu0 %v1517
        %1527 = vmatmul.bf16.gmra.mxu0 %v1514
        %v1528 = vpop.f32.mrf.mxu0
        %v1529 = vadd.f32 0.0, %v1528
        %v1530 = vpop.f32.mrf.mxu0
        %v1531 = vadd.f32 0.0, %v1530
        %1532 = vdwg.mxu0
        %1533 = vrot.lane.b32.xlu0 %v1214, 120
        %v1534 = vpop.permute.xlu0 %1533
        %1535 = vrot.lane.b32.xlu0 %v1219, 120
        %v1536 = vpop.permute.xlu0 %1535
        %v1538 = vsel %vm1129, %v1534, 0
        %v1541 = vsel %vm1129, %v1536, 0
        %1543 = vmatpush.bf16.xpose.msra.mxu0 0
        %1544 = vmatpush.bf16.xpose.msra.mxu0 0
        %1545 = vmatpush.bf16.xpose.msra.mxu0 0
        %1546 = vmatpush.bf16.xpose.msra.mxu0 0
        %1547 = vmatpush.bf16.xpose.msra.mxu0 0
        %1548 = vmatpush.bf16.xpose.msra.mxu0 0
        %1549 = vmatpush.bf16.xpose.msra.mxu0 0
        %1550 = vmatpush.bf16.xpose.msra.mxu0 %v1541
        %1551 = vmatmul.bf16.gmra.mxu0 %v1538
        %v1552 = vpop.f32.mrf.mxu0
        %v1553 = vadd.f32 0.0, %v1552
        %v1554 = vpop.f32.mrf.mxu0
        %v1555 = vadd.f32 0.0, %v1554
        %1556 = vdwg.mxu0
        %v1557 = vmul.f32 %v1481, 0.35355338
        %v1558 = vmul.f32 %v1483, 0.35355338
        %v1559 = vmul.f32 %v1505, 0.35355338
        %v1560 = vmul.f32 %v1507, 0.35355338
        %v1561 = vmul.f32 %v1529, 0.35355338
        %v1562 = vmul.f32 %v1531, 0.35355338
        %v1563 = vmul.f32 %v1553, 0.35355338
        %v1564 = vmul.f32 %v1555, 0.35355338
        %v1565 = vsel %vm1248, %v1557, -inf
        %1566 = vmax.xlane.f32.xlu0 %v1565
        %v1567 = vpop.xlane.xlu0 %1566
        %v1568 = vsel %vm1248, %v1558, -inf
        %1569 = vmax.xlane.f32.xlu0 %v1568
        %v1570 = vpop.xlane.xlu0 %1569
        %v1571 = vsel %vm1248, %v1559, -inf
        %1572 = vmax.xlane.f32.xlu0 %v1571
        %v1573 = vpop.xlane.xlu0 %1572
        %v1574 = vsel %vm1248, %v1560, -inf
        %1575 = vmax.xlane.f32.xlu0 %v1574
        %v1576 = vpop.xlane.xlu0 %1575
        %v1577 = vsel %vm1248, %v1561, -inf
        %1578 = vmax.xlane.f32.xlu0 %v1577
        %v1579 = vpop.xlane.xlu0 %1578
        %v1580 = vsel %vm1248, %v1562, -inf
        %1581 = vmax.xlane.f32.xlu0 %v1580
        %v1582 = vpop.xlane.xlu0 %1581
        %v1583 = vsel %vm1248, %v1563, -inf
        %1584 = vmax.xlane.f32.xlu0 %v1583
        %v1585 = vpop.xlane.xlu0 %1584
        %v1586 = vsel %vm1248, %v1564, -inf
        %1587 = vmax.xlane.f32.xlu0 %v1586
        %v1588 = vpop.xlane.xlu0 %1587
        %v1589 = vsub.f32 %v1557, %v1567
        %v1590 = vsub.f32 %v1558, %v1570
        %v1591 = vsub.f32 %v1559, %v1573
        %v1592 = vsub.f32 %v1560, %v1576
        %v1593 = vsub.f32 %v1561, %v1579
        %v1594 = vsub.f32 %v1562, %v1582
        %v1595 = vsub.f32 %v1563, %v1585
        %v1596 = vsub.f32 %v1564, %v1588
        %v1597 = vmul.f32 %v1589, 1.442695
        %v1598 = vpow.pop %v1597
        %v1599 = vmul.f32 %v1590, 1.442695
        %v1600 = vpow.pop %v1599
        %v1601 = vmul.f32 %v1591, 1.442695
        %v1602 = vpow.pop %v1601
        %v1603 = vmul.f32 %v1592, 1.442695
        %v1604 = vpow.pop %v1603
        %v1605 = vmul.f32 %v1593, 1.442695
        %v1606 = vpow.pop %v1605
        %v1607 = vmul.f32 %v1594, 1.442695
        %v1608 = vpow.pop %v1607
        %v1609 = vmul.f32 %v1595, 1.442695
        %v1610 = vpow.pop %v1609
        %v1611 = vmul.f32 %v1596, 1.442695
        %v1612 = vpow.pop %v1611
        %v1613 = vsel %vm1248, %v1598, 0.0
        %1614 = vadd.xlane.f32.xlu0 %v1613
        %v1615 = vpop.xlane.xlu0 %1614
        %v1616 = vsel %vm1248, %v1600, 0.0
        %1617 = vadd.xlane.f32.xlu0 %v1616
        %v1618 = vpop.xlane.xlu0 %1617
        %v1619 = vsel %vm1248, %v1602, 0.0
        %1620 = vadd.xlane.f32.xlu0 %v1619
        %v1621 = vpop.xlane.xlu0 %1620
        %v1622 = vsel %vm1248, %v1604, 0.0
        %1623 = vadd.xlane.f32.xlu0 %v1622
        %v1624 = vpop.xlane.xlu0 %1623
        %v1625 = vsel %vm1248, %v1606, 0.0
        %1626 = vadd.xlane.f32.xlu0 %v1625
        %v1627 = vpop.xlane.xlu0 %1626
        %v1628 = vsel %vm1248, %v1608, 0.0
        %1629 = vadd.xlane.f32.xlu0 %v1628
        %v1630 = vpop.xlane.xlu0 %1629
        %v1631 = vsel %vm1248, %v1610, 0.0
        %1632 = vadd.xlane.f32.xlu0 %v1631
        %v1633 = vpop.xlane.xlu0 %1632
        %v1634 = vsel %vm1248, %v1612, 0.0
        %1635 = vadd.xlane.f32.xlu0 %v1634
        %v1636 = vpop.xlane.xlu0 %1635
        %v1637 = vrcp.pop %v1615
        %v1638 = vrcp.pop %v1618
        %v1639 = vrcp.pop %v1621
        %v1640 = vrcp.pop %v1624
        %v1641 = vrcp.pop %v1627
        %v1642 = vrcp.pop %v1630
        %v1643 = vrcp.pop %v1633
        %v1644 = vrcp.pop %v1636
        %v1645 = vmul.f32 %v1598, %v1637
        %v1646 = vmul.f32 %v1600, %v1638
        %v1647 = vmul.f32 %v1602, %v1639
        %v1648 = vmul.f32 %v1604, %v1640
        %v1649 = vmul.f32 %v1606, %v1641
        %v1650 = vmul.f32 %v1608, %v1642
        %v1651 = vmul.f32 %v1610, %v1643
        %v1652 = vmul.f32 %v1612, %v1644
        %v1653 = vpack.c.bf16 %v1645, %v1645
        %v1654 = vpack.c.bf16 %v1646, %v1646
        %v1655 = vpack.c.bf16 %v1647, %v1647
        %v1656 = vpack.c.bf16 %v1648, %v1648
        %v1657 = vpack.c.bf16 %v1649, %v1649
        %v1658 = vpack.c.bf16 %v1650, %v1650
        %v1659 = vpack.c.bf16 %v1651, %v1651
        %v1660 = vpack.c.bf16 %v1652, %v1652
        %v1663 = vunpack.c.l.b16 %v1653
        %v1664 = vunpack.c.l.b16 %v1654
        %v1665 = vpack.c.b16 %v1664, %v1663
        %1666 = vrot.lane.b32.xlu0 %v1354, 120
        %v1667 = vpop.permute.xlu0 %1666
        %v1670 = vsel %vm1248, %v1665, 0
        %1672 = vmatpush.bf16.msra.mxu0 0
        %1673 = vmatpush.bf16.msra.mxu0 0
        %1674 = vmatpush.bf16.msra.mxu0 0
        %1675 = vmatpush.bf16.msra.mxu0 0
        %1676 = vmatpush.bf16.msra.mxu0 0
        %1677 = vmatpush.bf16.msra.mxu0 0
        %1678 = vmatpush.bf16.msra.mxu0 0
        %1679 = vmatpush.bf16.msra.mxu0 %v1667
        %1680 = vmatmul.bf16.gmra.mxu0 %v1670
        %v1681 = vpop.f32.mrf.mxu0
        %v1682 = vadd.f32 0.0, %v1681
        %v1683 = vpop.f32.mrf.mxu0
        %v1684 = vadd.f32 0.0, %v1683
        %1685 = vdwg.mxu0
        %v1688 = vunpack.c.l.b16 %v1655
        %v1689 = vunpack.c.l.b16 %v1656
        %v1690 = vpack.c.b16 %v1689, %v1688
        %1691 = vrot.lane.b32.xlu0 %v1382, 120
        %v1692 = vpop.permute.xlu0 %1691
        %v1695 = vsel %vm1248, %v1690, 0
        %1697 = vmatpush.bf16.msra.mxu0 0
        %1698 = vmatpush.bf16.msra.mxu0 0
        %1699 = vmatpush.bf16.msra.mxu0 0
        %1700 = vmatpush.bf16.msra.mxu0 0
        %1701 = vmatpush.bf16.msra.mxu0 0
        %1702 = vmatpush.bf16.msra.mxu0 0
        %1703 = vmatpush.bf16.msra.mxu0 0
        %1704 = vmatpush.bf16.msra.mxu0 %v1692
        %1705 = vmatmul.bf16.gmra.mxu0 %v1695
        %v1706 = vpop.f32.mrf.mxu0
        %v1707 = vadd.f32 0.0, %v1706
        %v1708 = vpop.f32.mrf.mxu0
        %v1709 = vadd.f32 0.0, %v1708
        %1710 = vdwg.mxu0
        %v1713 = vunpack.c.l.b16 %v1657
        %v1714 = vunpack.c.l.b16 %v1658
        %v1715 = vpack.c.b16 %v1714, %v1713
        %1716 = vrot.lane.b32.xlu0 %v1410, 120
        %v1717 = vpop.permute.xlu0 %1716
        %v1720 = vsel %vm1248, %v1715, 0
        %1722 = vmatpush.bf16.msra.mxu0 0
        %1723 = vmatpush.bf16.msra.mxu0 0
        %1724 = vmatpush.bf16.msra.mxu0 0
        %1725 = vmatpush.bf16.msra.mxu0 0
        %1726 = vmatpush.bf16.msra.mxu0 0
        %1727 = vmatpush.bf16.msra.mxu0 0
        %1728 = vmatpush.bf16.msra.mxu0 0
        %1729 = vmatpush.bf16.msra.mxu0 %v1717
        %1730 = vmatmul.bf16.gmra.mxu0 %v1720
        %v1731 = vpop.f32.mrf.mxu0
        %v1732 = vadd.f32 0.0, %v1731
        %v1733 = vpop.f32.mrf.mxu0
        %v1734 = vadd.f32 0.0, %v1733
        %1735 = vdwg.mxu0
        %v1738 = vunpack.c.l.b16 %v1659
        %v1739 = vunpack.c.l.b16 %v1660
        %v1740 = vpack.c.b16 %v1739, %v1738
        %1741 = vrot.lane.b32.xlu0 %v1438, 120
        %v1742 = vpop.permute.xlu0 %1741
        %v1745 = vsel %vm1248, %v1740, 0
        %1747 = vmatpush.bf16.msra.mxu0 0
        %1748 = vmatpush.bf16.msra.mxu0 0
        %1749 = vmatpush.bf16.msra.mxu0 0
        %1750 = vmatpush.bf16.msra.mxu0 0
        %1751 = vmatpush.bf16.msra.mxu0 0
        %1752 = vmatpush.bf16.msra.mxu0 0
        %1753 = vmatpush.bf16.msra.mxu0 0
        %1754 = vmatpush.bf16.msra.mxu0 %v1742
        %1755 = vmatmul.bf16.gmra.mxu0 %v1745
        %v1756 = vpop.f32.mrf.mxu0
        %v1757 = vadd.f32 0.0, %v1756
        %v1758 = vpop.f32.mrf.mxu0
        %v1759 = vadd.f32 0.0, %v1758
        %1760 = vdwg.mxu0
        %v1761 = vpack.c.bf16 %v1684, %v1682
        %v1762 = vpack.c.bf16 %v1709, %v1707
        %v1763 = vpack.c.bf16 %v1734, %v1732
        %v1764 = vpack.c.bf16 %v1759, %v1757
        %v1766 = vsel %vm1129, %v1761, 0
        %v1769 = vsel %vm1129, %v1762, 0
        %v1772 = vsel %vm1129, %v1763, 0
        %v1775 = vsel %vm1129, %v1764, 0
        %vm1777 = vcmask 1043456
        %v1779 = vsel %vm1777, %v1092, 0
        %1781 = vmatpush.bf16.msra.mxu0 0
        %1782 = vmatpush.bf16.msra.mxu0 0
        %1783 = vmatpush.bf16.msra.mxu0 0
        %1784 = vmatpush.bf16.msra.mxu0 0
        %1785 = vmatpush.bf16.msra.mxu0 0
        %1786 = vmatpush.bf16.msra.mxu0 0
        %1787 = vmatpush.bf16.msra.mxu0 0
        %1788 = vmatpush.bf16.msra.mxu0 %v1779
        %1789 = vmatmul.bf16.gmra.mxu0 %v1766
        %v1790 = vpop.f32.mrf.mxu0
        %v1791 = vadd.f32 0.0, %v1790
        %v1792 = vpop.f32.mrf.mxu0
        %v1793 = vadd.f32 0.0, %v1792
        %1794 = vmatmul.bf16.gmra.mxu0 %v1769
        %v1795 = vpop.f32.mrf.mxu0
        %v1796 = vadd.f32 0.0, %v1795
        %v1797 = vpop.f32.mrf.mxu0
        %v1798 = vadd.f32 0.0, %v1797
        %1799 = vmatmul.bf16.gmra.mxu0 %v1772
        %v1800 = vpop.f32.mrf.mxu0
        %v1801 = vadd.f32 0.0, %v1800
        %v1802 = vpop.f32.mrf.mxu0
        %v1803 = vadd.f32 0.0, %v1802
        %1804 = vmatmul.bf16.gmra.mxu0 %v1775
        %v1805 = vpop.f32.mrf.mxu0
        %v1806 = vadd.f32 0.0, %v1805
        %v1807 = vpop.f32.mrf.mxu0
        %v1808 = vadd.f32 0.0, %v1807
        %1809 = vdwg.mxu0
        %v1811 = vsel %vm1129, %v1457, 0
        %v1814 = vsel %vm1129, %v1458, 0
        %v1817 = vsel %vm1129, %v1459, 0
        %v1820 = vsel %vm1129, %v1460, 0
        %v1823 = vsel %vm1777, %v1091, 0
        %1825 = vmatpush.bf16.msra.mxu0 0
        %1826 = vmatpush.bf16.msra.mxu0 0
        %1827 = vmatpush.bf16.msra.mxu0 0
        %1828 = vmatpush.bf16.msra.mxu0 0
        %1829 = vmatpush.bf16.msra.mxu0 0
        %1830 = vmatpush.bf16.msra.mxu0 0
        %1831 = vmatpush.bf16.msra.mxu0 0
        %1832 = vmatpush.bf16.msra.mxu0 %v1823
        %1833 = vmatmul.bf16.gmra.mxu0 %v1811
        %v1834 = vpop.f32.mrf.mxu0
        %v1835 = vadd.f32 %v1791, %v1834
        %v1836 = vpop.f32.mrf.mxu0
        %v1837 = vadd.f32 %v1793, %v1836
        %1838 = vmatmul.bf16.gmra.mxu0 %v1814
        %v1839 = vpop.f32.mrf.mxu0
        %v1840 = vadd.f32 %v1796, %v1839
        %v1841 = vpop.f32.mrf.mxu0
        %v1842 = vadd.f32 %v1798, %v1841
        %1843 = vmatmul.bf16.gmra.mxu0 %v1817
        %v1844 = vpop.f32.mrf.mxu0
        %v1845 = vadd.f32 %v1801, %v1844
        %v1846 = vpop.f32.mrf.mxu0
        %v1847 = vadd.f32 %v1803, %v1846
        %1848 = vmatmul.bf16.gmra.mxu0 %v1820
        %v1849 = vpop.f32.mrf.mxu0
        %v1850 = vadd.f32 %v1806, %v1849
        %v1851 = vpop.f32.mrf.mxu0
        %v1852 = vadd.f32 %v1808, %v1851
        %1853 = vdwg.mxu0
        %1854 = vrot.lane.b32.xlu0 %v1123, 112
        %v1855 = vpop.permute.xlu0 %1854
        %1856 = vrot.lane.b32.xlu0 %v1128, 112
        %v1857 = vpop.permute.xlu0 %1856
        %v1859 = vsel %vm1129, %v1855, 0
        %v1862 = vsel %vm1129, %v1857, 0
        %1864 = vmatpush.bf16.xpose.msra.mxu0 0
        %1865 = vmatpush.bf16.xpose.msra.mxu0 0
        %1866 = vmatpush.bf16.xpose.msra.mxu0 0
        %1867 = vmatpush.bf16.xpose.msra.mxu0 0
        %1868 = vmatpush.bf16.xpose.msra.mxu0 0
        %1869 = vmatpush.bf16.xpose.msra.mxu0 0
        %1870 = vmatpush.bf16.xpose.msra.mxu0 0
        %1871 = vmatpush.bf16.xpose.msra.mxu0 %v1862
        %1872 = vmatmul.bf16.gmra.mxu0 %v1859
        %v1873 = vpop.f32.mrf.mxu0
        %v1874 = vadd.f32 0.0, %v1873
        %v1875 = vpop.f32.mrf.mxu0
        %v1876 = vadd.f32 0.0, %v1875
        %1877 = vdwg.mxu0
        %1878 = vrot.lane.b32.xlu0 %v1154, 112
        %v1879 = vpop.permute.xlu0 %1878
        %1880 = vrot.lane.b32.xlu0 %v1159, 112
        %v1881 = vpop.permute.xlu0 %1880
        %v1883 = vsel %vm1129, %v1879, 0
        %v1886 = vsel %vm1129, %v1881, 0
        %1888 = vmatpush.bf16.xpose.msra.mxu0 0
        %1889 = vmatpush.bf16.xpose.msra.mxu0 0
        %1890 = vmatpush.bf16.xpose.msra.mxu0 0
        %1891 = vmatpush.bf16.xpose.msra.mxu0 0
        %1892 = vmatpush.bf16.xpose.msra.mxu0 0
        %1893 = vmatpush.bf16.xpose.msra.mxu0 0
        %1894 = vmatpush.bf16.xpose.msra.mxu0 0
        %1895 = vmatpush.bf16.xpose.msra.mxu0 %v1886
        %1896 = vmatmul.bf16.gmra.mxu0 %v1883
        %v1897 = vpop.f32.mrf.mxu0
        %v1898 = vadd.f32 0.0, %v1897
        %v1899 = vpop.f32.mrf.mxu0
        %v1900 = vadd.f32 0.0, %v1899
        %1901 = vdwg.mxu0
        %1902 = vrot.lane.b32.xlu0 %v1184, 112
        %v1903 = vpop.permute.xlu0 %1902
        %1904 = vrot.lane.b32.xlu0 %v1189, 112
        %v1905 = vpop.permute.xlu0 %1904
        %v1907 = vsel %vm1129, %v1903, 0
        %v1910 = vsel %vm1129, %v1905, 0
        %1912 = vmatpush.bf16.xpose.msra.mxu0 0
        %1913 = vmatpush.bf16.xpose.msra.mxu0 0
        %1914 = vmatpush.bf16.xpose.msra.mxu0 0
        %1915 = vmatpush.bf16.xpose.msra.mxu0 0
        %1916 = vmatpush.bf16.xpose.msra.mxu0 0
        %1917 = vmatpush.bf16.xpose.msra.mxu0 0
        %1918 = vmatpush.bf16.xpose.msra.mxu0 0
        %1919 = vmatpush.bf16.xpose.msra.mxu0 %v1910
        %1920 = vmatmul.bf16.gmra.mxu0 %v1907
        %v1921 = vpop.f32.mrf.mxu0
        %v1922 = vadd.f32 0.0, %v1921
        %v1923 = vpop.f32.mrf.mxu0
        %v1924 = vadd.f32 0.0, %v1923
        %1925 = vdwg.mxu0
        %1926 = vrot.lane.b32.xlu0 %v1214, 112
        %v1927 = vpop.permute.xlu0 %1926
        %1928 = vrot.lane.b32.xlu0 %v1219, 112
        %v1929 = vpop.permute.xlu0 %1928
        %v1931 = vsel %vm1129, %v1927, 0
        %v1934 = vsel %vm1129, %v1929, 0
        %1936 = vmatpush.bf16.xpose.msra.mxu0 0
        %1937 = vmatpush.bf16.xpose.msra.mxu0 0
        %1938 = vmatpush.bf16.xpose.msra.mxu0 0
        %1939 = vmatpush.bf16.xpose.msra.mxu0 0
        %1940 = vmatpush.bf16.xpose.msra.mxu0 0
        %1941 = vmatpush.bf16.xpose.msra.mxu0 0
        %1942 = vmatpush.bf16.xpose.msra.mxu0 0
        %1943 = vmatpush.bf16.xpose.msra.mxu0 %v1934
        %1944 = vmatmul.bf16.gmra.mxu0 %v1931
        %v1945 = vpop.f32.mrf.mxu0
        %v1946 = vadd.f32 0.0, %v1945
        %v1947 = vpop.f32.mrf.mxu0
        %v1948 = vadd.f32 0.0, %v1947
        %1949 = vdwg.mxu0
        %v1950 = vmul.f32 %v1874, 0.35355338
        %v1951 = vmul.f32 %v1876, 0.35355338
        %v1952 = vmul.f32 %v1898, 0.35355338
        %v1953 = vmul.f32 %v1900, 0.35355338
        %v1954 = vmul.f32 %v1922, 0.35355338
        %v1955 = vmul.f32 %v1924, 0.35355338
        %v1956 = vmul.f32 %v1946, 0.35355338
        %v1957 = vmul.f32 %v1948, 0.35355338
        %v1958 = vsel %vm1248, %v1950, -inf
        %1959 = vmax.xlane.f32.xlu0 %v1958
        %v1960 = vpop.xlane.xlu0 %1959
        %v1961 = vsel %vm1248, %v1951, -inf
        %1962 = vmax.xlane.f32.xlu0 %v1961
        %v1963 = vpop.xlane.xlu0 %1962
        %v1964 = vsel %vm1248, %v1952, -inf
        %1965 = vmax.xlane.f32.xlu0 %v1964
        %v1966 = vpop.xlane.xlu0 %1965
        %v1967 = vsel %vm1248, %v1953, -inf
        %1968 = vmax.xlane.f32.xlu0 %v1967
        %v1969 = vpop.xlane.xlu0 %1968
        %v1970 = vsel %vm1248, %v1954, -inf
        %1971 = vmax.xlane.f32.xlu0 %v1970
        %v1972 = vpop.xlane.xlu0 %1971
        %v1973 = vsel %vm1248, %v1955, -inf
        %1974 = vmax.xlane.f32.xlu0 %v1973
        %v1975 = vpop.xlane.xlu0 %1974
        %v1976 = vsel %vm1248, %v1956, -inf
        %1977 = vmax.xlane.f32.xlu0 %v1976
        %v1978 = vpop.xlane.xlu0 %1977
        %v1979 = vsel %vm1248, %v1957, -inf
        %1980 = vmax.xlane.f32.xlu0 %v1979
        %v1981 = vpop.xlane.xlu0 %1980
        %v1982 = vsub.f32 %v1950, %v1960
        %v1983 = vsub.f32 %v1951, %v1963
        %v1984 = vsub.f32 %v1952, %v1966
        %v1985 = vsub.f32 %v1953, %v1969
        %v1986 = vsub.f32 %v1954, %v1972
        %v1987 = vsub.f32 %v1955, %v1975
        %v1988 = vsub.f32 %v1956, %v1978
        %v1989 = vsub.f32 %v1957, %v1981
        %v1990 = vmul.f32 %v1982, 1.442695
        %v1991 = vpow.pop %v1990
        %v1992 = vmul.f32 %v1983, 1.442695
        %v1993 = vpow.pop %v1992
        %v1994 = vmul.f32 %v1984, 1.442695
        %v1995 = vpow.pop %v1994
        %v1996 = vmul.f32 %v1985, 1.442695
        %v1997 = vpow.pop %v1996
        %v1998 = vmul.f32 %v1986, 1.442695
        %v1999 = vpow.pop %v1998
        %v2000 = vmul.f32 %v1987, 1.442695
        %v2001 = vpow.pop %v2000
        %v2002 = vmul.f32 %v1988, 1.442695
        %v2003 = vpow.pop %v2002
        %v2004 = vmul.f32 %v1989, 1.442695
        %v2005 = vpow.pop %v2004
        %v2006 = vsel %vm1248, %v1991, 0.0
        %2007 = vadd.xlane.f32.xlu0 %v2006
        %v2008 = vpop.xlane.xlu0 %2007
        %v2009 = vsel %vm1248, %v1993, 0.0
        %2010 = vadd.xlane.f32.xlu0 %v2009
        %v2011 = vpop.xlane.xlu0 %2010
        %v2012 = vsel %vm1248, %v1995, 0.0
        %2013 = vadd.xlane.f32.xlu0 %v2012
        %v2014 = vpop.xlane.xlu0 %2013
        %v2015 = vsel %vm1248, %v1997, 0.0
        %2016 = vadd.xlane.f32.xlu0 %v2015
        %v2017 = vpop.xlane.xlu0 %2016
        %v2018 = vsel %vm1248, %v1999, 0.0
        %2019 = vadd.xlane.f32.xlu0 %v2018
        %v2020 = vpop.xlane.xlu0 %2019
        %v2021 = vsel %vm1248, %v2001, 0.0
        %2022 = vadd.xlane.f32.xlu0 %v2021
        %v2023 = vpop.xlane.xlu0 %2022
        %v2024 = vsel %vm1248, %v2003, 0.0
        %2025 = vadd.xlane.f32.xlu0 %v2024
        %v2026 = vpop.xlane.xlu0 %2025
        %v2027 = vsel %vm1248, %v2005, 0.0
        %2028 = vadd.xlane.f32.xlu0 %v2027
        %v2029 = vpop.xlane.xlu0 %2028
        %v2030 = vrcp.pop %v2008
        %v2031 = vrcp.pop %v2011
        %v2032 = vrcp.pop %v2014
        %v2033 = vrcp.pop %v2017
        %v2034 = vrcp.pop %v2020
        %v2035 = vrcp.pop %v2023
        %v2036 = vrcp.pop %v2026
        %v2037 = vrcp.pop %v2029
        %v2038 = vmul.f32 %v1991, %v2030
        %v2039 = vmul.f32 %v1993, %v2031
        %v2040 = vmul.f32 %v1995, %v2032
        %v2041 = vmul.f32 %v1997, %v2033
        %v2042 = vmul.f32 %v1999, %v2034
        %v2043 = vmul.f32 %v2001, %v2035
        %v2044 = vmul.f32 %v2003, %v2036
        %v2045 = vmul.f32 %v2005, %v2037
        %v2046 = vpack.c.bf16 %v2038, %v2038
        %v2047 = vpack.c.bf16 %v2039, %v2039
        %v2048 = vpack.c.bf16 %v2040, %v2040
        %v2049 = vpack.c.bf16 %v2041, %v2041
        %v2050 = vpack.c.bf16 %v2042, %v2042
        %v2051 = vpack.c.bf16 %v2043, %v2043
        %v2052 = vpack.c.bf16 %v2044, %v2044
        %v2053 = vpack.c.bf16 %v2045, %v2045
        %v2056 = vunpack.c.l.b16 %v2046
        %v2057 = vunpack.c.l.b16 %v2047
        %v2058 = vpack.c.b16 %v2057, %v2056
        %2059 = vrot.lane.b32.xlu0 %v1354, 112
        %v2060 = vpop.permute.xlu0 %2059
        %v2063 = vsel %vm1248, %v2058, 0
        %2065 = vmatpush.bf16.msra.mxu0 0
        %2066 = vmatpush.bf16.msra.mxu0 0
        %2067 = vmatpush.bf16.msra.mxu0 0
        %2068 = vmatpush.bf16.msra.mxu0 0
        %2069 = vmatpush.bf16.msra.mxu0 0
        %2070 = vmatpush.bf16.msra.mxu0 0
        %2071 = vmatpush.bf16.msra.mxu0 0
        %2072 = vmatpush.bf16.msra.mxu0 %v2060
        %2073 = vmatmul.bf16.gmra.mxu0 %v2063
        %v2074 = vpop.f32.mrf.mxu0
        %v2075 = vadd.f32 0.0, %v2074
        %v2076 = vpop.f32.mrf.mxu0
        %v2077 = vadd.f32 0.0, %v2076
        %2078 = vdwg.mxu0
        %v2081 = vunpack.c.l.b16 %v2048
        %v2082 = vunpack.c.l.b16 %v2049
        %v2083 = vpack.c.b16 %v2082, %v2081
        %2084 = vrot.lane.b32.xlu0 %v1382, 112
        %v2085 = vpop.permute.xlu0 %2084
        %v2088 = vsel %vm1248, %v2083, 0
        %2090 = vmatpush.bf16.msra.mxu0 0
        %2091 = vmatpush.bf16.msra.mxu0 0
        %2092 = vmatpush.bf16.msra.mxu0 0
        %2093 = vmatpush.bf16.msra.mxu0 0
        %2094 = vmatpush.bf16.msra.mxu0 0
        %2095 = vmatpush.bf16.msra.mxu0 0
        %2096 = vmatpush.bf16.msra.mxu0 0
        %2097 = vmatpush.bf16.msra.mxu0 %v2085
        %2098 = vmatmul.bf16.gmra.mxu0 %v2088
        %v2099 = vpop.f32.mrf.mxu0
        %v2100 = vadd.f32 0.0, %v2099
        %v2101 = vpop.f32.mrf.mxu0
        %v2102 = vadd.f32 0.0, %v2101
        %2103 = vdwg.mxu0
        %v2106 = vunpack.c.l.b16 %v2050
        %v2107 = vunpack.c.l.b16 %v2051
        %v2108 = vpack.c.b16 %v2107, %v2106
        %2109 = vrot.lane.b32.xlu0 %v1410, 112
        %v2110 = vpop.permute.xlu0 %2109
        %v2113 = vsel %vm1248, %v2108, 0
        %2115 = vmatpush.bf16.msra.mxu0 0
        %2116 = vmatpush.bf16.msra.mxu0 0
        %2117 = vmatpush.bf16.msra.mxu0 0
        %2118 = vmatpush.bf16.msra.mxu0 0
        %2119 = vmatpush.bf16.msra.mxu0 0
        %2120 = vmatpush.bf16.msra.mxu0 0
        %2121 = vmatpush.bf16.msra.mxu0 0
        %2122 = vmatpush.bf16.msra.mxu0 %v2110
        %2123 = vmatmul.bf16.gmra.mxu0 %v2113
        %v2124 = vpop.f32.mrf.mxu0
        %v2125 = vadd.f32 0.0, %v2124
        %v2126 = vpop.f32.mrf.mxu0
        %v2127 = vadd.f32 0.0, %v2126
        %2128 = vdwg.mxu0
        %v2131 = vunpack.c.l.b16 %v2052
        %v2132 = vunpack.c.l.b16 %v2053
        %v2133 = vpack.c.b16 %v2132, %v2131
        %2134 = vrot.lane.b32.xlu0 %v1438, 112
        %v2135 = vpop.permute.xlu0 %2134
        %v2138 = vsel %vm1248, %v2133, 0
        %2140 = vmatpush.bf16.msra.mxu0 0
        %2141 = vmatpush.bf16.msra.mxu0 0
        %2142 = vmatpush.bf16.msra.mxu0 0
        %2143 = vmatpush.bf16.msra.mxu0 0
        %2144 = vmatpush.bf16.msra.mxu0 0
        %2145 = vmatpush.bf16.msra.mxu0 0
        %2146 = vmatpush.bf16.msra.mxu0 0
        %2147 = vmatpush.bf16.msra.mxu0 %v2135
        %2148 = vmatmul.bf16.gmra.mxu0 %v2138
        %v2149 = vpop.f32.mrf.mxu0
        %v2150 = vadd.f32 0.0, %v2149
        %v2151 = vpop.f32.mrf.mxu0
        %v2152 = vadd.f32 0.0, %v2151
        %2153 = vdwg.mxu0
        %v2154 = vpack.c.bf16 %v2077, %v2075
        %v2155 = vpack.c.bf16 %v2102, %v2100
        %v2156 = vpack.c.bf16 %v2127, %v2125
        %v2157 = vpack.c.bf16 %v2152, %v2150
        %v2159 = vsel %vm1129, %v2154, 0
        %v2162 = vsel %vm1129, %v2155, 0
        %v2165 = vsel %vm1129, %v2156, 0
        %v2168 = vsel %vm1129, %v2157, 0
        %v2171 = vsel %vm1777, %v1093, 0
        %2173 = vmatpush.bf16.msra.mxu0 0
        %2174 = vmatpush.bf16.msra.mxu0 0
        %2175 = vmatpush.bf16.msra.mxu0 0
        %2176 = vmatpush.bf16.msra.mxu0 0
        %2177 = vmatpush.bf16.msra.mxu0 0
        %2178 = vmatpush.bf16.msra.mxu0 0
        %2179 = vmatpush.bf16.msra.mxu0 0
        %2180 = vmatpush.bf16.msra.mxu0 %v2171
        %2181 = vmatmul.bf16.gmra.mxu0 %v2159
        %v2182 = vpop.f32.mrf.mxu0
        %v2183 = vadd.f32 0.0, %v2182
        %v2184 = vpop.f32.mrf.mxu0
        %v2185 = vadd.f32 0.0, %v2184
        %2186 = vmatmul.bf16.gmra.mxu0 %v2162
        %v2187 = vpop.f32.mrf.mxu0
        %v2188 = vadd.f32 0.0, %v2187
        %v2189 = vpop.f32.mrf.mxu0
        %v2190 = vadd.f32 0.0, %v2189
        %2191 = vmatmul.bf16.gmra.mxu0 %v2165
        %v2192 = vpop.f32.mrf.mxu0
        %v2193 = vadd.f32 0.0, %v2192
        %v2194 = vpop.f32.mrf.mxu0
        %v2195 = vadd.f32 0.0, %v2194
        %2196 = vmatmul.bf16.gmra.mxu0 %v2168
        %v2197 = vpop.f32.mrf.mxu0
        %v2198 = vadd.f32 0.0, %v2197
        %v2199 = vpop.f32.mrf.mxu0
        %v2200 = vadd.f32 0.0, %v2199
        %2201 = vdwg.mxu0
        %v2202 = vadd.f32 %v1835, %v2183
        %v2203 = vadd.f32 %v1837, %v2185
        %v2204 = vadd.f32 %v1840, %v2188
        %v2205 = vadd.f32 %v1842, %v2190
        %v2206 = vadd.f32 %v1845, %v2193
        %v2207 = vadd.f32 %v1847, %v2195
        %v2208 = vadd.f32 %v1850, %v2198
        %v2209 = vadd.f32 %v1852, %v2200
        %2210 = vrot.lane.b32.xlu0 %v1123, 104
        %v2211 = vpop.permute.xlu0 %2210
        %2212 = vrot.lane.b32.xlu0 %v1128, 104
        %v2213 = vpop.permute.xlu0 %2212
        %v2215 = vsel %vm1129, %v2211, 0
        %v2218 = vsel %vm1129, %v2213, 0
        %2220 = vmatpush.bf16.xpose.msra.mxu0 0
        %2221 = vmatpush.bf16.xpose.msra.mxu0 0
        %2222 = vmatpush.bf16.xpose.msra.mxu0 0
        %2223 = vmatpush.bf16.xpose.msra.mxu0 0
        %2224 = vmatpush.bf16.xpose.msra.mxu0 0
        %2225 = vmatpush.bf16.xpose.msra.mxu0 0
        %2226 = vmatpush.bf16.xpose.msra.mxu0 0
        %2227 = vmatpush.bf16.xpose.msra.mxu0 %v2218
        %2228 = vmatmul.bf16.gmra.mxu0 %v2215
        %v2229 = vpop.f32.mrf.mxu0
        %v2230 = vadd.f32 0.0, %v2229
        %v2231 = vpop.f32.mrf.mxu0
        %v2232 = vadd.f32 0.0, %v2231
        %2233 = vdwg.mxu0
        %2234 = vrot.lane.b32.xlu0 %v1154, 104
        %v2235 = vpop.permute.xlu0 %2234
        %2236 = vrot.lane.b32.xlu0 %v1159, 104
        %v2237 = vpop.permute.xlu0 %2236
        %v2239 = vsel %vm1129, %v2235, 0
        %v2242 = vsel %vm1129, %v2237, 0
        %2244 = vmatpush.bf16.xpose.msra.mxu0 0
        %2245 = vmatpush.bf16.xpose.msra.mxu0 0
        %2246 = vmatpush.bf16.xpose.msra.mxu0 0
        %2247 = vmatpush.bf16.xpose.msra.mxu0 0
        %2248 = vmatpush.bf16.xpose.msra.mxu0 0
        %2249 = vmatpush.bf16.xpose.msra.mxu0 0
        %2250 = vmatpush.bf16.xpose.msra.mxu0 0
        %2251 = vmatpush.bf16.xpose.msra.mxu0 %v2242
        %2252 = vmatmul.bf16.gmra.mxu0 %v2239
        %v2253 = vpop.f32.mrf.mxu0
        %v2254 = vadd.f32 0.0, %v2253
        %v2255 = vpop.f32.mrf.mxu0
        %v2256 = vadd.f32 0.0, %v2255
        %2257 = vdwg.mxu0
        %2258 = vrot.lane.b32.xlu0 %v1184, 104
        %v2259 = vpop.permute.xlu0 %2258
        %2260 = vrot.lane.b32.xlu0 %v1189, 104
        %v2261 = vpop.permute.xlu0 %2260
        %v2263 = vsel %vm1129, %v2259, 0
        %v2266 = vsel %vm1129, %v2261, 0
        %2268 = vmatpush.bf16.xpose.msra.mxu0 0
        %2269 = vmatpush.bf16.xpose.msra.mxu0 0
        %2270 = vmatpush.bf16.xpose.msra.mxu0 0
        %2271 = vmatpush.bf16.xpose.msra.mxu0 0
        %2272 = vmatpush.bf16.xpose.msra.mxu0 0
        %2273 = vmatpush.bf16.xpose.msra.mxu0 0
        %2274 = vmatpush.bf16.xpose.msra.mxu0 0
        %2275 = vmatpush.bf16.xpose.msra.mxu0 %v2266
        %2276 = vmatmul.bf16.gmra.mxu0 %v2263
        %v2277 = vpop.f32.mrf.mxu0
        %v2278 = vadd.f32 0.0, %v2277
        %v2279 = vpop.f32.mrf.mxu0
        %v2280 = vadd.f32 0.0, %v2279
        %2281 = vdwg.mxu0
        %2282 = vrot.lane.b32.xlu0 %v1214, 104
        %v2283 = vpop.permute.xlu0 %2282
        %2284 = vrot.lane.b32.xlu0 %v1219, 104
        %v2285 = vpop.permute.xlu0 %2284
        %v2287 = vsel %vm1129, %v2283, 0
        %v2290 = vsel %vm1129, %v2285, 0
        %2292 = vmatpush.bf16.xpose.msra.mxu0 0
        %2293 = vmatpush.bf16.xpose.msra.mxu0 0
        %2294 = vmatpush.bf16.xpose.msra.mxu0 0
        %2295 = vmatpush.bf16.xpose.msra.mxu0 0
        %2296 = vmatpush.bf16.xpose.msra.mxu0 0
        %2297 = vmatpush.bf16.xpose.msra.mxu0 0
        %2298 = vmatpush.bf16.xpose.msra.mxu0 0
        %2299 = vmatpush.bf16.xpose.msra.mxu0 %v2290
        %2300 = vmatmul.bf16.gmra.mxu0 %v2287
        %v2301 = vpop.f32.mrf.mxu0
        %v2302 = vadd.f32 0.0, %v2301
        %v2303 = vpop.f32.mrf.mxu0
        %v2304 = vadd.f32 0.0, %v2303
        %2305 = vdwg.mxu0
        %v2306 = vmul.f32 %v2230, 0.35355338
        %v2307 = vmul.f32 %v2232, 0.35355338
        %v2308 = vmul.f32 %v2254, 0.35355338
        %v2309 = vmul.f32 %v2256, 0.35355338
        %v2310 = vmul.f32 %v2278, 0.35355338
        %v2311 = vmul.f32 %v2280, 0.35355338
        %v2312 = vmul.f32 %v2302, 0.35355338
        %v2313 = vmul.f32 %v2304, 0.35355338
        %v2314 = vsel %vm1248, %v2306, -inf
        %2315 = vmax.xlane.f32.xlu0 %v2314
        %v2316 = vpop.xlane.xlu0 %2315
        %v2317 = vsel %vm1248, %v2307, -inf
        %2318 = vmax.xlane.f32.xlu0 %v2317
        %v2319 = vpop.xlane.xlu0 %2318
        %v2320 = vsel %vm1248, %v2308, -inf
        %2321 = vmax.xlane.f32.xlu0 %v2320
        %v2322 = vpop.xlane.xlu0 %2321
        %v2323 = vsel %vm1248, %v2309, -inf
        %2324 = vmax.xlane.f32.xlu0 %v2323
        %v2325 = vpop.xlane.xlu0 %2324
        %v2326 = vsel %vm1248, %v2310, -inf
        %2327 = vmax.xlane.f32.xlu0 %v2326
        %v2328 = vpop.xlane.xlu0 %2327
        %v2329 = vsel %vm1248, %v2311, -inf
        %2330 = vmax.xlane.f32.xlu0 %v2329
        %v2331 = vpop.xlane.xlu0 %2330
        %v2332 = vsel %vm1248, %v2312, -inf
        %2333 = vmax.xlane.f32.xlu0 %v2332
        %v2334 = vpop.xlane.xlu0 %2333
        %v2335 = vsel %vm1248, %v2313, -inf
        %2336 = vmax.xlane.f32.xlu0 %v2335
        %v2337 = vpop.xlane.xlu0 %2336
        %v2338 = vsub.f32 %v2306, %v2316
        %v2339 = vsub.f32 %v2307, %v2319
        %v2340 = vsub.f32 %v2308, %v2322
        %v2341 = vsub.f32 %v2309, %v2325
        %v2342 = vsub.f32 %v2310, %v2328
        %v2343 = vsub.f32 %v2311, %v2331
        %v2344 = vsub.f32 %v2312, %v2334
        %v2345 = vsub.f32 %v2313, %v2337
        %v2346 = vmul.f32 %v2338, 1.442695
        %v2347 = vpow.pop %v2346
        %v2348 = vmul.f32 %v2339, 1.442695
        %v2349 = vpow.pop %v2348
        %v2350 = vmul.f32 %v2340, 1.442695
        %v2351 = vpow.pop %v2350
        %v2352 = vmul.f32 %v2341, 1.442695
        %v2353 = vpow.pop %v2352
        %v2354 = vmul.f32 %v2342, 1.442695
        %v2355 = vpow.pop %v2354
        %v2356 = vmul.f32 %v2343, 1.442695
        %v2357 = vpow.pop %v2356
        %v2358 = vmul.f32 %v2344, 1.442695
        %v2359 = vpow.pop %v2358
        %v2360 = vmul.f32 %v2345, 1.442695
        %v2361 = vpow.pop %v2360
        %v2362 = vsel %vm1248, %v2347, 0.0
        %2363 = vadd.xlane.f32.xlu0 %v2362
        %v2364 = vpop.xlane.xlu0 %2363
        %v2365 = vsel %vm1248, %v2349, 0.0
        %2366 = vadd.xlane.f32.xlu0 %v2365
        %v2367 = vpop.xlane.xlu0 %2366
        %v2368 = vsel %vm1248, %v2351, 0.0
        %2369 = vadd.xlane.f32.xlu0 %v2368
        %v2370 = vpop.xlane.xlu0 %2369
        %v2371 = vsel %vm1248, %v2353, 0.0
        %2372 = vadd.xlane.f32.xlu0 %v2371
        %v2373 = vpop.xlane.xlu0 %2372
        %v2374 = vsel %vm1248, %v2355, 0.0
        %2375 = vadd.xlane.f32.xlu0 %v2374
        %v2376 = vpop.xlane.xlu0 %2375
        %v2377 = vsel %vm1248, %v2357, 0.0
        %2378 = vadd.xlane.f32.xlu0 %v2377
        %v2379 = vpop.xlane.xlu0 %2378
        %v2380 = vsel %vm1248, %v2359, 0.0
        %2381 = vadd.xlane.f32.xlu0 %v2380
        %v2382 = vpop.xlane.xlu0 %2381
        %v2383 = vsel %vm1248, %v2361, 0.0
        %2384 = vadd.xlane.f32.xlu0 %v2383
        %v2385 = vpop.xlane.xlu0 %2384
        %v2386 = vrcp.pop %v2364
        %v2387 = vrcp.pop %v2367
        %v2388 = vrcp.pop %v2370
        %v2389 = vrcp.pop %v2373
        %v2390 = vrcp.pop %v2376
        %v2391 = vrcp.pop %v2379
        %v2392 = vrcp.pop %v2382
        %v2393 = vrcp.pop %v2385
        %v2394 = vmul.f32 %v2347, %v2386
        %v2395 = vmul.f32 %v2349, %v2387
        %v2396 = vmul.f32 %v2351, %v2388
        %v2397 = vmul.f32 %v2353, %v2389
        %v2398 = vmul.f32 %v2355, %v2390
        %v2399 = vmul.f32 %v2357, %v2391
        %v2400 = vmul.f32 %v2359, %v2392
        %v2401 = vmul.f32 %v2361, %v2393
        %v2402 = vpack.c.bf16 %v2394, %v2394
        %v2403 = vpack.c.bf16 %v2395, %v2395
        %v2404 = vpack.c.bf16 %v2396, %v2396
        %v2405 = vpack.c.bf16 %v2397, %v2397
        %v2406 = vpack.c.bf16 %v2398, %v2398
        %v2407 = vpack.c.bf16 %v2399, %v2399
        %v2408 = vpack.c.bf16 %v2400, %v2400
        %v2409 = vpack.c.bf16 %v2401, %v2401
        %v2412 = vunpack.c.l.b16 %v2402
        %v2413 = vunpack.c.l.b16 %v2403
        %v2414 = vpack.c.b16 %v2413, %v2412
        %2415 = vrot.lane.b32.xlu0 %v1354, 104
        %v2416 = vpop.permute.xlu0 %2415
        %v2419 = vsel %vm1248, %v2414, 0
        %2421 = vmatpush.bf16.msra.mxu0 0
        %2422 = vmatpush.bf16.msra.mxu0 0
        %2423 = vmatpush.bf16.msra.mxu0 0
        %2424 = vmatpush.bf16.msra.mxu0 0
        %2425 = vmatpush.bf16.msra.mxu0 0
        %2426 = vmatpush.bf16.msra.mxu0 0
        %2427 = vmatpush.bf16.msra.mxu0 0
        %2428 = vmatpush.bf16.msra.mxu0 %v2416
        %2429 = vmatmul.bf16.gmra.mxu0 %v2419
        %v2430 = vpop.f32.mrf.mxu0
        %v2431 = vadd.f32 0.0, %v2430
        %v2432 = vpop.f32.mrf.mxu0
        %v2433 = vadd.f32 0.0, %v2432
        %2434 = vdwg.mxu0
        %v2437 = vunpack.c.l.b16 %v2404
        %v2438 = vunpack.c.l.b16 %v2405
        %v2439 = vpack.c.b16 %v2438, %v2437
        %2440 = vrot.lane.b32.xlu0 %v1382, 104
        %v2441 = vpop.permute.xlu0 %2440
        %v2444 = vsel %vm1248, %v2439, 0
        %2446 = vmatpush.bf16.msra.mxu0 0
        %2447 = vmatpush.bf16.msra.mxu0 0
        %2448 = vmatpush.bf16.msra.mxu0 0
        %2449 = vmatpush.bf16.msra.mxu0 0
        %2450 = vmatpush.bf16.msra.mxu0 0
        %2451 = vmatpush.bf16.msra.mxu0 0
        %2452 = vmatpush.bf16.msra.mxu0 0
        %2453 = vmatpush.bf16.msra.mxu0 %v2441
        %2454 = vmatmul.bf16.gmra.mxu0 %v2444
        %v2455 = vpop.f32.mrf.mxu0
        %v2456 = vadd.f32 0.0, %v2455
        %v2457 = vpop.f32.mrf.mxu0
        %v2458 = vadd.f32 0.0, %v2457
        %2459 = vdwg.mxu0
        %v2462 = vunpack.c.l.b16 %v2406
        %v2463 = vunpack.c.l.b16 %v2407
        %v2464 = vpack.c.b16 %v2463, %v2462
        %2465 = vrot.lane.b32.xlu0 %v1410, 104
        %v2466 = vpop.permute.xlu0 %2465
        %v2469 = vsel %vm1248, %v2464, 0
        %2471 = vmatpush.bf16.msra.mxu0 0
        %2472 = vmatpush.bf16.msra.mxu0 0
        %2473 = vmatpush.bf16.msra.mxu0 0
        %2474 = vmatpush.bf16.msra.mxu0 0
        %2475 = vmatpush.bf16.msra.mxu0 0
        %2476 = vmatpush.bf16.msra.mxu0 0
        %2477 = vmatpush.bf16.msra.mxu0 0
        %2478 = vmatpush.bf16.msra.mxu0 %v2466
        %2479 = vmatmul.bf16.gmra.mxu0 %v2469
        %v2480 = vpop.f32.mrf.mxu0
        %v2481 = vadd.f32 0.0, %v2480
        %v2482 = vpop.f32.mrf.mxu0
        %v2483 = vadd.f32 0.0, %v2482
        %2484 = vdwg.mxu0
        %v2487 = vunpack.c.l.b16 %v2408
        %v2488 = vunpack.c.l.b16 %v2409
        %v2489 = vpack.c.b16 %v2488, %v2487
        %2490 = vrot.lane.b32.xlu0 %v1438, 104
        %v2491 = vpop.permute.xlu0 %2490
        %v2494 = vsel %vm1248, %v2489, 0
        %2496 = vmatpush.bf16.msra.mxu0 0
        %2497 = vmatpush.bf16.msra.mxu0 0
        %2498 = vmatpush.bf16.msra.mxu0 0
        %2499 = vmatpush.bf16.msra.mxu0 0
        %2500 = vmatpush.bf16.msra.mxu0 0
        %2501 = vmatpush.bf16.msra.mxu0 0
        %2502 = vmatpush.bf16.msra.mxu0 0
        %2503 = vmatpush.bf16.msra.mxu0 %v2491
        %2504 = vmatmul.bf16.gmra.mxu0 %v2494
        %v2505 = vpop.f32.mrf.mxu0
        %v2506 = vadd.f32 0.0, %v2505
        %v2507 = vpop.f32.mrf.mxu0
        %v2508 = vadd.f32 0.0, %v2507
        %2509 = vdwg.mxu0
        %v2510 = vpack.c.bf16 %v2433, %v2431
        %v2511 = vpack.c.bf16 %v2458, %v2456
        %v2512 = vpack.c.bf16 %v2483, %v2481
        %v2513 = vpack.c.bf16 %v2508, %v2506
        %v2515 = vsel %vm1129, %v2510, 0
        %v2518 = vsel %vm1129, %v2511, 0
        %v2521 = vsel %vm1129, %v2512, 0
        %v2524 = vsel %vm1129, %v2513, 0
        %v2527 = vsel %vm1777, %v1094, 0
        %2529 = vmatpush.bf16.msra.mxu0 0
        %2530 = vmatpush.bf16.msra.mxu0 0
        %2531 = vmatpush.bf16.msra.mxu0 0
        %2532 = vmatpush.bf16.msra.mxu0 0
        %2533 = vmatpush.bf16.msra.mxu0 0
        %2534 = vmatpush.bf16.msra.mxu0 0
        %2535 = vmatpush.bf16.msra.mxu0 0
        %2536 = vmatpush.bf16.msra.mxu0 %v2527
        %2537 = vmatmul.bf16.gmra.mxu0 %v2515
        %v2538 = vpop.f32.mrf.mxu0
        %v2539 = vadd.f32 0.0, %v2538
        %v2540 = vpop.f32.mrf.mxu0
        %v2541 = vadd.f32 0.0, %v2540
        %2542 = vmatmul.bf16.gmra.mxu0 %v2518
        %v2543 = vpop.f32.mrf.mxu0
        %v2544 = vadd.f32 0.0, %v2543
        %v2545 = vpop.f32.mrf.mxu0
        %v2546 = vadd.f32 0.0, %v2545
        %2547 = vmatmul.bf16.gmra.mxu0 %v2521
        %v2548 = vpop.f32.mrf.mxu0
        %v2549 = vadd.f32 0.0, %v2548
        %v2550 = vpop.f32.mrf.mxu0
        %v2551 = vadd.f32 0.0, %v2550
        %2552 = vmatmul.bf16.gmra.mxu0 %v2524
        %v2553 = vpop.f32.mrf.mxu0
        %v2554 = vadd.f32 0.0, %v2553
        %v2555 = vpop.f32.mrf.mxu0
        %v2556 = vadd.f32 0.0, %v2555
        %2557 = vdwg.mxu0
        %v2558 = vadd.f32 %v2202, %v2539
        %v2559 = vadd.f32 %v2203, %v2541
        %v2560 = vadd.f32 %v2204, %v2544
        %v2561 = vadd.f32 %v2205, %v2546
        %v2562 = vadd.f32 %v2206, %v2549
        %v2563 = vadd.f32 %v2207, %v2551
        %v2564 = vadd.f32 %v2208, %v2554
        %v2565 = vadd.f32 %v2209, %v2556
        %v2566 = vld [vmem:[%s10] sm:$0x1]
        %v2568 = vperm.slane %v2566, 0
        %v2570 = vadd.f32 %v2558, %v2568
        %v2571 = vadd.f32 %v2559, %v2568
        %v2572 = vadd.f32 %v2560, %v2568
        %v2573 = vadd.f32 %v2561, %v2568
        %v2574 = vadd.f32 %v2562, %v2568
        %v2575 = vadd.f32 %v2563, %v2568
        %v2576 = vadd.f32 %v2564, %v2568
        %v2577 = vadd.f32 %v2565, %v2568
        %v2578 = vadd.f32 %v730, %v2570
        %v2579 = vadd.f32 %v733, %v2571
        %v2580 = vadd.f32 %v794, %v2572
        %v2581 = vadd.f32 %v797, %v2573
        %v2582 = vadd.f32 %v857, %v2574
        %v2583 = vadd.f32 %v860, %v2575
        %v2584 = vadd.f32 %v920, %v2576
        %v2585 = vadd.f32 %v923, %v2577
        %v2586 = vsel %vm951, %v2578, 0.0
        %2587 = vadd.xlane.f32.xlu0 %v2586
        %v2588 = vpop.xlane.xlu0 %2587
        %v2589 = vsel %vm951, %v2579, 0.0
        %2590 = vadd.xlane.f32.xlu0 %v2589
        %v2591 = vpop.xlane.xlu0 %2590
        %v2592 = vsel %vm951, %v2580, 0.0
        %2593 = vadd.xlane.f32.xlu0 %v2592
        %v2594 = vpop.xlane.xlu0 %2593
        %v2595 = vsel %vm951, %v2581, 0.0
        %2596 = vadd.xlane.f32.xlu0 %v2595
        %v2597 = vpop.xlane.xlu0 %2596
        %v2598 = vsel %vm951, %v2582, 0.0
        %2599 = vadd.xlane.f32.xlu0 %v2598
        %v2600 = vpop.xlane.xlu0 %2599
        %v2601 = vsel %vm951, %v2583, 0.0
        %2602 = vadd.xlane.f32.xlu0 %v2601
        %v2603 = vpop.xlane.xlu0 %2602
        %v2604 = vsel %vm951, %v2584, 0.0
        %2605 = vadd.xlane.f32.xlu0 %v2604
        %v2606 = vpop.xlane.xlu0 %2605
        %v2607 = vsel %vm951, %v2585, 0.0
        %2608 = vadd.xlane.f32.xlu0 %v2607
        %v2609 = vpop.xlane.xlu0 %2608
        %v2610 = vrcp.pop 32.0
        %v2611 = vmul.f32 32.0, %v2610
        %v2612 = vsub.f32 1.0, %v2611
        %v2613 = vmul.f32 %v2610, %v2612
        %v2614 = vadd.f32 %v2610, %v2613
        %vm2615 = vweird.f32 %v2610
        %v2616 = vsel %vm2615, %v2610, %v2614
        %v2617 = vmul.f32 %v2588, %v2616
        %v2618 = vmul.f32 %v2591, %v2616
        %v2619 = vmul.f32 %v2594, %v2616
        %v2620 = vmul.f32 %v2597, %v2616
        %v2621 = vmul.f32 %v2600, %v2616
        %v2622 = vmul.f32 %v2603, %v2616
        %v2623 = vmul.f32 %v2606, %v2616
        %v2624 = vmul.f32 %v2609, %v2616
        %v2625 = vsub.f32 %v2578, %v2617
        %v2626 = vsub.f32 %v2579, %v2618
        %v2627 = vsub.f32 %v2580, %v2619
        %v2628 = vsub.f32 %v2581, %v2620
        %v2629 = vsub.f32 %v2582, %v2621
        %v2630 = vsub.f32 %v2583, %v2622
        %v2631 = vsub.f32 %v2584, %v2623
        %v2632 = vsub.f32 %v2585, %v2624
        %v2633 = vmul.f32 %v2625, %v2625
        %v2634 = vmul.f32 %v2626, %v2626
        %v2635 = vmul.f32 %v2627, %v2627
        %v2636 = vmul.f32 %v2628, %v2628
        %v2637 = vmul.f32 %v2629, %v2629
        %v2638 = vmul.f32 %v2630, %v2630
        %v2639 = vmul.f32 %v2631, %v2631
        %v2640 = vmul.f32 %v2632, %v2632
        %v2641 = vsel %vm951, %v2633, 0.0
        %2642 = vadd.xlane.f32.xlu0 %v2641
        %v2643 = vpop.xlane.xlu0 %2642
        %v2644 = vsel %vm951, %v2634, 0.0
        %2645 = vadd.xlane.f32.xlu0 %v2644
        %v2646 = vpop.xlane.xlu0 %2645
        %v2647 = vsel %vm951, %v2635, 0.0
        %2648 = vadd.xlane.f32.xlu0 %v2647
        %v2649 = vpop.xlane.xlu0 %2648
        %v2650 = vsel %vm951, %v2636, 0.0
        %2651 = vadd.xlane.f32.xlu0 %v2650
        %v2652 = vpop.xlane.xlu0 %2651
        %v2653 = vsel %vm951, %v2637, 0.0
        %2654 = vadd.xlane.f32.xlu0 %v2653
        %v2655 = vpop.xlane.xlu0 %2654
        %v2656 = vsel %vm951, %v2638, 0.0
        %2657 = vadd.xlane.f32.xlu0 %v2656
        %v2658 = vpop.xlane.xlu0 %2657
        %v2659 = vsel %vm951, %v2639, 0.0
        %2660 = vadd.xlane.f32.xlu0 %v2659
        %v2661 = vpop.xlane.xlu0 %2660
        %v2662 = vsel %vm951, %v2640, 0.0
        %2663 = vadd.xlane.f32.xlu0 %v2662
        %v2664 = vpop.xlane.xlu0 %2663
        %v2665 = vmul.f32 %v2643, %v2616
        %v2666 = vmul.f32 %v2646, %v2616
        %v2667 = vmul.f32 %v2649, %v2616
        %v2668 = vmul.f32 %v2652, %v2616
        %v2669 = vmul.f32 %v2655, %v2616
        %v2670 = vmul.f32 %v2658, %v2616
        %v2671 = vmul.f32 %v2661, %v2616
        %v2672 = vmul.f32 %v2664, %v2616
        %v2673 = vadd.f32 %v2665, 1e-05
        %v2674 = vadd.f32 %v2666, 1e-05
        %v2675 = vadd.f32 %v2667, 1e-05
        %v2676 = vadd.f32 %v2668, 1e-05
        %v2677 = vadd.f32 %v2669, 1e-05
        %v2678 = vadd.f32 %v2670, 1e-05
        %v2679 = vadd.f32 %v2671, 1e-05
        %v2680 = vadd.f32 %v2672, 1e-05
        %v2681 = vrsqrt.pop %v2673
        %v2682 = vmul.f32 %v2681, %v2673
        %v2683 = vmul.f32 %v2682, %v2681
        %v2684 = vmul.f32 0.5, %v2683
        %v2685 = vsub.f32 1.5, %v2684
        %v2686 = vmul.f32 %v2681, %v2685
        %vm2687 = vweird.f32 %v2673
        %vm2688 = vweird.f32 %v2681
        %vm2689 = vmor %vm2687, %vm2688
        %v2690 = vsel %vm2689, %v2681, %v2686
        %v2691 = vrsqrt.pop %v2674
        %v2692 = vmul.f32 %v2691, %v2674
        %v2693 = vmul.f32 %v2692, %v2691
        %v2694 = vmul.f32 0.5, %v2693
        %v2695 = vsub.f32 1.5, %v2694
        %v2696 = vmul.f32 %v2691, %v2695
        %vm2697 = vweird.f32 %v2674
        %vm2698 = vweird.f32 %v2691
        %vm2699 = vmor %vm2697, %vm2698
        %v2700 = vsel %vm2699, %v2691, %v2696
        %v2701 = vrsqrt.pop %v2675
        %v2702 = vmul.f32 %v2701, %v2675
        %v2703 = vmul.f32 %v2702, %v2701
        %v2704 = vmul.f32 0.5, %v2703
        %v2705 = vsub.f32 1.5, %v2704
        %v2706 = vmul.f32 %v2701, %v2705
        %vm2707 = vweird.f32 %v2675
        %vm2708 = vweird.f32 %v2701
        %vm2709 = vmor %vm2707, %vm2708
        %v2710 = vsel %vm2709, %v2701, %v2706
        %v2711 = vrsqrt.pop %v2676
        %v2712 = vmul.f32 %v2711, %v2676
        %v2713 = vmul.f32 %v2712, %v2711
        %v2714 = vmul.f32 0.5, %v2713
        %v2715 = vsub.f32 1.5, %v2714
        %v2716 = vmul.f32 %v2711, %v2715
        %vm2717 = vweird.f32 %v2676
        %vm2718 = vweird.f32 %v2711
        %vm2719 = vmor %vm2717, %vm2718
        %v2720 = vsel %vm2719, %v2711, %v2716
        %v2721 = vrsqrt.pop %v2677
        %v2722 = vmul.f32 %v2721, %v2677
        %v2723 = vmul.f32 %v2722, %v2721
        %v2724 = vmul.f32 0.5, %v2723
        %v2725 = vsub.f32 1.5, %v2724
        %v2726 = vmul.f32 %v2721, %v2725
        %vm2727 = vweird.f32 %v2677
        %vm2728 = vweird.f32 %v2721
        %vm2729 = vmor %vm2727, %vm2728
        %v2730 = vsel %vm2729, %v2721, %v2726
        %v2731 = vrsqrt.pop %v2678
        %v2732 = vmul.f32 %v2731, %v2678
        %v2733 = vmul.f32 %v2732, %v2731
        %v2734 = vmul.f32 0.5, %v2733
        %v2735 = vsub.f32 1.5, %v2734
        %v2736 = vmul.f32 %v2731, %v2735
        %vm2737 = vweird.f32 %v2678
        %vm2738 = vweird.f32 %v2731
        %vm2739 = vmor %vm2737, %vm2738
        %v2740 = vsel %vm2739, %v2731, %v2736
        %v2741 = vrsqrt.pop %v2679
        %v2742 = vmul.f32 %v2741, %v2679
        %v2743 = vmul.f32 %v2742, %v2741
        %v2744 = vmul.f32 0.5, %v2743
        %v2745 = vsub.f32 1.5, %v2744
        %v2746 = vmul.f32 %v2741, %v2745
        %vm2747 = vweird.f32 %v2679
        %vm2748 = vweird.f32 %v2741
        %vm2749 = vmor %vm2747, %vm2748
        %v2750 = vsel %vm2749, %v2741, %v2746
        %v2751 = vrsqrt.pop %v2680
        %v2752 = vmul.f32 %v2751, %v2680
        %v2753 = vmul.f32 %v2752, %v2751
        %v2754 = vmul.f32 0.5, %v2753
        %v2755 = vsub.f32 1.5, %v2754
        %v2756 = vmul.f32 %v2751, %v2755
        %vm2757 = vweird.f32 %v2680
        %vm2758 = vweird.f32 %v2751
        %vm2759 = vmor %vm2757, %vm2758
        %v2760 = vsel %vm2759, %v2751, %v2756
        %v2761 = vmul.f32 %v2625, %v2690
        %v2762 = vmul.f32 %v2626, %v2700
        %v2763 = vmul.f32 %v2627, %v2710
        %v2764 = vmul.f32 %v2628, %v2720
        %v2765 = vmul.f32 %v2629, %v2730
        %v2766 = vmul.f32 %v2630, %v2740
        %v2767 = vmul.f32 %v2631, %v2750
        %v2768 = vmul.f32 %v2632, %v2760
        %v2770 = vperm.slane %v925, 0
        %v2772 = vmul.f32 %v2761, %v2770
        %v2773 = vmul.f32 %v2762, %v2770
        %v2774 = vmul.f32 %v2763, %v2770
        %v2775 = vmul.f32 %v2764, %v2770
        %v2776 = vmul.f32 %v2765, %v2770
        %v2777 = vmul.f32 %v2766, %v2770
        %v2778 = vmul.f32 %v2767, %v2770
        %v2779 = vmul.f32 %v2768, %v2770
        %v2781 = vperm.slane %v926, 0
        %v2783 = vadd.f32 %v2772, %v2781
        %v2784 = vadd.f32 %v2773, %v2781
        %v2785 = vadd.f32 %v2774, %v2781
        %v2786 = vadd.f32 %v2775, %v2781
        %v2787 = vadd.f32 %v2776, %v2781
        %v2788 = vadd.f32 %v2777, %v2781
        %v2789 = vadd.f32 %v2778, %v2781
        %v2790 = vadd.f32 %v2779, %v2781
        %v2791 = vpack.c.bf16 %v2784, %v2783
        %v2792 = vpack.c.bf16 %v2786, %v2785
        %v2793 = vpack.c.bf16 %v2788, %v2787
        %v2794 = vpack.c.bf16 %v2790, %v2789
        %v2795 = vld [vmem:[#allocation10] sm:$0xf]
        %v2796 = vld [vmem:[#allocation10 + $0x4] sm:$0xf]
        %v2797 = vld [vmem:[#allocation10 + $0x8] sm:$0xf]
        %v2798 = vld [vmem:[#allocation10 + $0xc] sm:$0xf]
        %v2799 = vld [vmem:[%s12] sm:$0x1]
        %v2801 = vperm.slane %v2799, 0
        %v2807 = vunpack.c.l.b16 %v2795
        %v2808 = vunpack.c.l.b16 %v2796
        %v2809 = vunpack.c.l.b16 %v2797
        %v2810 = vunpack.c.l.b16 %v2798
        %v2811 = vpack.c.b16 %v2808, %v2807
        %v2812 = vpack.c.b16 %v2810, %v2809
        %v2816 = vsel %vm951, %v2791, 0
        %v2819 = vsel %vm951, %v2792, 0
        %v2822 = vsel %vm951, %v2793, 0
        %v2825 = vsel %vm951, %v2794, 0
        %2827 = vmatpush.bf16.msra.mxu0 0
        %2828 = vmatpush.bf16.msra.mxu0 0
        %2829 = vmatpush.bf16.msra.mxu0 0
        %2830 = vmatpush.bf16.msra.mxu0 0
        %2831 = vmatpush.bf16.msra.mxu0 0
        %2832 = vmatpush.bf16.msra.mxu0 0
        %2833 = vmatpush.bf16.msra.mxu0 %v2812
        %2834 = vmatpush.bf16.msra.mxu0 %v2811
        %2835 = vmatmul.bf16.gmra.mxu0 %v2816
        %v2836 = vpop.f32.mrf.mxu0
        %v2837 = vadd.f32 %v2801, %v2836
        %v2838 = vpop.f32.mrf.mxu0
        %v2839 = vadd.f32 %v2801, %v2838
        %2840 = vmatmul.bf16.gmra.mxu0 %v2819
        %v2841 = vpop.f32.mrf.mxu0
        %v2842 = vadd.f32 %v2801, %v2841
        %v2843 = vpop.f32.mrf.mxu0
        %v2844 = vadd.f32 %v2801, %v2843
        %2845 = vmatmul.bf16.gmra.mxu0 %v2822
        %v2846 = vpop.f32.mrf.mxu0
        %v2847 = vadd.f32 %v2801, %v2846
        %v2848 = vpop.f32.mrf.mxu0
        %v2849 = vadd.f32 %v2801, %v2848
        %2850 = vmatmul.bf16.gmra.mxu0 %v2825
        %v2851 = vpop.f32.mrf.mxu0
        %v2852 = vadd.f32 %v2801, %v2851
        %v2853 = vpop.f32.mrf.mxu0
        %v2854 = vadd.f32 %v2801, %v2853
        %2855 = vdwg.mxu0
        %v2856 = vmax.f32 %v2837, 0.0
        %v2857 = vmax.f32 %v2839, 0.0
        %v2858 = vmax.f32 %v2842, 0.0
        %v2859 = vmax.f32 %v2844, 0.0
        %v2860 = vmax.f32 %v2847, 0.0
        %v2861 = vmax.f32 %v2849, 0.0
        %v2862 = vmax.f32 %v2852, 0.0
        %v2863 = vmax.f32 %v2854, 0.0
        %v2864 = vpack.c.bf16 %v2857, %v2856
        %v2865 = vpack.c.bf16 %v2859, %v2858
        %v2866 = vpack.c.bf16 %v2861, %v2860
        %v2867 = vpack.c.bf16 %v2863, %v2862
        %v2868 = vld [vmem:[%s13] sm:$0xf]
        %v2869 = vld [vmem:[%s13 + $0x4] sm:$0xf]
        %v2870 = vld [vmem:[%s13 + $0x8] sm:$0xf]
        %v2871 = vld [vmem:[%s13 + $0xc] sm:$0xf]
        %v2872 = vld [vmem:[%s13 + $0x10] sm:$0xf]
        %v2873 = vld [vmem:[%s13 + $0x14] sm:$0xf]
        %v2874 = vld [vmem:[%s13 + $0x18] sm:$0xf]
        %v2875 = vld [vmem:[%s13 + $0x1c] sm:$0xf]
        %v2876 = vld [vmem:[%s14] sm:$0x1]
        %v2878 = vperm.slane %v2876, 0
        %v2888 = vunpack.c.l.b16 %v2868
        %v2889 = vunpack.c.l.b16 %v2869
        %v2890 = vunpack.c.l.b16 %v2870
        %v2891 = vunpack.c.l.b16 %v2871
        %v2892 = vunpack.c.l.b16 %v2872
        %v2893 = vunpack.c.l.b16 %v2873
        %v2894 = vunpack.c.l.b16 %v2874
        %v2895 = vunpack.c.l.b16 %v2875
        %v2896 = vpack.c.b16 %v2889, %v2888
        %v2897 = vpack.c.b16 %v2891, %v2890
        %v2898 = vpack.c.b16 %v2893, %v2892
        %v2899 = vpack.c.b16 %v2895, %v2894
        %vm2904 = vcmask 523264
        %v2906 = vsel %vm2904, %v2864, 0
        %v2909 = vsel %vm2904, %v2865, 0
        %v2912 = vsel %vm2904, %v2866, 0
        %v2915 = vsel %vm2904, %v2867, 0
        %2917 = vmatpush.bf16.msra.mxu0 0
        %2918 = vmatpush.bf16.msra.mxu0 0
        %2919 = vmatpush.bf16.msra.mxu0 0
        %2920 = vmatpush.bf16.msra.mxu0 0
        %2921 = vmatpush.bf16.msra.mxu0 %v2899
        %2922 = vmatpush.bf16.msra.mxu0 %v2898
        %2923 = vmatpush.bf16.msra.mxu0 %v2897
        %2924 = vmatpush.bf16.msra.mxu0 %v2896
        %2925 = vmatmul.bf16.gmra.mxu0 %v2906
        %v2926 = vpop.f32.mrf.mxu0
        %v2927 = vadd.f32 %v2878, %v2926
        %v2928 = vpop.f32.mrf.mxu0
        %v2929 = vadd.f32 %v2878, %v2928
        %2930 = vmatmul.bf16.gmra.mxu0 %v2909
        %v2931 = vpop.f32.mrf.mxu0
        %v2932 = vadd.f32 %v2878, %v2931
        %v2933 = vpop.f32.mrf.mxu0
        %v2934 = vadd.f32 %v2878, %v2933
        %2935 = vmatmul.bf16.gmra.mxu0 %v2912
        %v2936 = vpop.f32.mrf.mxu0
        %v2937 = vadd.f32 %v2878, %v2936
        %v2938 = vpop.f32.mrf.mxu0
        %v2939 = vadd.f32 %v2878, %v2938
        %2940 = vmatmul.bf16.gmra.mxu0 %v2915
        %v2941 = vpop.f32.mrf.mxu0
        %v2942 = vadd.f32 %v2878, %v2941
        %v2943 = vpop.f32.mrf.mxu0
        %v2944 = vadd.f32 %v2878, %v2943
        %2945 = vdwg.mxu0
        %v2946 = vadd.f32 %v2783, %v2927
        %v2947 = vadd.f32 %v2784, %v2929
        %v2948 = vadd.f32 %v2785, %v2932
        %v2949 = vadd.f32 %v2786, %v2934
        %v2950 = vadd.f32 %v2787, %v2937
        %v2951 = vadd.f32 %v2788, %v2939
        %v2952 = vadd.f32 %v2789, %v2942
        %v2953 = vadd.f32 %v2790, %v2944
        %v2954 = vsel %vm951, %v2946, 0.0
        %2955 = vadd.xlane.f32.xlu0 %v2954
        %v2956 = vpop.xlane.xlu0 %2955
        %v2957 = vsel %vm951, %v2947, 0.0
        %2958 = vadd.xlane.f32.xlu0 %v2957
        %v2959 = vpop.xlane.xlu0 %2958
        %v2960 = vsel %vm951, %v2948, 0.0
        %2961 = vadd.xlane.f32.xlu0 %v2960
        %v2962 = vpop.xlane.xlu0 %2961
        %v2963 = vsel %vm951, %v2949, 0.0
        %2964 = vadd.xlane.f32.xlu0 %v2963
        %v2965 = vpop.xlane.xlu0 %2964
        %v2966 = vsel %vm951, %v2950, 0.0
        %2967 = vadd.xlane.f32.xlu0 %v2966
        %v2968 = vpop.xlane.xlu0 %2967
        %v2969 = vsel %vm951, %v2951, 0.0
        %2970 = vadd.xlane.f32.xlu0 %v2969
        %v2971 = vpop.xlane.xlu0 %2970
        %v2972 = vsel %vm951, %v2952, 0.0
        %2973 = vadd.xlane.f32.xlu0 %v2972
        %v2974 = vpop.xlane.xlu0 %2973
        %v2975 = vsel %vm951, %v2953, 0.0
        %2976 = vadd.xlane.f32.xlu0 %v2975
        %v2977 = vpop.xlane.xlu0 %2976
        %v2978 = vmul.f32 %v2956, %v2616
        %v2979 = vmul.f32 %v2959, %v2616
        %v2980 = vmul.f32 %v2962, %v2616
        %v2981 = vmul.f32 %v2965, %v2616
        %v2982 = vmul.f32 %v2968, %v2616
        %v2983 = vmul.f32 %v2971, %v2616
        %v2984 = vmul.f32 %v2974, %v2616
        %v2985 = vmul.f32 %v2977, %v2616
        %v2986 = vsub.f32 %v2946, %v2978
        %v2987 = vsub.f32 %v2947, %v2979
        %v2988 = vsub.f32 %v2948, %v2980
        %v2989 = vsub.f32 %v2949, %v2981
        %v2990 = vsub.f32 %v2950, %v2982
        %v2991 = vsub.f32 %v2951, %v2983
        %v2992 = vsub.f32 %v2952, %v2984
        %v2993 = vsub.f32 %v2953, %v2985
        %v2994 = vmul.f32 %v2986, %v2986
        %v2995 = vmul.f32 %v2987, %v2987
        %v2996 = vmul.f32 %v2988, %v2988
        %v2997 = vmul.f32 %v2989, %v2989
        %v2998 = vmul.f32 %v2990, %v2990
        %v2999 = vmul.f32 %v2991, %v2991
        %v3000 = vmul.f32 %v2992, %v2992
        %v3001 = vmul.f32 %v2993, %v2993
        %v3002 = vsel %vm951, %v2994, 0.0
        %3003 = vadd.xlane.f32.xlu0 %v3002
        %v3004 = vpop.xlane.xlu0 %3003
        %v3005 = vsel %vm951, %v2995, 0.0
        %3006 = vadd.xlane.f32.xlu0 %v3005
        %v3007 = vpop.xlane.xlu0 %3006
        %v3008 = vsel %vm951, %v2996, 0.0
        %3009 = vadd.xlane.f32.xlu0 %v3008
        %v3010 = vpop.xlane.xlu0 %3009
        %v3011 = vsel %vm951, %v2997, 0.0
        %3012 = vadd.xlane.f32.xlu0 %v3011
        %v3013 = vpop.xlane.xlu0 %3012
        %v3014 = vsel %vm951, %v2998, 0.0
        %3015 = vadd.xlane.f32.xlu0 %v3014
        %v3016 = vpop.xlane.xlu0 %3015
        %v3017 = vsel %vm951, %v2999, 0.0
        %3018 = vadd.xlane.f32.xlu0 %v3017
        %v3019 = vpop.xlane.xlu0 %3018
        %v3020 = vsel %vm951, %v3000, 0.0
        %3021 = vadd.xlane.f32.xlu0 %v3020
        %v3022 = vpop.xlane.xlu0 %3021
        %v3023 = vsel %vm951, %v3001, 0.0
        %3024 = vadd.xlane.f32.xlu0 %v3023
        %v3025 = vpop.xlane.xlu0 %3024
        %v3026 = vmul.f32 %v3004, %v2616
        %v3027 = vmul.f32 %v3007, %v2616
        %v3028 = vmul.f32 %v3010, %v2616
        %v3029 = vmul.f32 %v3013, %v2616
        %v3030 = vmul.f32 %v3016, %v2616
        %v3031 = vmul.f32 %v3019, %v2616
        %v3032 = vmul.f32 %v3022, %v2616
        %v3033 = vmul.f32 %v3025, %v2616
        %v3034 = vadd.f32 %v3026, 1e-05
        %v3035 = vadd.f32 %v3027, 1e-05
        %v3036 = vadd.f32 %v3028, 1e-05
        %v3037 = vadd.f32 %v3029, 1e-05
        %v3038 = vadd.f32 %v3030, 1e-05
        %v3039 = vadd.f32 %v3031, 1e-05
        %v3040 = vadd.f32 %v3032, 1e-05
        %v3041 = vadd.f32 %v3033, 1e-05
        %v3042 = vrsqrt.pop %v3034
        %v3043 = vmul.f32 %v3042, %v3034
        %v3044 = vmul.f32 %v3043, %v3042
        %v3045 = vmul.f32 0.5, %v3044
        %v3046 = vsub.f32 1.5, %v3045
        %v3047 = vmul.f32 %v3042, %v3046
        %vm3048 = vweird.f32 %v3034
        %vm3049 = vweird.f32 %v3042
        %vm3050 = vmor %vm3048, %vm3049
        %v3051 = vsel %vm3050, %v3042, %v3047
        %v3052 = vrsqrt.pop %v3035
        %v3053 = vmul.f32 %v3052, %v3035
        %v3054 = vmul.f32 %v3053, %v3052
        %v3055 = vmul.f32 0.5, %v3054
        %v3056 = vsub.f32 1.5, %v3055
        %v3057 = vmul.f32 %v3052, %v3056
        %vm3058 = vweird.f32 %v3035
        %vm3059 = vweird.f32 %v3052
        %vm3060 = vmor %vm3058, %vm3059
        %v3061 = vsel %vm3060, %v3052, %v3057
        %v3062 = vrsqrt.pop %v3036
        %v3063 = vmul.f32 %v3062, %v3036
        %v3064 = vmul.f32 %v3063, %v3062
        %v3065 = vmul.f32 0.5, %v3064
        %v3066 = vsub.f32 1.5, %v3065
        %v3067 = vmul.f32 %v3062, %v3066
        %vm3068 = vweird.f32 %v3036
        %vm3069 = vweird.f32 %v3062
        %vm3070 = vmor %vm3068, %vm3069
        %v3071 = vsel %vm3070, %v3062, %v3067
        %v3072 = vrsqrt.pop %v3037
        %v3073 = vmul.f32 %v3072, %v3037
        %v3074 = vmul.f32 %v3073, %v3072
        %v3075 = vmul.f32 0.5, %v3074
        %v3076 = vsub.f32 1.5, %v3075
        %v3077 = vmul.f32 %v3072, %v3076
        %vm3078 = vweird.f32 %v3037
        %vm3079 = vweird.f32 %v3072
        %vm3080 = vmor %vm3078, %vm3079
        %v3081 = vsel %vm3080, %v3072, %v3077
        %v3082 = vrsqrt.pop %v3038
        %v3083 = vmul.f32 %v3082, %v3038
        %v3084 = vmul.f32 %v3083, %v3082
        %v3085 = vmul.f32 0.5, %v3084
        %v3086 = vsub.f32 1.5, %v3085
        %v3087 = vmul.f32 %v3082, %v3086
        %vm3088 = vweird.f32 %v3038
        %vm3089 = vweird.f32 %v3082
        %vm3090 = vmor %vm3088, %vm3089
        %v3091 = vsel %vm3090, %v3082, %v3087
        %v3092 = vrsqrt.pop %v3039
        %v3093 = vmul.f32 %v3092, %v3039
        %v3094 = vmul.f32 %v3093, %v3092
        %v3095 = vmul.f32 0.5, %v3094
        %v3096 = vsub.f32 1.5, %v3095
        %v3097 = vmul.f32 %v3092, %v3096
        %vm3098 = vweird.f32 %v3039
        %vm3099 = vweird.f32 %v3092
        %vm3100 = vmor %vm3098, %vm3099
        %v3101 = vsel %vm3100, %v3092, %v3097
        %v3102 = vrsqrt.pop %v3040
        %v3103 = vmul.f32 %v3102, %v3040
        %v3104 = vmul.f32 %v3103, %v3102
        %v3105 = vmul.f32 0.5, %v3104
        %v3106 = vsub.f32 1.5, %v3105
        %v3107 = vmul.f32 %v3102, %v3106
        %vm3108 = vweird.f32 %v3040
        %vm3109 = vweird.f32 %v3102
        %vm3110 = vmor %vm3108, %vm3109
        %v3111 = vsel %vm3110, %v3102, %v3107
        %v3112 = vrsqrt.pop %v3041
        %v3113 = vmul.f32 %v3112, %v3041
        %v3114 = vmul.f32 %v3113, %v3112
        %v3115 = vmul.f32 0.5, %v3114
        %v3116 = vsub.f32 1.5, %v3115
        %v3117 = vmul.f32 %v3112, %v3116
        %vm3118 = vweird.f32 %v3041
        %vm3119 = vweird.f32 %v3112
        %vm3120 = vmor %vm3118, %vm3119
        %v3121 = vsel %vm3120, %v3112, %v3117
        %v3122 = vmul.f32 %v2986, %v3051
        %v3123 = vmul.f32 %v2987, %v3061
        %v3124 = vmul.f32 %v2988, %v3071
        %v3125 = vmul.f32 %v2989, %v3081
        %v3126 = vmul.f32 %v2990, %v3091
        %v3127 = vmul.f32 %v2991, %v3101
        %v3128 = vmul.f32 %v2992, %v3111
        %v3129 = vmul.f32 %v2993, %v3121
        %v3130 = vmul.f32 %v3122, %v2770
        %v3131 = vmul.f32 %v3123, %v2770
        %v3132 = vmul.f32 %v3124, %v2770
        %v3133 = vmul.f32 %v3125, %v2770
        %v3134 = vmul.f32 %v3126, %v2770
        %v3135 = vmul.f32 %v3127, %v2770
        %v3136 = vmul.f32 %v3128, %v2770
        %v3137 = vmul.f32 %v3129, %v2770
        %v3138 = vadd.f32 %v3130, %v2781
        %v3139 = vadd.f32 %v3131, %v2781
        %v3140 = vadd.f32 %v3132, %v2781
        %v3141 = vadd.f32 %v3133, %v2781
        %v3142 = vadd.f32 %v3134, %v2781
        %v3143 = vadd.f32 %v3135, %v2781
        %v3144 = vadd.f32 %v3136, %v2781
        %v3145 = vadd.f32 %v3137, %v2781
        %s3146 = scalar_lea.vmem [#allocation11], 1
        %v3147 = vld [vmem:[%s3146] sm:$0x1]
        %s3148 = scalar_lea.vmem %s16, 1
        %v3149 = vld [vmem:[%s3148] sm:$0x1]
        %v3150 = vpack.c.bf16 %v3139, %v3138
        %v3151 = vpack.c.bf16 %v3141, %v3140
        %v3152 = vpack.c.bf16 %v3143, %v3142
        %v3153 = vpack.c.bf16 %v3145, %v3144
        %s3154 = scalar_lea.vmem %s3, 16
        %v3155 = vld [vmem:[%s3154] sm:$0xf]
        %v3156 = vld [vmem:[%s3154 + $0x4] sm:$0xf]
        %v3157 = vld [vmem:[%s3154 + $0x8] sm:$0xf]
        %v3158 = vld [vmem:[%s3154 + $0xc] sm:$0xf]
        %s3159 = scalar_lea.vmem %s4, 1
        %v3160 = vld [vmem:[%s3159] sm:$0x1]
        %v3162 = vperm.slane %v3160, 0
        %v3168 = vunpack.c.l.b16 %v3155
        %v3169 = vunpack.c.l.b16 %v3156
        %v3170 = vunpack.c.l.b16 %v3157
        %v3171 = vunpack.c.l.b16 %v3158
        %v3172 = vpack.c.b16 %v3169, %v3168
        %v3173 = vpack.c.b16 %v3171, %v3170
        %v3177 = vsel %vm951, %v3150, 0
        %v3180 = vsel %vm951, %v3151, 0
        %v3183 = vsel %vm951, %v3152, 0
        %v3186 = vsel %vm951, %v3153, 0
        %3188 = vmatpush.bf16.msra.mxu0 0
        %3189 = vmatpush.bf16.msra.mxu0 0
        %3190 = vmatpush.bf16.msra.mxu0 0
        %3191 = vmatpush.bf16.msra.mxu0 0
        %3192 = vmatpush.bf16.msra.mxu0 0
        %3193 = vmatpush.bf16.msra.mxu0 0
        %3194 = vmatpush.bf16.msra.mxu0 %v3173
        %3195 = vmatpush.bf16.msra.mxu0 %v3172
        %3196 = vmatmul.bf16.gmra.mxu0 %v3177
        %v3197 = vpop.f32.mrf.mxu0
        %v3198 = vadd.f32 %v3162, %v3197
        %v3199 = vpop.f32.mrf.mxu0
        %v3200 = vadd.f32 %v3162, %v3199
        %3201 = vmatmul.bf16.gmra.mxu0 %v3180
        %v3202 = vpop.f32.mrf.mxu0
        %v3203 = vadd.f32 %v3162, %v3202
        %v3204 = vpop.f32.mrf.mxu0
        %v3205 = vadd.f32 %v3162, %v3204
        %3206 = vmatmul.bf16.gmra.mxu0 %v3183
        %v3207 = vpop.f32.mrf.mxu0
        %v3208 = vadd.f32 %v3162, %v3207
        %v3209 = vpop.f32.mrf.mxu0
        %v3210 = vadd.f32 %v3162, %v3209
        %3211 = vmatmul.bf16.gmra.mxu0 %v3186
        %v3212 = vpop.f32.mrf.mxu0
        %v3213 = vadd.f32 %v3162, %v3212
        %v3214 = vpop.f32.mrf.mxu0
        %v3215 = vadd.f32 %v3162, %v3214
        %3216 = vdwg.mxu0
        %s3217 = scalar_lea.vmem %s5, 16
        %v3218 = vld [vmem:[%s3217] sm:$0xf]
        %v3219 = vld [vmem:[%s3217 + $0x4] sm:$0xf]
        %v3220 = vld [vmem:[%s3217 + $0x8] sm:$0xf]
        %v3221 = vld [vmem:[%s3217 + $0xc] sm:$0xf]
        %s3222 = scalar_lea.vmem %s6, 1
        %v3223 = vld [vmem:[%s3222] sm:$0x1]
        %v3225 = vperm.slane %v3223, 0
        %v3231 = vunpack.c.l.b16 %v3218
        %v3232 = vunpack.c.l.b16 %v3219
        %v3233 = vunpack.c.l.b16 %v3220
        %v3234 = vunpack.c.l.b16 %v3221
        %v3235 = vpack.c.b16 %v3232, %v3231
        %v3236 = vpack.c.b16 %v3234, %v3233
        %3239 = vmatpush.bf16.msra.mxu0 0
        %3240 = vmatpush.bf16.msra.mxu0 0
        %3241 = vmatpush.bf16.msra.mxu0 0
        %3242 = vmatpush.bf16.msra.mxu0 0
        %3243 = vmatpush.bf16.msra.mxu0 0
        %3244 = vmatpush.bf16.msra.mxu0 0
        %3245 = vmatpush.bf16.msra.mxu0 %v3236
        %3246 = vmatpush.bf16.msra.mxu0 %v3235
        %3247 = vmatmul.bf16.gmra.mxu0 %v3177
        %v3248 = vpop.f32.mrf.mxu0
        %v3249 = vadd.f32 %v3225, %v3248
        %v3250 = vpop.f32.mrf.mxu0
        %v3251 = vadd.f32 %v3225, %v3250
        %3252 = vmatmul.bf16.gmra.mxu0 %v3180
        %v3253 = vpop.f32.mrf.mxu0
        %v3254 = vadd.f32 %v3225, %v3253
        %v3255 = vpop.f32.mrf.mxu0
        %v3256 = vadd.f32 %v3225, %v3255
        %3257 = vmatmul.bf16.gmra.mxu0 %v3183
        %v3258 = vpop.f32.mrf.mxu0
        %v3259 = vadd.f32 %v3225, %v3258
        %v3260 = vpop.f32.mrf.mxu0
        %v3261 = vadd.f32 %v3225, %v3260
        %3262 = vmatmul.bf16.gmra.mxu0 %v3186
        %v3263 = vpop.f32.mrf.mxu0
        %v3264 = vadd.f32 %v3225, %v3263
        %v3265 = vpop.f32.mrf.mxu0
        %v3266 = vadd.f32 %v3225, %v3265
        %3267 = vdwg.mxu0
        %s3268 = scalar_lea.vmem %s7, 16
        %v3269 = vld [vmem:[%s3268] sm:$0xf]
        %v3270 = vld [vmem:[%s3268 + $0x4] sm:$0xf]
        %v3271 = vld [vmem:[%s3268 + $0x8] sm:$0xf]
        %v3272 = vld [vmem:[%s3268 + $0xc] sm:$0xf]
        %s3273 = scalar_lea.vmem %s8, 1
        %v3274 = vld [vmem:[%s3273] sm:$0x1]
        %v3276 = vperm.slane %v3274, 0
        %v3282 = vunpack.c.l.b16 %v3269
        %v3283 = vunpack.c.l.b16 %v3270
        %v3284 = vunpack.c.l.b16 %v3271
        %v3285 = vunpack.c.l.b16 %v3272
        %v3286 = vpack.c.b16 %v3283, %v3282
        %v3287 = vpack.c.b16 %v3285, %v3284
        %3290 = vmatpush.bf16.msra.mxu0 0
        %3291 = vmatpush.bf16.msra.mxu0 0
        %3292 = vmatpush.bf16.msra.mxu0 0
        %3293 = vmatpush.bf16.msra.mxu0 0
        %3294 = vmatpush.bf16.msra.mxu0 0
        %3295 = vmatpush.bf16.msra.mxu0 0
        %3296 = vmatpush.bf16.msra.mxu0 %v3287
        %3297 = vmatpush.bf16.msra.mxu0 %v3286
        %3298 = vmatmul.bf16.gmra.mxu0 %v3177
        %v3299 = vpop.f32.mrf.mxu0
        %v3300 = vadd.f32 %v3276, %v3299
        %v3301 = vpop.f32.mrf.mxu0
        %v3302 = vadd.f32 %v3276, %v3301
        %3303 = vmatmul.bf16.gmra.mxu0 %v3180
        %v3304 = vpop.f32.mrf.mxu0
        %v3305 = vadd.f32 %v3276, %v3304
        %v3306 = vpop.f32.mrf.mxu0
        %v3307 = vadd.f32 %v3276, %v3306
        %3308 = vmatmul.bf16.gmra.mxu0 %v3183
        %v3309 = vpop.f32.mrf.mxu0
        %v3310 = vadd.f32 %v3276, %v3309
        %v3311 = vpop.f32.mrf.mxu0
        %v3312 = vadd.f32 %v3276, %v3311
        %3313 = vmatmul.bf16.gmra.mxu0 %v3186
        %v3314 = vpop.f32.mrf.mxu0
        %v3315 = vadd.f32 %v3276, %v3314
        %v3316 = vpop.f32.mrf.mxu0
        %v3317 = vadd.f32 %v3276, %v3316
        %3318 = vdwg.mxu0
        %s3319 = scalar_lea.vmem [#allocation8], 16
        %v3320 = vld [vmem:[%s3319] sm:$0xf]
        %v3321 = vld [vmem:[%s3319 + $0x4] sm:$0xf]
        %v3322 = vld [vmem:[%s3319 + $0x8] sm:$0xf]
        %v3323 = vld [vmem:[%s3319 + $0xc] sm:$0xf]
        %v3324 = vpack.c.bf16 %v3198, %v3198
        %v3325 = vpack.c.bf16 %v3200, %v3200
        %v3326 = vpack.c.bf16 %v3203, %v3203
        %v3327 = vpack.c.bf16 %v3205, %v3205
        %v3328 = vpack.c.bf16 %v3208, %v3208
        %v3329 = vpack.c.bf16 %v3210, %v3210
        %v3330 = vpack.c.bf16 %v3213, %v3213
        %v3331 = vpack.c.bf16 %v3215, %v3215
        %v3332 = vpack.c.bf16 %v3249, %v3249
        %v3333 = vpack.c.bf16 %v3251, %v3251
        %v3334 = vpack.c.bf16 %v3254, %v3254
        %v3335 = vpack.c.bf16 %v3256, %v3256
        %v3336 = vpack.c.bf16 %v3259, %v3259
        %v3337 = vpack.c.bf16 %v3261, %v3261
        %v3338 = vpack.c.bf16 %v3264, %v3264
        %v3339 = vpack.c.bf16 %v3266, %v3266
        %v3340 = vpack.c.bf16 %v3300, %v3300
        %v3341 = vpack.c.bf16 %v3302, %v3302
        %v3342 = vpack.c.bf16 %v3305, %v3305
        %v3343 = vpack.c.bf16 %v3307, %v3307
        %v3344 = vpack.c.bf16 %v3310, %v3310
        %v3345 = vpack.c.bf16 %v3312, %v3312
        %v3346 = vpack.c.bf16 %v3315, %v3315
        %v3347 = vpack.c.bf16 %v3317, %v3317
        %v3350 = vunpack.c.l.b16 %v3324
        %v3351 = vunpack.c.l.b16 %v3325
        %v3352 = vpack.c.b16 %v3351, %v3350
        %v3355 = vunpack.c.l.b16 %v3332
        %v3356 = vunpack.c.l.b16 %v3333
        %v3357 = vpack.c.b16 %v3356, %v3355
        %v3359 = vsel %vm1129, %v3352, 0
        %v3362 = vsel %vm1129, %v3357, 0
        %3364 = vmatpush.bf16.xpose.msra.mxu0 0
        %3365 = vmatpush.bf16.xpose.msra.mxu0 0
        %3366 = vmatpush.bf16.xpose.msra.mxu0 0
        %3367 = vmatpush.bf16.xpose.msra.mxu0 0
        %3368 = vmatpush.bf16.xpose.msra.mxu0 0
        %3369 = vmatpush.bf16.xpose.msra.mxu0 0
        %3370 = vmatpush.bf16.xpose.msra.mxu0 0
        %3371 = vmatpush.bf16.xpose.msra.mxu0 %v3362
        %3372 = vmatmul.bf16.gmra.mxu0 %v3359
        %v3373 = vpop.f32.mrf.mxu0
        %v3374 = vadd.f32 0.0, %v3373
        %v3375 = vpop.f32.mrf.mxu0
        %v3376 = vadd.f32 0.0, %v3375
        %3377 = vdwg.mxu0
        %v3380 = vunpack.c.l.b16 %v3326
        %v3381 = vunpack.c.l.b16 %v3327
        %v3382 = vpack.c.b16 %v3381, %v3380
        %v3385 = vunpack.c.l.b16 %v3334
        %v3386 = vunpack.c.l.b16 %v3335
        %v3387 = vpack.c.b16 %v3386, %v3385
        %v3389 = vsel %vm1129, %v3382, 0
        %v3392 = vsel %vm1129, %v3387, 0
        %3394 = vmatpush.bf16.xpose.msra.mxu0 0
        %3395 = vmatpush.bf16.xpose.msra.mxu0 0
        %3396 = vmatpush.bf16.xpose.msra.mxu0 0
        %3397 = vmatpush.bf16.xpose.msra.mxu0 0
        %3398 = vmatpush.bf16.xpose.msra.mxu0 0
        %3399 = vmatpush.bf16.xpose.msra.mxu0 0
        %3400 = vmatpush.bf16.xpose.msra.mxu0 0
        %3401 = vmatpush.bf16.xpose.msra.mxu0 %v3392
        %3402 = vmatmul.bf16.gmra.mxu0 %v3389
        %v3403 = vpop.f32.mrf.mxu0
        %v3404 = vadd.f32 0.0, %v3403
        %v3405 = vpop.f32.mrf.mxu0
        %v3406 = vadd.f32 0.0, %v3405
        %3407 = vdwg.mxu0
        %v3410 = vunpack.c.l.b16 %v3328
        %v3411 = vunpack.c.l.b16 %v3329
        %v3412 = vpack.c.b16 %v3411, %v3410
        %v3415 = vunpack.c.l.b16 %v3336
        %v3416 = vunpack.c.l.b16 %v3337
        %v3417 = vpack.c.b16 %v3416, %v3415
        %v3419 = vsel %vm1129, %v3412, 0
        %v3422 = vsel %vm1129, %v3417, 0
        %3424 = vmatpush.bf16.xpose.msra.mxu0 0
        %3425 = vmatpush.bf16.xpose.msra.mxu0 0
        %3426 = vmatpush.bf16.xpose.msra.mxu0 0
        %3427 = vmatpush.bf16.xpose.msra.mxu0 0
        %3428 = vmatpush.bf16.xpose.msra.mxu0 0
        %3429 = vmatpush.bf16.xpose.msra.mxu0 0
        %3430 = vmatpush.bf16.xpose.msra.mxu0 0
        %3431 = vmatpush.bf16.xpose.msra.mxu0 %v3422
        %3432 = vmatmul.bf16.gmra.mxu0 %v3419
        %v3433 = vpop.f32.mrf.mxu0
        %v3434 = vadd.f32 0.0, %v3433
        %v3435 = vpop.f32.mrf.mxu0
        %v3436 = vadd.f32 0.0, %v3435
        %3437 = vdwg.mxu0
        %v3440 = vunpack.c.l.b16 %v3330
        %v3441 = vunpack.c.l.b16 %v3331
        %v3442 = vpack.c.b16 %v3441, %v3440
        %v3445 = vunpack.c.l.b16 %v3338
        %v3446 = vunpack.c.l.b16 %v3339
        %v3447 = vpack.c.b16 %v3446, %v3445
        %v3449 = vsel %vm1129, %v3442, 0
        %v3452 = vsel %vm1129, %v3447, 0
        %3454 = vmatpush.bf16.xpose.msra.mxu0 0
        %3455 = vmatpush.bf16.xpose.msra.mxu0 0
        %3456 = vmatpush.bf16.xpose.msra.mxu0 0
        %3457 = vmatpush.bf16.xpose.msra.mxu0 0
        %3458 = vmatpush.bf16.xpose.msra.mxu0 0
        %3459 = vmatpush.bf16.xpose.msra.mxu0 0
        %3460 = vmatpush.bf16.xpose.msra.mxu0 0
        %3461 = vmatpush.bf16.xpose.msra.mxu0 %v3452
        %3462 = vmatmul.bf16.gmra.mxu0 %v3449
        %v3463 = vpop.f32.mrf.mxu0
        %v3464 = vadd.f32 0.0, %v3463
        %v3465 = vpop.f32.mrf.mxu0
        %v3466 = vadd.f32 0.0, %v3465
        %3467 = vdwg.mxu0
        %v3468 = vmul.f32 %v3374, 0.35355338
        %v3469 = vmul.f32 %v3376, 0.35355338
        %v3470 = vmul.f32 %v3404, 0.35355338
        %v3471 = vmul.f32 %v3406, 0.35355338
        %v3472 = vmul.f32 %v3434, 0.35355338
        %v3473 = vmul.f32 %v3436, 0.35355338
        %v3474 = vmul.f32 %v3464, 0.35355338
        %v3475 = vmul.f32 %v3466, 0.35355338
        %v3476 = vsel %vm1248, %v3468, -inf
        %3477 = vmax.xlane.f32.xlu0 %v3476
        %v3478 = vpop.xlane.xlu0 %3477
        %v3479 = vsel %vm1248, %v3469, -inf
        %3480 = vmax.xlane.f32.xlu0 %v3479
        %v3481 = vpop.xlane.xlu0 %3480
        %v3482 = vsel %vm1248, %v3470, -inf
        %3483 = vmax.xlane.f32.xlu0 %v3482
        %v3484 = vpop.xlane.xlu0 %3483
        %v3485 = vsel %vm1248, %v3471, -inf
        %3486 = vmax.xlane.f32.xlu0 %v3485
        %v3487 = vpop.xlane.xlu0 %3486
        %v3488 = vsel %vm1248, %v3472, -inf
        %3489 = vmax.xlane.f32.xlu0 %v3488
        %v3490 = vpop.xlane.xlu0 %3489
        %v3491 = vsel %vm1248, %v3473, -inf
        %3492 = vmax.xlane.f32.xlu0 %v3491
        %v3493 = vpop.xlane.xlu0 %3492
        %v3494 = vsel %vm1248, %v3474, -inf
        %3495 = vmax.xlane.f32.xlu0 %v3494
        %v3496 = vpop.xlane.xlu0 %3495
        %v3497 = vsel %vm1248, %v3475, -inf
        %3498 = vmax.xlane.f32.xlu0 %v3497
        %v3499 = vpop.xlane.xlu0 %3498
        %v3500 = vsub.f32 %v3468, %v3478
        %v3501 = vsub.f32 %v3469, %v3481
        %v3502 = vsub.f32 %v3470, %v3484
        %v3503 = vsub.f32 %v3471, %v3487
        %v3504 = vsub.f32 %v3472, %v3490
        %v3505 = vsub.f32 %v3473, %v3493
        %v3506 = vsub.f32 %v3474, %v3496
        %v3507 = vsub.f32 %v3475, %v3499
        %v3508 = vmul.f32 %v3500, 1.442695
        %v3509 = vpow.pop %v3508
        %v3510 = vmul.f32 %v3501, 1.442695
        %v3511 = vpow.pop %v3510
        %v3512 = vmul.f32 %v3502, 1.442695
        %v3513 = vpow.pop %v3512
        %v3514 = vmul.f32 %v3503, 1.442695
        %v3515 = vpow.pop %v3514
        %v3516 = vmul.f32 %v3504, 1.442695
        %v3517 = vpow.pop %v3516
        %v3518 = vmul.f32 %v3505, 1.442695
        %v3519 = vpow.pop %v3518
        %v3520 = vmul.f32 %v3506, 1.442695
        %v3521 = vpow.pop %v3520
        %v3522 = vmul.f32 %v3507, 1.442695
        %v3523 = vpow.pop %v3522
        %v3524 = vsel %vm1248, %v3509, 0.0
        %3525 = vadd.xlane.f32.xlu0 %v3524
        %v3526 = vpop.xlane.xlu0 %3525
        %v3527 = vsel %vm1248, %v3511, 0.0
        %3528 = vadd.xlane.f32.xlu0 %v3527
        %v3529 = vpop.xlane.xlu0 %3528
        %v3530 = vsel %vm1248, %v3513, 0.0
        %3531 = vadd.xlane.f32.xlu0 %v3530
        %v3532 = vpop.xlane.xlu0 %3531
        %v3533 = vsel %vm1248, %v3515, 0.0
        %3534 = vadd.xlane.f32.xlu0 %v3533
        %v3535 = vpop.xlane.xlu0 %3534
        %v3536 = vsel %vm1248, %v3517, 0.0
        %3537 = vadd.xlane.f32.xlu0 %v3536
        %v3538 = vpop.xlane.xlu0 %3537
        %v3539 = vsel %vm1248, %v3519, 0.0
        %3540 = vadd.xlane.f32.xlu0 %v3539
        %v3541 = vpop.xlane.xlu0 %3540
        %v3542 = vsel %vm1248, %v3521, 0.0
        %3543 = vadd.xlane.f32.xlu0 %v3542
        %v3544 = vpop.xlane.xlu0 %3543
        %v3545 = vsel %vm1248, %v3523, 0.0
        %3546 = vadd.xlane.f32.xlu0 %v3545
        %v3547 = vpop.xlane.xlu0 %3546
        %v3548 = vrcp.pop %v3526
        %v3549 = vrcp.pop %v3529
        %v3550 = vrcp.pop %v3532
        %v3551 = vrcp.pop %v3535
        %v3552 = vrcp.pop %v3538
        %v3553 = vrcp.pop %v3541
        %v3554 = vrcp.pop %v3544
        %v3555 = vrcp.pop %v3547
        %v3556 = vmul.f32 %v3509, %v3548
        %v3557 = vmul.f32 %v3511, %v3549
        %v3558 = vmul.f32 %v3513, %v3550
        %v3559 = vmul.f32 %v3515, %v3551
        %v3560 = vmul.f32 %v3517, %v3552
        %v3561 = vmul.f32 %v3519, %v3553
        %v3562 = vmul.f32 %v3521, %v3554
        %v3563 = vmul.f32 %v3523, %v3555
        %v3564 = vpack.c.bf16 %v3556, %v3556
        %v3565 = vpack.c.bf16 %v3557, %v3557
        %v3566 = vpack.c.bf16 %v3558, %v3558
        %v3567 = vpack.c.bf16 %v3559, %v3559
        %v3568 = vpack.c.bf16 %v3560, %v3560
        %v3569 = vpack.c.bf16 %v3561, %v3561
        %v3570 = vpack.c.bf16 %v3562, %v3562
        %v3571 = vpack.c.bf16 %v3563, %v3563
        %v3574 = vunpack.c.l.b16 %v3564
        %v3575 = vunpack.c.l.b16 %v3565
        %v3576 = vpack.c.b16 %v3575, %v3574
        %v3579 = vunpack.c.l.b16 %v3340
        %v3580 = vunpack.c.l.b16 %v3341
        %v3581 = vpack.c.b16 %v3580, %v3579
        %v3584 = vsel %vm1248, %v3576, 0
        %3586 = vmatpush.bf16.msra.mxu0 0
        %3587 = vmatpush.bf16.msra.mxu0 0
        %3588 = vmatpush.bf16.msra.mxu0 0
        %3589 = vmatpush.bf16.msra.mxu0 0
        %3590 = vmatpush.bf16.msra.mxu0 0
        %3591 = vmatpush.bf16.msra.mxu0 0
        %3592 = vmatpush.bf16.msra.mxu0 0
        %3593 = vmatpush.bf16.msra.mxu0 %v3581
        %3594 = vmatmul.bf16.gmra.mxu0 %v3584
        %v3595 = vpop.f32.mrf.mxu0
        %v3596 = vadd.f32 0.0, %v3595
        %v3597 = vpop.f32.mrf.mxu0
        %v3598 = vadd.f32 0.0, %v3597
        %3599 = vdwg.mxu0
        %v3602 = vunpack.c.l.b16 %v3566
        %v3603 = vunpack.c.l.b16 %v3567
        %v3604 = vpack.c.b16 %v3603, %v3602
        %v3607 = vunpack.c.l.b16 %v3342
        %v3608 = vunpack.c.l.b16 %v3343
        %v3609 = vpack.c.b16 %v3608, %v3607
        %v3612 = vsel %vm1248, %v3604, 0
        %3614 = vmatpush.bf16.msra.mxu0 0
        %3615 = vmatpush.bf16.msra.mxu0 0
        %3616 = vmatpush.bf16.msra.mxu0 0
        %3617 = vmatpush.bf16.msra.mxu0 0
        %3618 = vmatpush.bf16.msra.mxu0 0
        %3619 = vmatpush.bf16.msra.mxu0 0
        %3620 = vmatpush.bf16.msra.mxu0 0
        %3621 = vmatpush.bf16.msra.mxu0 %v3609
        %3622 = vmatmul.bf16.gmra.mxu0 %v3612
        %v3623 = vpop.f32.mrf.mxu0
        %v3624 = vadd.f32 0.0, %v3623
        %v3625 = vpop.f32.mrf.mxu0
        %v3626 = vadd.f32 0.0, %v3625
        %3627 = vdwg.mxu0
        %v3630 = vunpack.c.l.b16 %v3568
        %v3631 = vunpack.c.l.b16 %v3569
        %v3632 = vpack.c.b16 %v3631, %v3630
        %v3635 = vunpack.c.l.b16 %v3344
        %v3636 = vunpack.c.l.b16 %v3345
        %v3637 = vpack.c.b16 %v3636, %v3635
        %v3640 = vsel %vm1248, %v3632, 0
        %3642 = vmatpush.bf16.msra.mxu0 0
        %3643 = vmatpush.bf16.msra.mxu0 0
        %3644 = vmatpush.bf16.msra.mxu0 0
        %3645 = vmatpush.bf16.msra.mxu0 0
        %3646 = vmatpush.bf16.msra.mxu0 0
        %3647 = vmatpush.bf16.msra.mxu0 0
        %3648 = vmatpush.bf16.msra.mxu0 0
        %3649 = vmatpush.bf16.msra.mxu0 %v3637
        %3650 = vmatmul.bf16.gmra.mxu0 %v3640
        %v3651 = vpop.f32.mrf.mxu0
        %v3652 = vadd.f32 0.0, %v3651
        %v3653 = vpop.f32.mrf.mxu0
        %v3654 = vadd.f32 0.0, %v3653
        %3655 = vdwg.mxu0
        %v3658 = vunpack.c.l.b16 %v3570
        %v3659 = vunpack.c.l.b16 %v3571
        %v3660 = vpack.c.b16 %v3659, %v3658
        %v3663 = vunpack.c.l.b16 %v3346
        %v3664 = vunpack.c.l.b16 %v3347
        %v3665 = vpack.c.b16 %v3664, %v3663
        %v3668 = vsel %vm1248, %v3660, 0
        %3670 = vmatpush.bf16.msra.mxu0 0
        %3671 = vmatpush.bf16.msra.mxu0 0
        %3672 = vmatpush.bf16.msra.mxu0 0
        %3673 = vmatpush.bf16.msra.mxu0 0
        %3674 = vmatpush.bf16.msra.mxu0 0
        %3675 = vmatpush.bf16.msra.mxu0 0
        %3676 = vmatpush.bf16.msra.mxu0 0
        %3677 = vmatpush.bf16.msra.mxu0 %v3665
        %3678 = vmatmul.bf16.gmra.mxu0 %v3668
        %v3679 = vpop.f32.mrf.mxu0
        %v3680 = vadd.f32 0.0, %v3679
        %v3681 = vpop.f32.mrf.mxu0
        %v3682 = vadd.f32 0.0, %v3681
        %3683 = vdwg.mxu0
        %v3684 = vpack.c.bf16 %v3598, %v3596
        %v3685 = vpack.c.bf16 %v3626, %v3624
        %v3686 = vpack.c.bf16 %v3654, %v3652
        %v3687 = vpack.c.bf16 %v3682, %v3680
        %3688 = vrot.lane.b32.xlu0 %v3352, 120
        %v3689 = vpop.permute.xlu0 %3688
        %3690 = vrot.lane.b32.xlu0 %v3357, 120
        %v3691 = vpop.permute.xlu0 %3690
        %v3693 = vsel %vm1129, %v3689, 0
        %v3696 = vsel %vm1129, %v3691, 0
        %3698 = vmatpush.bf16.xpose.msra.mxu0 0
        %3699 = vmatpush.bf16.xpose.msra.mxu0 0
        %3700 = vmatpush.bf16.xpose.msra.mxu0 0
        %3701 = vmatpush.bf16.xpose.msra.mxu0 0
        %3702 = vmatpush.bf16.xpose.msra.mxu0 0
        %3703 = vmatpush.bf16.xpose.msra.mxu0 0
        %3704 = vmatpush.bf16.xpose.msra.mxu0 0
        %3705 = vmatpush.bf16.xpose.msra.mxu0 %v3696
        %3706 = vmatmul.bf16.gmra.mxu0 %v3693
        %v3707 = vpop.f32.mrf.mxu0
        %v3708 = vadd.f32 0.0, %v3707
        %v3709 = vpop.f32.mrf.mxu0
        %v3710 = vadd.f32 0.0, %v3709
        %3711 = vdwg.mxu0
        %3712 = vrot.lane.b32.xlu0 %v3382, 120
        %v3713 = vpop.permute.xlu0 %3712
        %3714 = vrot.lane.b32.xlu0 %v3387, 120
        %v3715 = vpop.permute.xlu0 %3714
        %v3717 = vsel %vm1129, %v3713, 0
        %v3720 = vsel %vm1129, %v3715, 0
        %3722 = vmatpush.bf16.xpose.msra.mxu0 0
        %3723 = vmatpush.bf16.xpose.msra.mxu0 0
        %3724 = vmatpush.bf16.xpose.msra.mxu0 0
        %3725 = vmatpush.bf16.xpose.msra.mxu0 0
        %3726 = vmatpush.bf16.xpose.msra.mxu0 0
        %3727 = vmatpush.bf16.xpose.msra.mxu0 0
        %3728 = vmatpush.bf16.xpose.msra.mxu0 0
        %3729 = vmatpush.bf16.xpose.msra.mxu0 %v3720
        %3730 = vmatmul.bf16.gmra.mxu0 %v3717
        %v3731 = vpop.f32.mrf.mxu0
        %v3732 = vadd.f32 0.0, %v3731
        %v3733 = vpop.f32.mrf.mxu0
        %v3734 = vadd.f32 0.0, %v3733
        %3735 = vdwg.mxu0
        %3736 = vrot.lane.b32.xlu0 %v3412, 120
        %v3737 = vpop.permute.xlu0 %3736
        %3738 = vrot.lane.b32.xlu0 %v3417, 120
        %v3739 = vpop.permute.xlu0 %3738
        %v3741 = vsel %vm1129, %v3737, 0
        %v3744 = vsel %vm1129, %v3739, 0
        %3746 = vmatpush.bf16.xpose.msra.mxu0 0
        %3747 = vmatpush.bf16.xpose.msra.mxu0 0
        %3748 = vmatpush.bf16.xpose.msra.mxu0 0
        %3749 = vmatpush.bf16.xpose.msra.mxu0 0
        %3750 = vmatpush.bf16.xpose.msra.mxu0 0
        %3751 = vmatpush.bf16.xpose.msra.mxu0 0
        %3752 = vmatpush.bf16.xpose.msra.mxu0 0
        %3753 = vmatpush.bf16.xpose.msra.mxu0 %v3744
        %3754 = vmatmul.bf16.gmra.mxu0 %v3741
        %v3755 = vpop.f32.mrf.mxu0
        %v3756 = vadd.f32 0.0, %v3755
        %v3757 = vpop.f32.mrf.mxu0
        %v3758 = vadd.f32 0.0, %v3757
        %3759 = vdwg.mxu0
        %3760 = vrot.lane.b32.xlu0 %v3442, 120
        %v3761 = vpop.permute.xlu0 %3760
        %3762 = vrot.lane.b32.xlu0 %v3447, 120
        %v3763 = vpop.permute.xlu0 %3762
        %v3765 = vsel %vm1129, %v3761, 0
        %v3768 = vsel %vm1129, %v3763, 0
        %3770 = vmatpush.bf16.xpose.msra.mxu0 0
        %3771 = vmatpush.bf16.xpose.msra.mxu0 0
        %3772 = vmatpush.bf16.xpose.msra.mxu0 0
        %3773 = vmatpush.bf16.xpose.msra.mxu0 0
        %3774 = vmatpush.bf16.xpose.msra.mxu0 0
        %3775 = vmatpush.bf16.xpose.msra.mxu0 0
        %3776 = vmatpush.bf16.xpose.msra.mxu0 0
        %3777 = vmatpush.bf16.xpose.msra.mxu0 %v3768
        %3778 = vmatmul.bf16.gmra.mxu0 %v3765
        %v3779 = vpop.f32.mrf.mxu0
        %v3780 = vadd.f32 0.0, %v3779
        %v3781 = vpop.f32.mrf.mxu0
        %v3782 = vadd.f32 0.0, %v3781
        %3783 = vdwg.mxu0
        %v3784 = vmul.f32 %v3708, 0.35355338
        %v3785 = vmul.f32 %v3710, 0.35355338
        %v3786 = vmul.f32 %v3732, 0.35355338
        %v3787 = vmul.f32 %v3734, 0.35355338
        %v3788 = vmul.f32 %v3756, 0.35355338
        %v3789 = vmul.f32 %v3758, 0.35355338
        %v3790 = vmul.f32 %v3780, 0.35355338
        %v3791 = vmul.f32 %v3782, 0.35355338
        %v3792 = vsel %vm1248, %v3784, -inf
        %3793 = vmax.xlane.f32.xlu0 %v3792
        %v3794 = vpop.xlane.xlu0 %3793
        %v3795 = vsel %vm1248, %v3785, -inf
        %3796 = vmax.xlane.f32.xlu0 %v3795
        %v3797 = vpop.xlane.xlu0 %3796
        %v3798 = vsel %vm1248, %v3786, -inf
        %3799 = vmax.xlane.f32.xlu0 %v3798
        %v3800 = vpop.xlane.xlu0 %3799
        %v3801 = vsel %vm1248, %v3787, -inf
        %3802 = vmax.xlane.f32.xlu0 %v3801
        %v3803 = vpop.xlane.xlu0 %3802
        %v3804 = vsel %vm1248, %v3788, -inf
        %3805 = vmax.xlane.f32.xlu0 %v3804
        %v3806 = vpop.xlane.xlu0 %3805
        %v3807 = vsel %vm1248, %v3789, -inf
        %3808 = vmax.xlane.f32.xlu0 %v3807
        %v3809 = vpop.xlane.xlu0 %3808
        %v3810 = vsel %vm1248, %v3790, -inf
        %3811 = vmax.xlane.f32.xlu0 %v3810
        %v3812 = vpop.xlane.xlu0 %3811
        %v3813 = vsel %vm1248, %v3791, -inf
        %3814 = vmax.xlane.f32.xlu0 %v3813
        %v3815 = vpop.xlane.xlu0 %3814
        %v3816 = vsub.f32 %v3784, %v3794
        %v3817 = vsub.f32 %v3785, %v3797
        %v3818 = vsub.f32 %v3786, %v3800
        %v3819 = vsub.f32 %v3787, %v3803
        %v3820 = vsub.f32 %v3788, %v3806
        %v3821 = vsub.f32 %v3789, %v3809
        %v3822 = vsub.f32 %v3790, %v3812
        %v3823 = vsub.f32 %v3791, %v3815
        %v3824 = vmul.f32 %v3816, 1.442695
        %v3825 = vpow.pop %v3824
        %v3826 = vmul.f32 %v3817, 1.442695
        %v3827 = vpow.pop %v3826
        %v3828 = vmul.f32 %v3818, 1.442695
        %v3829 = vpow.pop %v3828
        %v3830 = vmul.f32 %v3819, 1.442695
        %v3831 = vpow.pop %v3830
        %v3832 = vmul.f32 %v3820, 1.442695
        %v3833 = vpow.pop %v3832
        %v3834 = vmul.f32 %v3821, 1.442695
        %v3835 = vpow.pop %v3834
        %v3836 = vmul.f32 %v3822, 1.442695
        %v3837 = vpow.pop %v3836
        %v3838 = vmul.f32 %v3823, 1.442695
        %v3839 = vpow.pop %v3838
        %v3840 = vsel %vm1248, %v3825, 0.0
        %3841 = vadd.xlane.f32.xlu0 %v3840
        %v3842 = vpop.xlane.xlu0 %3841
        %v3843 = vsel %vm1248, %v3827, 0.0
        %3844 = vadd.xlane.f32.xlu0 %v3843
        %v3845 = vpop.xlane.xlu0 %3844
        %v3846 = vsel %vm1248, %v3829, 0.0
        %3847 = vadd.xlane.f32.xlu0 %v3846
        %v3848 = vpop.xlane.xlu0 %3847
        %v3849 = vsel %vm1248, %v3831, 0.0
        %3850 = vadd.xlane.f32.xlu0 %v3849
        %v3851 = vpop.xlane.xlu0 %3850
        %v3852 = vsel %vm1248, %v3833, 0.0
        %3853 = vadd.xlane.f32.xlu0 %v3852
        %v3854 = vpop.xlane.xlu0 %3853
        %v3855 = vsel %vm1248, %v3835, 0.0
        %3856 = vadd.xlane.f32.xlu0 %v3855
        %v3857 = vpop.xlane.xlu0 %3856
        %v3858 = vsel %vm1248, %v3837, 0.0
        %3859 = vadd.xlane.f32.xlu0 %v3858
        %v3860 = vpop.xlane.xlu0 %3859
        %v3861 = vsel %vm1248, %v3839, 0.0
        %3862 = vadd.xlane.f32.xlu0 %v3861
        %v3863 = vpop.xlane.xlu0 %3862
        %v3864 = vrcp.pop %v3842
        %v3865 = vrcp.pop %v3845
        %v3866 = vrcp.pop %v3848
        %v3867 = vrcp.pop %v3851
        %v3868 = vrcp.pop %v3854
        %v3869 = vrcp.pop %v3857
        %v3870 = vrcp.pop %v3860
        %v3871 = vrcp.pop %v3863
        %v3872 = vmul.f32 %v3825, %v3864
        %v3873 = vmul.f32 %v3827, %v3865
        %v3874 = vmul.f32 %v3829, %v3866
        %v3875 = vmul.f32 %v3831, %v3867
        %v3876 = vmul.f32 %v3833, %v3868
        %v3877 = vmul.f32 %v3835, %v3869
        %v3878 = vmul.f32 %v3837, %v3870
        %v3879 = vmul.f32 %v3839, %v3871
        %v3880 = vpack.c.bf16 %v3872, %v3872
        %v3881 = vpack.c.bf16 %v3873, %v3873
        %v3882 = vpack.c.bf16 %v3874, %v3874
        %v3883 = vpack.c.bf16 %v3875, %v3875
        %v3884 = vpack.c.bf16 %v3876, %v3876
        %v3885 = vpack.c.bf16 %v3877, %v3877
        %v3886 = vpack.c.bf16 %v3878, %v3878
        %v3887 = vpack.c.bf16 %v3879, %v3879
        %v3890 = vunpack.c.l.b16 %v3880
        %v3891 = vunpack.c.l.b16 %v3881
        %v3892 = vpack.c.b16 %v3891, %v3890
        %3893 = vrot.lane.b32.xlu0 %v3581, 120
        %v3894 = vpop.permute.xlu0 %3893
        %v3897 = vsel %vm1248, %v3892, 0
        %3899 = vmatpush.bf16.msra.mxu0 0
        %3900 = vmatpush.bf16.msra.mxu0 0
        %3901 = vmatpush.bf16.msra.mxu0 0
        %3902 = vmatpush.bf16.msra.mxu0 0
        %3903 = vmatpush.bf16.msra.mxu0 0
        %3904 = vmatpush.bf16.msra.mxu0 0
        %3905 = vmatpush.bf16.msra.mxu0 0
        %3906 = vmatpush.bf16.msra.mxu0 %v3894
        %3907 = vmatmul.bf16.gmra.mxu0 %v3897
        %v3908 = vpop.f32.mrf.mxu0
        %v3909 = vadd.f32 0.0, %v3908
        %v3910 = vpop.f32.mrf.mxu0
        %v3911 = vadd.f32 0.0, %v3910
        %3912 = vdwg.mxu0
        %v3915 = vunpack.c.l.b16 %v3882
        %v3916 = vunpack.c.l.b16 %v3883
        %v3917 = vpack.c.b16 %v3916, %v3915
        %3918 = vrot.lane.b32.xlu0 %v3609, 120
        %v3919 = vpop.permute.xlu0 %3918
        %v3922 = vsel %vm1248, %v3917, 0
        %3924 = vmatpush.bf16.msra.mxu0 0
        %3925 = vmatpush.bf16.msra.mxu0 0
        %3926 = vmatpush.bf16.msra.mxu0 0
        %3927 = vmatpush.bf16.msra.mxu0 0
        %3928 = vmatpush.bf16.msra.mxu0 0
        %3929 = vmatpush.bf16.msra.mxu0 0
        %3930 = vmatpush.bf16.msra.mxu0 0
        %3931 = vmatpush.bf16.msra.mxu0 %v3919
        %3932 = vmatmul.bf16.gmra.mxu0 %v3922
        %v3933 = vpop.f32.mrf.mxu0
        %v3934 = vadd.f32 0.0, %v3933
        %v3935 = vpop.f32.mrf.mxu0
        %v3936 = vadd.f32 0.0, %v3935
        %3937 = vdwg.mxu0
        %v3940 = vunpack.c.l.b16 %v3884
        %v3941 = vunpack.c.l.b16 %v3885
        %v3942 = vpack.c.b16 %v3941, %v3940
        %3943 = vrot.lane.b32.xlu0 %v3637, 120
        %v3944 = vpop.permute.xlu0 %3943
        %v3947 = vsel %vm1248, %v3942, 0
        %3949 = vmatpush.bf16.msra.mxu0 0
        %3950 = vmatpush.bf16.msra.mxu0 0
        %3951 = vmatpush.bf16.msra.mxu0 0
        %3952 = vmatpush.bf16.msra.mxu0 0
        %3953 = vmatpush.bf16.msra.mxu0 0
        %3954 = vmatpush.bf16.msra.mxu0 0
        %3955 = vmatpush.bf16.msra.mxu0 0
        %3956 = vmatpush.bf16.msra.mxu0 %v3944
        %3957 = vmatmul.bf16.gmra.mxu0 %v3947
        %v3958 = vpop.f32.mrf.mxu0
        %v3959 = vadd.f32 0.0, %v3958
        %v3960 = vpop.f32.mrf.mxu0
        %v3961 = vadd.f32 0.0, %v3960
        %3962 = vdwg.mxu0
        %v3965 = vunpack.c.l.b16 %v3886
        %v3966 = vunpack.c.l.b16 %v3887
        %v3967 = vpack.c.b16 %v3966, %v3965
        %3968 = vrot.lane.b32.xlu0 %v3665, 120
        %v3969 = vpop.permute.xlu0 %3968
        %v3972 = vsel %vm1248, %v3967, 0
        %3974 = vmatpush.bf16.msra.mxu0 0
        %3975 = vmatpush.bf16.msra.mxu0 0
        %3976 = vmatpush.bf16.msra.mxu0 0
        %3977 = vmatpush.bf16.msra.mxu0 0
        %3978 = vmatpush.bf16.msra.mxu0 0
        %3979 = vmatpush.bf16.msra.mxu0 0
        %3980 = vmatpush.bf16.msra.mxu0 0
        %3981 = vmatpush.bf16.msra.mxu0 %v3969
        %3982 = vmatmul.bf16.gmra.mxu0 %v3972
        %v3983 = vpop.f32.mrf.mxu0
        %v3984 = vadd.f32 0.0, %v3983
        %v3985 = vpop.f32.mrf.mxu0
        %v3986 = vadd.f32 0.0, %v3985
        %3987 = vdwg.mxu0
        %v3988 = vpack.c.bf16 %v3911, %v3909
        %v3989 = vpack.c.bf16 %v3936, %v3934
        %v3990 = vpack.c.bf16 %v3961, %v3959
        %v3991 = vpack.c.bf16 %v3986, %v3984
        %v3993 = vsel %vm1129, %v3988, 0
        %v3996 = vsel %vm1129, %v3989, 0
        %v3999 = vsel %vm1129, %v3990, 0
        %v4002 = vsel %vm1129, %v3991, 0
        %v4005 = vsel %vm1777, %v3321, 0
        %4007 = vmatpush.bf16.msra.mxu0 0
        %4008 = vmatpush.bf16.msra.mxu0 0
        %4009 = vmatpush.bf16.msra.mxu0 0
        %4010 = vmatpush.bf16.msra.mxu0 0
        %4011 = vmatpush.bf16.msra.mxu0 0
        %4012 = vmatpush.bf16.msra.mxu0 0
        %4013 = vmatpush.bf16.msra.mxu0 0
        %4014 = vmatpush.bf16.msra.mxu0 %v4005
        %4015 = vmatmul.bf16.gmra.mxu0 %v3993
        %v4016 = vpop.f32.mrf.mxu0
        %v4017 = vadd.f32 0.0, %v4016
        %v4018 = vpop.f32.mrf.mxu0
        %v4019 = vadd.f32 0.0, %v4018
        %4020 = vmatmul.bf16.gmra.mxu0 %v3996
        %v4021 = vpop.f32.mrf.mxu0
        %v4022 = vadd.f32 0.0, %v4021
        %v4023 = vpop.f32.mrf.mxu0
        %v4024 = vadd.f32 0.0, %v4023
        %4025 = vmatmul.bf16.gmra.mxu0 %v3999
        %v4026 = vpop.f32.mrf.mxu0
        %v4027 = vadd.f32 0.0, %v4026
        %v4028 = vpop.f32.mrf.mxu0
        %v4029 = vadd.f32 0.0, %v4028
        %4030 = vmatmul.bf16.gmra.mxu0 %v4002
        %v4031 = vpop.f32.mrf.mxu0
        %v4032 = vadd.f32 0.0, %v4031
        %v4033 = vpop.f32.mrf.mxu0
        %v4034 = vadd.f32 0.0, %v4033
        %4035 = vdwg.mxu0
        %v4037 = vsel %vm1129, %v3684, 0
        %v4040 = vsel %vm1129, %v3685, 0
        %v4043 = vsel %vm1129, %v3686, 0
        %v4046 = vsel %vm1129, %v3687, 0
        %v4049 = vsel %vm1777, %v3320, 0
        %4051 = vmatpush.bf16.msra.mxu0 0
        %4052 = vmatpush.bf16.msra.mxu0 0
        %4053 = vmatpush.bf16.msra.mxu0 0
        %4054 = vmatpush.bf16.msra.mxu0 0
        %4055 = vmatpush.bf16.msra.mxu0 0
        %4056 = vmatpush.bf16.msra.mxu0 0
        %4057 = vmatpush.bf16.msra.mxu0 0
        %4058 = vmatpush.bf16.msra.mxu0 %v4049
        %4059 = vmatmul.bf16.gmra.mxu0 %v4037
        %v4060 = vpop.f32.mrf.mxu0
        %v4061 = vadd.f32 %v4017, %v4060
        %v4062 = vpop.f32.mrf.mxu0
        %v4063 = vadd.f32 %v4019, %v4062
        %4064 = vmatmul.bf16.gmra.mxu0 %v4040
        %v4065 = vpop.f32.mrf.mxu0
        %v4066 = vadd.f32 %v4022, %v4065
        %v4067 = vpop.f32.mrf.mxu0
        %v4068 = vadd.f32 %v4024, %v4067
        %4069 = vmatmul.bf16.gmra.mxu0 %v4043
        %v4070 = vpop.f32.mrf.mxu0
        %v4071 = vadd.f32 %v4027, %v4070
        %v4072 = vpop.f32.mrf.mxu0
        %v4073 = vadd.f32 %v4029, %v4072
        %4074 = vmatmul.bf16.gmra.mxu0 %v4046
        %v4075 = vpop.f32.mrf.mxu0
        %v4076 = vadd.f32 %v4032, %v4075
        %v4077 = vpop.f32.mrf.mxu0
        %v4078 = vadd.f32 %v4034, %v4077
        %4079 = vdwg.mxu0
        %4080 = vrot.lane.b32.xlu0 %v3352, 112
        %v4081 = vpop.permute.xlu0 %4080
        %4082 = vrot.lane.b32.xlu0 %v3357, 112
        %v4083 = vpop.permute.xlu0 %4082
        %v4085 = vsel %vm1129, %v4081, 0
        %v4088 = vsel %vm1129, %v4083, 0
        %4090 = vmatpush.bf16.xpose.msra.mxu0 0
        %4091 = vmatpush.bf16.xpose.msra.mxu0 0
        %4092 = vmatpush.bf16.xpose.msra.mxu0 0
        %4093 = vmatpush.bf16.xpose.msra.mxu0 0
        %4094 = vmatpush.bf16.xpose.msra.mxu0 0
        %4095 = vmatpush.bf16.xpose.msra.mxu0 0
        %4096 = vmatpush.bf16.xpose.msra.mxu0 0
        %4097 = vmatpush.bf16.xpose.msra.mxu0 %v4088
        %4098 = vmatmul.bf16.gmra.mxu0 %v4085
        %v4099 = vpop.f32.mrf.mxu0
        %v4100 = vadd.f32 0.0, %v4099
        %v4101 = vpop.f32.mrf.mxu0
        %v4102 = vadd.f32 0.0, %v4101
        %4103 = vdwg.mxu0
        %4104 = vrot.lane.b32.xlu0 %v3382, 112
        %v4105 = vpop.permute.xlu0 %4104
        %4106 = vrot.lane.b32.xlu0 %v3387, 112
        %v4107 = vpop.permute.xlu0 %4106
        %v4109 = vsel %vm1129, %v4105, 0
        %v4112 = vsel %vm1129, %v4107, 0
        %4114 = vmatpush.bf16.xpose.msra.mxu0 0
        %4115 = vmatpush.bf16.xpose.msra.mxu0 0
        %4116 = vmatpush.bf16.xpose.msra.mxu0 0
        %4117 = vmatpush.bf16.xpose.msra.mxu0 0
        %4118 = vmatpush.bf16.xpose.msra.mxu0 0
        %4119 = vmatpush.bf16.xpose.msra.mxu0 0
        %4120 = vmatpush.bf16.xpose.msra.mxu0 0
        %4121 = vmatpush.bf16.xpose.msra.mxu0 %v4112
        %4122 = vmatmul.bf16.gmra.mxu0 %v4109
        %v4123 = vpop.f32.mrf.mxu0
        %v4124 = vadd.f32 0.0, %v4123
        %v4125 = vpop.f32.mrf.mxu0
        %v4126 = vadd.f32 0.0, %v4125
        %4127 = vdwg.mxu0
        %4128 = vrot.lane.b32.xlu0 %v3412, 112
        %v4129 = vpop.permute.xlu0 %4128
        %4130 = vrot.lane.b32.xlu0 %v3417, 112
        %v4131 = vpop.permute.xlu0 %4130
        %v4133 = vsel %vm1129, %v4129, 0
        %v4136 = vsel %vm1129, %v4131, 0
        %4138 = vmatpush.bf16.xpose.msra.mxu0 0
        %4139 = vmatpush.bf16.xpose.msra.mxu0 0
        %4140 = vmatpush.bf16.xpose.msra.mxu0 0
        %4141 = vmatpush.bf16.xpose.msra.mxu0 0
        %4142 = vmatpush.bf16.xpose.msra.mxu0 0
        %4143 = vmatpush.bf16.xpose.msra.mxu0 0
        %4144 = vmatpush.bf16.xpose.msra.mxu0 0
        %4145 = vmatpush.bf16.xpose.msra.mxu0 %v4136
        %4146 = vmatmul.bf16.gmra.mxu0 %v4133
        %v4147 = vpop.f32.mrf.mxu0
        %v4148 = vadd.f32 0.0, %v4147
        %v4149 = vpop.f32.mrf.mxu0
        %v4150 = vadd.f32 0.0, %v4149
        %4151 = vdwg.mxu0
        %4152 = vrot.lane.b32.xlu0 %v3442, 112
        %v4153 = vpop.permute.xlu0 %4152
        %4154 = vrot.lane.b32.xlu0 %v3447, 112
        %v4155 = vpop.permute.xlu0 %4154
        %v4157 = vsel %vm1129, %v4153, 0
        %v4160 = vsel %vm1129, %v4155, 0
        %4162 = vmatpush.bf16.xpose.msra.mxu0 0
        %4163 = vmatpush.bf16.xpose.msra.mxu0 0
        %4164 = vmatpush.bf16.xpose.msra.mxu0 0
        %4165 = vmatpush.bf16.xpose.msra.mxu0 0
        %4166 = vmatpush.bf16.xpose.msra.mxu0 0
        %4167 = vmatpush.bf16.xpose.msra.mxu0 0
        %4168 = vmatpush.bf16.xpose.msra.mxu0 0
        %4169 = vmatpush.bf16.xpose.msra.mxu0 %v4160
        %4170 = vmatmul.bf16.gmra.mxu0 %v4157
        %v4171 = vpop.f32.mrf.mxu0
        %v4172 = vadd.f32 0.0, %v4171
        %v4173 = vpop.f32.mrf.mxu0
        %v4174 = vadd.f32 0.0, %v4173
        %4175 = vdwg.mxu0
        %v4176 = vmul.f32 %v4100, 0.35355338
        %v4177 = vmul.f32 %v4102, 0.35355338
        %v4178 = vmul.f32 %v4124, 0.35355338
        %v4179 = vmul.f32 %v4126, 0.35355338
        %v4180 = vmul.f32 %v4148, 0.35355338
        %v4181 = vmul.f32 %v4150, 0.35355338
        %v4182 = vmul.f32 %v4172, 0.35355338
        %v4183 = vmul.f32 %v4174, 0.35355338
        %v4184 = vsel %vm1248, %v4176, -inf
        %4185 = vmax.xlane.f32.xlu0 %v4184
        %v4186 = vpop.xlane.xlu0 %4185
        %v4187 = vsel %vm1248, %v4177, -inf
        %4188 = vmax.xlane.f32.xlu0 %v4187
        %v4189 = vpop.xlane.xlu0 %4188
        %v4190 = vsel %vm1248, %v4178, -inf
        %4191 = vmax.xlane.f32.xlu0 %v4190
        %v4192 = vpop.xlane.xlu0 %4191
        %v4193 = vsel %vm1248, %v4179, -inf
        %4194 = vmax.xlane.f32.xlu0 %v4193
        %v4195 = vpop.xlane.xlu0 %4194
        %v4196 = vsel %vm1248, %v4180, -inf
        %4197 = vmax.xlane.f32.xlu0 %v4196
        %v4198 = vpop.xlane.xlu0 %4197
        %v4199 = vsel %vm1248, %v4181, -inf
        %4200 = vmax.xlane.f32.xlu0 %v4199
        %v4201 = vpop.xlane.xlu0 %4200
        %v4202 = vsel %vm1248, %v4182, -inf
        %4203 = vmax.xlane.f32.xlu0 %v4202
        %v4204 = vpop.xlane.xlu0 %4203
        %v4205 = vsel %vm1248, %v4183, -inf
        %4206 = vmax.xlane.f32.xlu0 %v4205
        %v4207 = vpop.xlane.xlu0 %4206
        %v4208 = vsub.f32 %v4176, %v4186
        %v4209 = vsub.f32 %v4177, %v4189
        %v4210 = vsub.f32 %v4178, %v4192
        %v4211 = vsub.f32 %v4179, %v4195
        %v4212 = vsub.f32 %v4180, %v4198
        %v4213 = vsub.f32 %v4181, %v4201
        %v4214 = vsub.f32 %v4182, %v4204
        %v4215 = vsub.f32 %v4183, %v4207
        %v4216 = vmul.f32 %v4208, 1.442695
        %v4217 = vpow.pop %v4216
        %v4218 = vmul.f32 %v4209, 1.442695
        %v4219 = vpow.pop %v4218
        %v4220 = vmul.f32 %v4210, 1.442695
        %v4221 = vpow.pop %v4220
        %v4222 = vmul.f32 %v4211, 1.442695
        %v4223 = vpow.pop %v4222
        %v4224 = vmul.f32 %v4212, 1.442695
        %v4225 = vpow.pop %v4224
        %v4226 = vmul.f32 %v4213, 1.442695
        %v4227 = vpow.pop %v4226
        %v4228 = vmul.f32 %v4214, 1.442695
        %v4229 = vpow.pop %v4228
        %v4230 = vmul.f32 %v4215, 1.442695
        %v4231 = vpow.pop %v4230
        %v4232 = vsel %vm1248, %v4217, 0.0
        %4233 = vadd.xlane.f32.xlu0 %v4232
        %v4234 = vpop.xlane.xlu0 %4233
        %v4235 = vsel %vm1248, %v4219, 0.0
        %4236 = vadd.xlane.f32.xlu0 %v4235
        %v4237 = vpop.xlane.xlu0 %4236
        %v4238 = vsel %vm1248, %v4221, 0.0
        %4239 = vadd.xlane.f32.xlu0 %v4238
        %v4240 = vpop.xlane.xlu0 %4239
        %v4241 = vsel %vm1248, %v4223, 0.0
        %4242 = vadd.xlane.f32.xlu0 %v4241
        %v4243 = vpop.xlane.xlu0 %4242
        %v4244 = vsel %vm1248, %v4225, 0.0
        %4245 = vadd.xlane.f32.xlu0 %v4244
        %v4246 = vpop.xlane.xlu0 %4245
        %v4247 = vsel %vm1248, %v4227, 0.0
        %4248 = vadd.xlane.f32.xlu0 %v4247
        %v4249 = vpop.xlane.xlu0 %4248
        %v4250 = vsel %vm1248, %v4229, 0.0
        %4251 = vadd.xlane.f32.xlu0 %v4250
        %v4252 = vpop.xlane.xlu0 %4251
        %v4253 = vsel %vm1248, %v4231, 0.0
        %4254 = vadd.xlane.f32.xlu0 %v4253
        %v4255 = vpop.xlane.xlu0 %4254
        %v4256 = vrcp.pop %v4234
        %v4257 = vrcp.pop %v4237
        %v4258 = vrcp.pop %v4240
        %v4259 = vrcp.pop %v4243
        %v4260 = vrcp.pop %v4246
        %v4261 = vrcp.pop %v4249
        %v4262 = vrcp.pop %v4252
        %v4263 = vrcp.pop %v4255
        %v4264 = vmul.f32 %v4217, %v4256
        %v4265 = vmul.f32 %v4219, %v4257
        %v4266 = vmul.f32 %v4221, %v4258
        %v4267 = vmul.f32 %v4223, %v4259
        %v4268 = vmul.f32 %v4225, %v4260
        %v4269 = vmul.f32 %v4227, %v4261
        %v4270 = vmul.f32 %v4229, %v4262
        %v4271 = vmul.f32 %v4231, %v4263
        %v4272 = vpack.c.bf16 %v4264, %v4264
        %v4273 = vpack.c.bf16 %v4265, %v4265
        %v4274 = vpack.c.bf16 %v4266, %v4266
        %v4275 = vpack.c.bf16 %v4267, %v4267
        %v4276 = vpack.c.bf16 %v4268, %v4268
        %v4277 = vpack.c.bf16 %v4269, %v4269
        %v4278 = vpack.c.bf16 %v4270, %v4270
        %v4279 = vpack.c.bf16 %v4271, %v4271
        %v4282 = vunpack.c.l.b16 %v4272
        %v4283 = vunpack.c.l.b16 %v4273
        %v4284 = vpack.c.b16 %v4283, %v4282
        %4285 = vrot.lane.b32.xlu0 %v3581, 112
        %v4286 = vpop.permute.xlu0 %4285
        %v4289 = vsel %vm1248, %v4284, 0
        %4291 = vmatpush.bf16.msra.mxu0 0
        %4292 = vmatpush.bf16.msra.mxu0 0
        %4293 = vmatpush.bf16.msra.mxu0 0
        %4294 = vmatpush.bf16.msra.mxu0 0
        %4295 = vmatpush.bf16.msra.mxu0 0
        %4296 = vmatpush.bf16.msra.mxu0 0
        %4297 = vmatpush.bf16.msra.mxu0 0
        %4298 = vmatpush.bf16.msra.mxu0 %v4286
        %4299 = vmatmul.bf16.gmra.mxu0 %v4289
        %v4300 = vpop.f32.mrf.mxu0
        %v4301 = vadd.f32 0.0, %v4300
        %v4302 = vpop.f32.mrf.mxu0
        %v4303 = vadd.f32 0.0, %v4302
        %4304 = vdwg.mxu0
        %v4307 = vunpack.c.l.b16 %v4274
        %v4308 = vunpack.c.l.b16 %v4275
        %v4309 = vpack.c.b16 %v4308, %v4307
        %4310 = vrot.lane.b32.xlu0 %v3609, 112
        %v4311 = vpop.permute.xlu0 %4310
        %v4314 = vsel %vm1248, %v4309, 0
        %4316 = vmatpush.bf16.msra.mxu0 0
        %4317 = vmatpush.bf16.msra.mxu0 0
        %4318 = vmatpush.bf16.msra.mxu0 0
        %4319 = vmatpush.bf16.msra.mxu0 0
        %4320 = vmatpush.bf16.msra.mxu0 0
        %4321 = vmatpush.bf16.msra.mxu0 0
        %4322 = vmatpush.bf16.msra.mxu0 0
        %4323 = vmatpush.bf16.msra.mxu0 %v4311
        %4324 = vmatmul.bf16.gmra.mxu0 %v4314
        %v4325 = vpop.f32.mrf.mxu0
        %v4326 = vadd.f32 0.0, %v4325
        %v4327 = vpop.f32.mrf.mxu0
        %v4328 = vadd.f32 0.0, %v4327
        %4329 = vdwg.mxu0
        %v4332 = vunpack.c.l.b16 %v4276
        %v4333 = vunpack.c.l.b16 %v4277
        %v4334 = vpack.c.b16 %v4333, %v4332
        %4335 = vrot.lane.b32.xlu0 %v3637, 112
        %v4336 = vpop.permute.xlu0 %4335
        %v4339 = vsel %vm1248, %v4334, 0
        %4341 = vmatpush.bf16.msra.mxu0 0
        %4342 = vmatpush.bf16.msra.mxu0 0
        %4343 = vmatpush.bf16.msra.mxu0 0
        %4344 = vmatpush.bf16.msra.mxu0 0
        %4345 = vmatpush.bf16.msra.mxu0 0
        %4346 = vmatpush.bf16.msra.mxu0 0
        %4347 = vmatpush.bf16.msra.mxu0 0
        %4348 = vmatpush.bf16.msra.mxu0 %v4336
        %4349 = vmatmul.bf16.gmra.mxu0 %v4339
        %v4350 = vpop.f32.mrf.mxu0
        %v4351 = vadd.f32 0.0, %v4350
        %v4352 = vpop.f32.mrf.mxu0
        %v4353 = vadd.f32 0.0, %v4352
        %4354 = vdwg.mxu0
        %v4357 = vunpack.c.l.b16 %v4278
        %v4358 = vunpack.c.l.b16 %v4279
        %v4359 = vpack.c.b16 %v4358, %v4357
        %4360 = vrot.lane.b32.xlu0 %v3665, 112
        %v4361 = vpop.permute.xlu0 %4360
        %v4364 = vsel %vm1248, %v4359, 0
        %4366 = vmatpush.bf16.msra.mxu0 0
        %4367 = vmatpush.bf16.msra.mxu0 0
        %4368 = vmatpush.bf16.msra.mxu0 0
        %4369 = vmatpush.bf16.msra.mxu0 0
        %4370 = vmatpush.bf16.msra.mxu0 0
        %4371 = vmatpush.bf16.msra.mxu0 0
        %4372 = vmatpush.bf16.msra.mxu0 0
        %4373 = vmatpush.bf16.msra.mxu0 %v4361
        %4374 = vmatmul.bf16.gmra.mxu0 %v4364
        %v4375 = vpop.f32.mrf.mxu0
        %v4376 = vadd.f32 0.0, %v4375
        %v4377 = vpop.f32.mrf.mxu0
        %v4378 = vadd.f32 0.0, %v4377
        %4379 = vdwg.mxu0
        %v4380 = vpack.c.bf16 %v4303, %v4301
        %v4381 = vpack.c.bf16 %v4328, %v4326
        %v4382 = vpack.c.bf16 %v4353, %v4351
        %v4383 = vpack.c.bf16 %v4378, %v4376
        %v4385 = vsel %vm1129, %v4380, 0
        %v4388 = vsel %vm1129, %v4381, 0
        %v4391 = vsel %vm1129, %v4382, 0
        %v4394 = vsel %vm1129, %v4383, 0
        %v4397 = vsel %vm1777, %v3322, 0
        %4399 = vmatpush.bf16.msra.mxu0 0
        %4400 = vmatpush.bf16.msra.mxu0 0
        %4401 = vmatpush.bf16.msra.mxu0 0
        %4402 = vmatpush.bf16.msra.mxu0 0
        %4403 = vmatpush.bf16.msra.mxu0 0
        %4404 = vmatpush.bf16.msra.mxu0 0
        %4405 = vmatpush.bf16.msra.mxu0 0
        %4406 = vmatpush.bf16.msra.mxu0 %v4397
        %4407 = vmatmul.bf16.gmra.mxu0 %v4385
        %v4408 = vpop.f32.mrf.mxu0
        %v4409 = vadd.f32 0.0, %v4408
        %v4410 = vpop.f32.mrf.mxu0
        %v4411 = vadd.f32 0.0, %v4410
        %4412 = vmatmul.bf16.gmra.mxu0 %v4388
        %v4413 = vpop.f32.mrf.mxu0
        %v4414 = vadd.f32 0.0, %v4413
        %v4415 = vpop.f32.mrf.mxu0
        %v4416 = vadd.f32 0.0, %v4415
        %4417 = vmatmul.bf16.gmra.mxu0 %v4391
        %v4418 = vpop.f32.mrf.mxu0
        %v4419 = vadd.f32 0.0, %v4418
        %v4420 = vpop.f32.mrf.mxu0
        %v4421 = vadd.f32 0.0, %v4420
        %4422 = vmatmul.bf16.gmra.mxu0 %v4394
        %v4423 = vpop.f32.mrf.mxu0
        %v4424 = vadd.f32 0.0, %v4423
        %v4425 = vpop.f32.mrf.mxu0
        %v4426 = vadd.f32 0.0, %v4425
        %4427 = vdwg.mxu0
        %v4428 = vadd.f32 %v4061, %v4409
        %v4429 = vadd.f32 %v4063, %v4411
        %v4430 = vadd.f32 %v4066, %v4414
        %v4431 = vadd.f32 %v4068, %v4416
        %v4432 = vadd.f32 %v4071, %v4419
        %v4433 = vadd.f32 %v4073, %v4421
        %v4434 = vadd.f32 %v4076, %v4424
        %v4435 = vadd.f32 %v4078, %v4426
        %4436 = vrot.lane.b32.xlu0 %v3352, 104
        %v4437 = vpop.permute.xlu0 %4436
        %4438 = vrot.lane.b32.xlu0 %v3357, 104
        %v4439 = vpop.permute.xlu0 %4438
        %v4441 = vsel %vm1129, %v4437, 0
        %v4444 = vsel %vm1129, %v4439, 0
        %4446 = vmatpush.bf16.xpose.msra.mxu0 0
        %4447 = vmatpush.bf16.xpose.msra.mxu0 0
        %4448 = vmatpush.bf16.xpose.msra.mxu0 0
        %4449 = vmatpush.bf16.xpose.msra.mxu0 0
        %4450 = vmatpush.bf16.xpose.msra.mxu0 0
        %4451 = vmatpush.bf16.xpose.msra.mxu0 0
        %4452 = vmatpush.bf16.xpose.msra.mxu0 0
        %4453 = vmatpush.bf16.xpose.msra.mxu0 %v4444
        %4454 = vmatmul.bf16.gmra.mxu0 %v4441
        %v4455 = vpop.f32.mrf.mxu0
        %v4456 = vadd.f32 0.0, %v4455
        %v4457 = vpop.f32.mrf.mxu0
        %v4458 = vadd.f32 0.0, %v4457
        %4459 = vdwg.mxu0
        %4460 = vrot.lane.b32.xlu0 %v3382, 104
        %v4461 = vpop.permute.xlu0 %4460
        %4462 = vrot.lane.b32.xlu0 %v3387, 104
        %v4463 = vpop.permute.xlu0 %4462
        %v4465 = vsel %vm1129, %v4461, 0
        %v4468 = vsel %vm1129, %v4463, 0
        %4470 = vmatpush.bf16.xpose.msra.mxu0 0
        %4471 = vmatpush.bf16.xpose.msra.mxu0 0
        %4472 = vmatpush.bf16.xpose.msra.mxu0 0
        %4473 = vmatpush.bf16.xpose.msra.mxu0 0
        %4474 = vmatpush.bf16.xpose.msra.mxu0 0
        %4475 = vmatpush.bf16.xpose.msra.mxu0 0
        %4476 = vmatpush.bf16.xpose.msra.mxu0 0
        %4477 = vmatpush.bf16.xpose.msra.mxu0 %v4468
        %4478 = vmatmul.bf16.gmra.mxu0 %v4465
        %v4479 = vpop.f32.mrf.mxu0
        %v4480 = vadd.f32 0.0, %v4479
        %v4481 = vpop.f32.mrf.mxu0
        %v4482 = vadd.f32 0.0, %v4481
        %4483 = vdwg.mxu0
        %4484 = vrot.lane.b32.xlu0 %v3412, 104
        %v4485 = vpop.permute.xlu0 %4484
        %4486 = vrot.lane.b32.xlu0 %v3417, 104
        %v4487 = vpop.permute.xlu0 %4486
        %v4489 = vsel %vm1129, %v4485, 0
        %v4492 = vsel %vm1129, %v4487, 0
        %4494 = vmatpush.bf16.xpose.msra.mxu0 0
        %4495 = vmatpush.bf16.xpose.msra.mxu0 0
        %4496 = vmatpush.bf16.xpose.msra.mxu0 0
        %4497 = vmatpush.bf16.xpose.msra.mxu0 0
        %4498 = vmatpush.bf16.xpose.msra.mxu0 0
        %4499 = vmatpush.bf16.xpose.msra.mxu0 0
        %4500 = vmatpush.bf16.xpose.msra.mxu0 0
        %4501 = vmatpush.bf16.xpose.msra.mxu0 %v4492
        %4502 = vmatmul.bf16.gmra.mxu0 %v4489
        %v4503 = vpop.f32.mrf.mxu0
        %v4504 = vadd.f32 0.0, %v4503
        %v4505 = vpop.f32.mrf.mxu0
        %v4506 = vadd.f32 0.0, %v4505
        %4507 = vdwg.mxu0
        %4508 = vrot.lane.b32.xlu0 %v3442, 104
        %v4509 = vpop.permute.xlu0 %4508
        %4510 = vrot.lane.b32.xlu0 %v3447, 104
        %v4511 = vpop.permute.xlu0 %4510
        %v4513 = vsel %vm1129, %v4509, 0
        %v4516 = vsel %vm1129, %v4511, 0
        %4518 = vmatpush.bf16.xpose.msra.mxu0 0
        %4519 = vmatpush.bf16.xpose.msra.mxu0 0
        %4520 = vmatpush.bf16.xpose.msra.mxu0 0
        %4521 = vmatpush.bf16.xpose.msra.mxu0 0
        %4522 = vmatpush.bf16.xpose.msra.mxu0 0
        %4523 = vmatpush.bf16.xpose.msra.mxu0 0
        %4524 = vmatpush.bf16.xpose.msra.mxu0 0
        %4525 = vmatpush.bf16.xpose.msra.mxu0 %v4516
        %4526 = vmatmul.bf16.gmra.mxu0 %v4513
        %v4527 = vpop.f32.mrf.mxu0
        %v4528 = vadd.f32 0.0, %v4527
        %v4529 = vpop.f32.mrf.mxu0
        %v4530 = vadd.f32 0.0, %v4529
        %4531 = vdwg.mxu0
        %v4532 = vmul.f32 %v4456, 0.35355338
        %v4533 = vmul.f32 %v4458, 0.35355338
        %v4534 = vmul.f32 %v4480, 0.35355338
        %v4535 = vmul.f32 %v4482, 0.35355338
        %v4536 = vmul.f32 %v4504, 0.35355338
        %v4537 = vmul.f32 %v4506, 0.35355338
        %v4538 = vmul.f32 %v4528, 0.35355338
        %v4539 = vmul.f32 %v4530, 0.35355338
        %v4540 = vsel %vm1248, %v4532, -inf
        %4541 = vmax.xlane.f32.xlu0 %v4540
        %v4542 = vpop.xlane.xlu0 %4541
        %v4543 = vsel %vm1248, %v4533, -inf
        %4544 = vmax.xlane.f32.xlu0 %v4543
        %v4545 = vpop.xlane.xlu0 %4544
        %v4546 = vsel %vm1248, %v4534, -inf
        %4547 = vmax.xlane.f32.xlu0 %v4546
        %v4548 = vpop.xlane.xlu0 %4547
        %v4549 = vsel %vm1248, %v4535, -inf
        %4550 = vmax.xlane.f32.xlu0 %v4549
        %v4551 = vpop.xlane.xlu0 %4550
        %v4552 = vsel %vm1248, %v4536, -inf
        %4553 = vmax.xlane.f32.xlu0 %v4552
        %v4554 = vpop.xlane.xlu0 %4553
        %v4555 = vsel %vm1248, %v4537, -inf
        %4556 = vmax.xlane.f32.xlu0 %v4555
        %v4557 = vpop.xlane.xlu0 %4556
        %v4558 = vsel %vm1248, %v4538, -inf
        %4559 = vmax.xlane.f32.xlu0 %v4558
        %v4560 = vpop.xlane.xlu0 %4559
        %v4561 = vsel %vm1248, %v4539, -inf
        %4562 = vmax.xlane.f32.xlu0 %v4561
        %v4563 = vpop.xlane.xlu0 %4562
        %v4564 = vsub.f32 %v4532, %v4542
        %v4565 = vsub.f32 %v4533, %v4545
        %v4566 = vsub.f32 %v4534, %v4548
        %v4567 = vsub.f32 %v4535, %v4551
        %v4568 = vsub.f32 %v4536, %v4554
        %v4569 = vsub.f32 %v4537, %v4557
        %v4570 = vsub.f32 %v4538, %v4560
        %v4571 = vsub.f32 %v4539, %v4563
        %v4572 = vmul.f32 %v4564, 1.442695
        %v4573 = vpow.pop %v4572
        %v4574 = vmul.f32 %v4565, 1.442695
        %v4575 = vpow.pop %v4574
        %v4576 = vmul.f32 %v4566, 1.442695
        %v4577 = vpow.pop %v4576
        %v4578 = vmul.f32 %v4567, 1.442695
        %v4579 = vpow.pop %v4578
        %v4580 = vmul.f32 %v4568, 1.442695
        %v4581 = vpow.pop %v4580
        %v4582 = vmul.f32 %v4569, 1.442695
        %v4583 = vpow.pop %v4582
        %v4584 = vmul.f32 %v4570, 1.442695
        %v4585 = vpow.pop %v4584
        %v4586 = vmul.f32 %v4571, 1.442695
        %v4587 = vpow.pop %v4586
        %v4588 = vsel %vm1248, %v4573, 0.0
        %4589 = vadd.xlane.f32.xlu0 %v4588
        %v4590 = vpop.xlane.xlu0 %4589
        %v4591 = vsel %vm1248, %v4575, 0.0
        %4592 = vadd.xlane.f32.xlu0 %v4591
        %v4593 = vpop.xlane.xlu0 %4592
        %v4594 = vsel %vm1248, %v4577, 0.0
        %4595 = vadd.xlane.f32.xlu0 %v4594
        %v4596 = vpop.xlane.xlu0 %4595
        %v4597 = vsel %vm1248, %v4579, 0.0
        %4598 = vadd.xlane.f32.xlu0 %v4597
        %v4599 = vpop.xlane.xlu0 %4598
        %v4600 = vsel %vm1248, %v4581, 0.0
        %4601 = vadd.xlane.f32.xlu0 %v4600
        %v4602 = vpop.xlane.xlu0 %4601
        %v4603 = vsel %vm1248, %v4583, 0.0
        %4604 = vadd.xlane.f32.xlu0 %v4603
        %v4605 = vpop.xlane.xlu0 %4604
        %v4606 = vsel %vm1248, %v4585, 0.0
        %4607 = vadd.xlane.f32.xlu0 %v4606
        %v4608 = vpop.xlane.xlu0 %4607
        %v4609 = vsel %vm1248, %v4587, 0.0
        %4610 = vadd.xlane.f32.xlu0 %v4609
        %v4611 = vpop.xlane.xlu0 %4610
        %v4612 = vrcp.pop %v4590
        %v4613 = vrcp.pop %v4593
        %v4614 = vrcp.pop %v4596
        %v4615 = vrcp.pop %v4599
        %v4616 = vrcp.pop %v4602
        %v4617 = vrcp.pop %v4605
        %v4618 = vrcp.pop %v4608
        %v4619 = vrcp.pop %v4611
        %v4620 = vmul.f32 %v4573, %v4612
        %v4621 = vmul.f32 %v4575, %v4613
        %v4622 = vmul.f32 %v4577, %v4614
        %v4623 = vmul.f32 %v4579, %v4615
        %v4624 = vmul.f32 %v4581, %v4616
        %v4625 = vmul.f32 %v4583, %v4617
        %v4626 = vmul.f32 %v4585, %v4618
        %v4627 = vmul.f32 %v4587, %v4619
        %v4628 = vpack.c.bf16 %v4620, %v4620
        %v4629 = vpack.c.bf16 %v4621, %v4621
        %v4630 = vpack.c.bf16 %v4622, %v4622
        %v4631 = vpack.c.bf16 %v4623, %v4623
        %v4632 = vpack.c.bf16 %v4624, %v4624
        %v4633 = vpack.c.bf16 %v4625, %v4625
        %v4634 = vpack.c.bf16 %v4626, %v4626
        %v4635 = vpack.c.bf16 %v4627, %v4627
        %v4638 = vunpack.c.l.b16 %v4628
        %v4639 = vunpack.c.l.b16 %v4629
        %v4640 = vpack.c.b16 %v4639, %v4638
        %4641 = vrot.lane.b32.xlu0 %v3581, 104
        %v4642 = vpop.permute.xlu0 %4641
        %v4645 = vsel %vm1248, %v4640, 0
        %4647 = vmatpush.bf16.msra.mxu0 0
        %4648 = vmatpush.bf16.msra.mxu0 0
        %4649 = vmatpush.bf16.msra.mxu0 0
        %4650 = vmatpush.bf16.msra.mxu0 0
        %4651 = vmatpush.bf16.msra.mxu0 0
        %4652 = vmatpush.bf16.msra.mxu0 0
        %4653 = vmatpush.bf16.msra.mxu0 0
        %4654 = vmatpush.bf16.msra.mxu0 %v4642
        %4655 = vmatmul.bf16.gmra.mxu0 %v4645
        %v4656 = vpop.f32.mrf.mxu0
        %v4657 = vadd.f32 0.0, %v4656
        %v4658 = vpop.f32.mrf.mxu0
        %v4659 = vadd.f32 0.0, %v4658
        %4660 = vdwg.mxu0
        %v4663 = vunpack.c.l.b16 %v4630
        %v4664 = vunpack.c.l.b16 %v4631
        %v4665 = vpack.c.b16 %v4664, %v4663
        %4666 = vrot.lane.b32.xlu0 %v3609, 104
        %v4667 = vpop.permute.xlu0 %4666
        %v4670 = vsel %vm1248, %v4665, 0
        %4672 = vmatpush.bf16.msra.mxu0 0
        %4673 = vmatpush.bf16.msra.mxu0 0
        %4674 = vmatpush.bf16.msra.mxu0 0
        %4675 = vmatpush.bf16.msra.mxu0 0
        %4676 = vmatpush.bf16.msra.mxu0 0
        %4677 = vmatpush.bf16.msra.mxu0 0
        %4678 = vmatpush.bf16.msra.mxu0 0
        %4679 = vmatpush.bf16.msra.mxu0 %v4667
        %4680 = vmatmul.bf16.gmra.mxu0 %v4670
        %v4681 = vpop.f32.mrf.mxu0
        %v4682 = vadd.f32 0.0, %v4681
        %v4683 = vpop.f32.mrf.mxu0
        %v4684 = vadd.f32 0.0, %v4683
        %4685 = vdwg.mxu0
        %v4688 = vunpack.c.l.b16 %v4632
        %v4689 = vunpack.c.l.b16 %v4633
        %v4690 = vpack.c.b16 %v4689, %v4688
        %4691 = vrot.lane.b32.xlu0 %v3637, 104
        %v4692 = vpop.permute.xlu0 %4691
        %v4695 = vsel %vm1248, %v4690, 0
        %4697 = vmatpush.bf16.msra.mxu0 0
        %4698 = vmatpush.bf16.msra.mxu0 0
        %4699 = vmatpush.bf16.msra.mxu0 0
        %4700 = vmatpush.bf16.msra.mxu0 0
        %4701 = vmatpush.bf16.msra.mxu0 0
        %4702 = vmatpush.bf16.msra.mxu0 0
        %4703 = vmatpush.bf16.msra.mxu0 0
        %4704 = vmatpush.bf16.msra.mxu0 %v4692
        %4705 = vmatmul.bf16.gmra.mxu0 %v4695
        %v4706 = vpop.f32.mrf.mxu0
        %v4707 = vadd.f32 0.0, %v4706
        %v4708 = vpop.f32.mrf.mxu0
        %v4709 = vadd.f32 0.0, %v4708
        %4710 = vdwg.mxu0
        %v4713 = vunpack.c.l.b16 %v4634
        %v4714 = vunpack.c.l.b16 %v4635
        %v4715 = vpack.c.b16 %v4714, %v4713
        %4716 = vrot.lane.b32.xlu0 %v3665, 104
        %v4717 = vpop.permute.xlu0 %4716
        %v4720 = vsel %vm1248, %v4715, 0
        %4722 = vmatpush.bf16.msra.mxu0 0
        %4723 = vmatpush.bf16.msra.mxu0 0
        %4724 = vmatpush.bf16.msra.mxu0 0
        %4725 = vmatpush.bf16.msra.mxu0 0
        %4726 = vmatpush.bf16.msra.mxu0 0
        %4727 = vmatpush.bf16.msra.mxu0 0
        %4728 = vmatpush.bf16.msra.mxu0 0
        %4729 = vmatpush.bf16.msra.mxu0 %v4717
        %4730 = vmatmul.bf16.gmra.mxu0 %v4720
        %v4731 = vpop.f32.mrf.mxu0
        %v4732 = vadd.f32 0.0, %v4731
        %v4733 = vpop.f32.mrf.mxu0
        %v4734 = vadd.f32 0.0, %v4733
        %4735 = vdwg.mxu0
        %v4736 = vpack.c.bf16 %v4659, %v4657
        %v4737 = vpack.c.bf16 %v4684, %v4682
        %v4738 = vpack.c.bf16 %v4709, %v4707
        %v4739 = vpack.c.bf16 %v4734, %v4732
        %v4741 = vsel %vm1129, %v4736, 0
        %v4744 = vsel %vm1129, %v4737, 0
        %v4747 = vsel %vm1129, %v4738, 0
        %v4750 = vsel %vm1129, %v4739, 0
        %v4753 = vsel %vm1777, %v3323, 0
        %4755 = vmatpush.bf16.msra.mxu0 0
        %4756 = vmatpush.bf16.msra.mxu0 0
        %4757 = vmatpush.bf16.msra.mxu0 0
        %4758 = vmatpush.bf16.msra.mxu0 0
        %4759 = vmatpush.bf16.msra.mxu0 0
        %4760 = vmatpush.bf16.msra.mxu0 0
        %4761 = vmatpush.bf16.msra.mxu0 0
        %4762 = vmatpush.bf16.msra.mxu0 %v4753
        %4763 = vmatmul.bf16.gmra.mxu0 %v4741
        %v4764 = vpop.f32.mrf.mxu0
        %v4765 = vadd.f32 0.0, %v4764
        %v4766 = vpop.f32.mrf.mxu0
        %v4767 = vadd.f32 0.0, %v4766
        %4768 = vmatmul.bf16.gmra.mxu0 %v4744
        %v4769 = vpop.f32.mrf.mxu0
        %v4770 = vadd.f32 0.0, %v4769
        %v4771 = vpop.f32.mrf.mxu0
        %v4772 = vadd.f32 0.0, %v4771
        %4773 = vmatmul.bf16.gmra.mxu0 %v4747
        %v4774 = vpop.f32.mrf.mxu0
        %v4775 = vadd.f32 0.0, %v4774
        %v4776 = vpop.f32.mrf.mxu0
        %v4777 = vadd.f32 0.0, %v4776
        %4778 = vmatmul.bf16.gmra.mxu0 %v4750
        %v4779 = vpop.f32.mrf.mxu0
        %v4780 = vadd.f32 0.0, %v4779
        %v4781 = vpop.f32.mrf.mxu0
        %v4782 = vadd.f32 0.0, %v4781
        %4783 = vdwg.mxu0
        %v4784 = vadd.f32 %v4428, %v4765
        %v4785 = vadd.f32 %v4429, %v4767
        %v4786 = vadd.f32 %v4430, %v4770
        %v4787 = vadd.f32 %v4431, %v4772
        %v4788 = vadd.f32 %v4432, %v4775
        %v4789 = vadd.f32 %v4433, %v4777
        %v4790 = vadd.f32 %v4434, %v4780
        %v4791 = vadd.f32 %v4435, %v4782
        %s4792 = scalar_lea.vmem %s10, 1
        %v4793 = vld [vmem:[%s4792] sm:$0x1]
        %v4795 = vperm.slane %v4793, 0
        %v4797 = vadd.f32 %v4784, %v4795
        %v4798 = vadd.f32 %v4785, %v4795
        %v4799 = vadd.f32 %v4786, %v4795
        %v4800 = vadd.f32 %v4787, %v4795
        %v4801 = vadd.f32 %v4788, %v4795
        %v4802 = vadd.f32 %v4789, %v4795
        %v4803 = vadd.f32 %v4790, %v4795
        %v4804 = vadd.f32 %v4791, %v4795
        %v4805 = vadd.f32 %v3138, %v4797
        %v4806 = vadd.f32 %v3139, %v4798
        %v4807 = vadd.f32 %v3140, %v4799
        %v4808 = vadd.f32 %v3141, %v4800
        %v4809 = vadd.f32 %v3142, %v4801
        %v4810 = vadd.f32 %v3143, %v4802
        %v4811 = vadd.f32 %v3144, %v4803
        %v4812 = vadd.f32 %v3145, %v4804
        %v4813 = vsel %vm951, %v4805, 0.0
        %4814 = vadd.xlane.f32.xlu0 %v4813
        %v4815 = vpop.xlane.xlu0 %4814
        %v4816 = vsel %vm951, %v4806, 0.0
        %4817 = vadd.xlane.f32.xlu0 %v4816
        %v4818 = vpop.xlane.xlu0 %4817
        %v4819 = vsel %vm951, %v4807, 0.0
        %4820 = vadd.xlane.f32.xlu0 %v4819
        %v4821 = vpop.xlane.xlu0 %4820
        %v4822 = vsel %vm951, %v4808, 0.0
        %4823 = vadd.xlane.f32.xlu0 %v4822
        %v4824 = vpop.xlane.xlu0 %4823
        %v4825 = vsel %vm951, %v4809, 0.0
        %4826 = vadd.xlane.f32.xlu0 %v4825
        %v4827 = vpop.xlane.xlu0 %4826
        %v4828 = vsel %vm951, %v4810, 0.0
        %4829 = vadd.xlane.f32.xlu0 %v4828
        %v4830 = vpop.xlane.xlu0 %4829
        %v4831 = vsel %vm951, %v4811, 0.0
        %4832 = vadd.xlane.f32.xlu0 %v4831
        %v4833 = vpop.xlane.xlu0 %4832
        %v4834 = vsel %vm951, %v4812, 0.0
        %4835 = vadd.xlane.f32.xlu0 %v4834
        %v4836 = vpop.xlane.xlu0 %4835
        %v4837 = vmul.f32 %v4815, %v2616
        %v4838 = vmul.f32 %v4818, %v2616
        %v4839 = vmul.f32 %v4821, %v2616
        %v4840 = vmul.f32 %v4824, %v2616
        %v4841 = vmul.f32 %v4827, %v2616
        %v4842 = vmul.f32 %v4830, %v2616
        %v4843 = vmul.f32 %v4833, %v2616
        %v4844 = vmul.f32 %v4836, %v2616
        %v4845 = vsub.f32 %v4805, %v4837
        %v4846 = vsub.f32 %v4806, %v4838
        %v4847 = vsub.f32 %v4807, %v4839
        %v4848 = vsub.f32 %v4808, %v4840
        %v4849 = vsub.f32 %v4809, %v4841
        %v4850 = vsub.f32 %v4810, %v4842
        %v4851 = vsub.f32 %v4811, %v4843
        %v4852 = vsub.f32 %v4812, %v4844
        %v4853 = vmul.f32 %v4845, %v4845
        %v4854 = vmul.f32 %v4846, %v4846
        %v4855 = vmul.f32 %v4847, %v4847
        %v4856 = vmul.f32 %v4848, %v4848
        %v4857 = vmul.f32 %v4849, %v4849
        %v4858 = vmul.f32 %v4850, %v4850
        %v4859 = vmul.f32 %v4851, %v4851
        %v4860 = vmul.f32 %v4852, %v4852
        %v4861 = vsel %vm951, %v4853, 0.0
        %4862 = vadd.xlane.f32.xlu0 %v4861
        %v4863 = vpop.xlane.xlu0 %4862
        %v4864 = vsel %vm951, %v4854, 0.0
        %4865 = vadd.xlane.f32.xlu0 %v4864
        %v4866 = vpop.xlane.xlu0 %4865
        %v4867 = vsel %vm951, %v4855, 0.0
        %4868 = vadd.xlane.f32.xlu0 %v4867
        %v4869 = vpop.xlane.xlu0 %4868
        %v4870 = vsel %vm951, %v4856, 0.0
        %4871 = vadd.xlane.f32.xlu0 %v4870
        %v4872 = vpop.xlane.xlu0 %4871
        %v4873 = vsel %vm951, %v4857, 0.0
        %4874 = vadd.xlane.f32.xlu0 %v4873
        %v4875 = vpop.xlane.xlu0 %4874
        %v4876 = vsel %vm951, %v4858, 0.0
        %4877 = vadd.xlane.f32.xlu0 %v4876
        %v4878 = vpop.xlane.xlu0 %4877
        %v4879 = vsel %vm951, %v4859, 0.0
        %4880 = vadd.xlane.f32.xlu0 %v4879
        %v4881 = vpop.xlane.xlu0 %4880
        %v4882 = vsel %vm951, %v4860, 0.0
        %4883 = vadd.xlane.f32.xlu0 %v4882
        %v4884 = vpop.xlane.xlu0 %4883
        %v4885 = vmul.f32 %v4863, %v2616
        %v4886 = vmul.f32 %v4866, %v2616
        %v4887 = vmul.f32 %v4869, %v2616
        %v4888 = vmul.f32 %v4872, %v2616
        %v4889 = vmul.f32 %v4875, %v2616
        %v4890 = vmul.f32 %v4878, %v2616
        %v4891 = vmul.f32 %v4881, %v2616
        %v4892 = vmul.f32 %v4884, %v2616
        %v4893 = vadd.f32 %v4885, 1e-05
        %v4894 = vadd.f32 %v4886, 1e-05
        %v4895 = vadd.f32 %v4887, 1e-05
        %v4896 = vadd.f32 %v4888, 1e-05
        %v4897 = vadd.f32 %v4889, 1e-05
        %v4898 = vadd.f32 %v4890, 1e-05
        %v4899 = vadd.f32 %v4891, 1e-05
        %v4900 = vadd.f32 %v4892, 1e-05
        %v4901 = vrsqrt.pop %v4893
        %v4902 = vmul.f32 %v4901, %v4893
        %v4903 = vmul.f32 %v4902, %v4901
        %v4904 = vmul.f32 0.5, %v4903
        %v4905 = vsub.f32 1.5, %v4904
        %v4906 = vmul.f32 %v4901, %v4905
        %vm4907 = vweird.f32 %v4893
        %vm4908 = vweird.f32 %v4901
        %vm4909 = vmor %vm4907, %vm4908
        %v4910 = vsel %vm4909, %v4901, %v4906
        %v4911 = vrsqrt.pop %v4894
        %v4912 = vmul.f32 %v4911, %v4894
        %v4913 = vmul.f32 %v4912, %v4911
        %v4914 = vmul.f32 0.5, %v4913
        %v4915 = vsub.f32 1.5, %v4914
        %v4916 = vmul.f32 %v4911, %v4915
        %vm4917 = vweird.f32 %v4894
        %vm4918 = vweird.f32 %v4911
        %vm4919 = vmor %vm4917, %vm4918
        %v4920 = vsel %vm4919, %v4911, %v4916
        %v4921 = vrsqrt.pop %v4895
        %v4922 = vmul.f32 %v4921, %v4895
        %v4923 = vmul.f32 %v4922, %v4921
        %v4924 = vmul.f32 0.5, %v4923
        %v4925 = vsub.f32 1.5, %v4924
        %v4926 = vmul.f32 %v4921, %v4925
        %vm4927 = vweird.f32 %v4895
        %vm4928 = vweird.f32 %v4921
        %vm4929 = vmor %vm4927, %vm4928
        %v4930 = vsel %vm4929, %v4921, %v4926
        %v4931 = vrsqrt.pop %v4896
        %v4932 = vmul.f32 %v4931, %v4896
        %v4933 = vmul.f32 %v4932, %v4931
        %v4934 = vmul.f32 0.5, %v4933
        %v4935 = vsub.f32 1.5, %v4934
        %v4936 = vmul.f32 %v4931, %v4935
        %vm4937 = vweird.f32 %v4896
        %vm4938 = vweird.f32 %v4931
        %vm4939 = vmor %vm4937, %vm4938
        %v4940 = vsel %vm4939, %v4931, %v4936
        %v4941 = vrsqrt.pop %v4897
        %v4942 = vmul.f32 %v4941, %v4897
        %v4943 = vmul.f32 %v4942, %v4941
        %v4944 = vmul.f32 0.5, %v4943
        %v4945 = vsub.f32 1.5, %v4944
        %v4946 = vmul.f32 %v4941, %v4945
        %vm4947 = vweird.f32 %v4897
        %vm4948 = vweird.f32 %v4941
        %vm4949 = vmor %vm4947, %vm4948
        %v4950 = vsel %vm4949, %v4941, %v4946
        %v4951 = vrsqrt.pop %v4898
        %v4952 = vmul.f32 %v4951, %v4898
        %v4953 = vmul.f32 %v4952, %v4951
        %v4954 = vmul.f32 0.5, %v4953
        %v4955 = vsub.f32 1.5, %v4954
        %v4956 = vmul.f32 %v4951, %v4955
        %vm4957 = vweird.f32 %v4898
        %vm4958 = vweird.f32 %v4951
        %vm4959 = vmor %vm4957, %vm4958
        %v4960 = vsel %vm4959, %v4951, %v4956
        %v4961 = vrsqrt.pop %v4899
        %v4962 = vmul.f32 %v4961, %v4899
        %v4963 = vmul.f32 %v4962, %v4961
        %v4964 = vmul.f32 0.5, %v4963
        %v4965 = vsub.f32 1.5, %v4964
        %v4966 = vmul.f32 %v4961, %v4965
        %vm4967 = vweird.f32 %v4899
        %vm4968 = vweird.f32 %v4961
        %vm4969 = vmor %vm4967, %vm4968
        %v4970 = vsel %vm4969, %v4961, %v4966
        %v4971 = vrsqrt.pop %v4900
        %v4972 = vmul.f32 %v4971, %v4900
        %v4973 = vmul.f32 %v4972, %v4971
        %v4974 = vmul.f32 0.5, %v4973
        %v4975 = vsub.f32 1.5, %v4974
        %v4976 = vmul.f32 %v4971, %v4975
        %vm4977 = vweird.f32 %v4900
        %vm4978 = vweird.f32 %v4971
        %vm4979 = vmor %vm4977, %vm4978
        %v4980 = vsel %vm4979, %v4971, %v4976
        %v4981 = vmul.f32 %v4845, %v4910
        %v4982 = vmul.f32 %v4846, %v4920
        %v4983 = vmul.f32 %v4847, %v4930
        %v4984 = vmul.f32 %v4848, %v4940
        %v4985 = vmul.f32 %v4849, %v4950
        %v4986 = vmul.f32 %v4850, %v4960
        %v4987 = vmul.f32 %v4851, %v4970
        %v4988 = vmul.f32 %v4852, %v4980
        %v4990 = vperm.slane %v3147, 0
        %v4992 = vmul.f32 %v4981, %v4990
        %v4993 = vmul.f32 %v4982, %v4990
        %v4994 = vmul.f32 %v4983, %v4990
        %v4995 = vmul.f32 %v4984, %v4990
        %v4996 = vmul.f32 %v4985, %v4990
        %v4997 = vmul.f32 %v4986, %v4990
        %v4998 = vmul.f32 %v4987, %v4990
        %v4999 = vmul.f32 %v4988, %v4990
        %v5001 = vperm.slane %v3149, 0
        %v5003 = vadd.f32 %v4992, %v5001
        %v5004 = vadd.f32 %v4993, %v5001
        %v5005 = vadd.f32 %v4994, %v5001
        %v5006 = vadd.f32 %v4995, %v5001
        %v5007 = vadd.f32 %v4996, %v5001
        %v5008 = vadd.f32 %v4997, %v5001
        %v5009 = vadd.f32 %v4998, %v5001
        %v5010 = vadd.f32 %v4999, %v5001
        %v5011 = vpack.c.bf16 %v5004, %v5003
        %v5012 = vpack.c.bf16 %v5006, %v5005
        %v5013 = vpack.c.bf16 %v5008, %v5007
        %v5014 = vpack.c.bf16 %v5010, %v5009
        %s5015 = scalar_lea.vmem [#allocation10], 16
        %v5016 = vld [vmem:[%s5015] sm:$0xf]
        %v5017 = vld [vmem:[%s5015 + $0x4] sm:$0xf]
        %v5018 = vld [vmem:[%s5015 + $0x8] sm:$0xf]
        %v5019 = vld [vmem:[%s5015 + $0xc] sm:$0xf]
        %s5020 = scalar_lea.vmem %s12, 1
        %v5021 = vld [vmem:[%s5020] sm:$0x1]
        %v5023 = vperm.slane %v5021, 0
        %v5029 = vunpack.c.l.b16 %v5016
        %v5030 = vunpack.c.l.b16 %v5017
        %v5031 = vunpack.c.l.b16 %v5018
        %v5032 = vunpack.c.l.b16 %v5019
        %v5033 = vpack.c.b16 %v5030, %v5029
        %v5034 = vpack.c.b16 %v5032, %v5031
        %v5038 = vsel %vm951, %v5011, 0
        %v5041 = vsel %vm951, %v5012, 0
        %v5044 = vsel %vm951, %v5013, 0
        %v5047 = vsel %vm951, %v5014, 0
        %5049 = vmatpush.bf16.msra.mxu0 0
        %5050 = vmatpush.bf16.msra.mxu0 0
        %5051 = vmatpush.bf16.msra.mxu0 0
        %5052 = vmatpush.bf16.msra.mxu0 0
        %5053 = vmatpush.bf16.msra.mxu0 0
        %5054 = vmatpush.bf16.msra.mxu0 0
        %5055 = vmatpush.bf16.msra.mxu0 %v5034
        %5056 = vmatpush.bf16.msra.mxu0 %v5033
        %5057 = vmatmul.bf16.gmra.mxu0 %v5038
        %v5058 = vpop.f32.mrf.mxu0
        %v5059 = vadd.f32 %v5023, %v5058
        %v5060 = vpop.f32.mrf.mxu0
        %v5061 = vadd.f32 %v5023, %v5060
        %5062 = vmatmul.bf16.gmra.mxu0 %v5041
        %v5063 = vpop.f32.mrf.mxu0
        %v5064 = vadd.f32 %v5023, %v5063
        %v5065 = vpop.f32.mrf.mxu0
        %v5066 = vadd.f32 %v5023, %v5065
        %5067 = vmatmul.bf16.gmra.mxu0 %v5044
        %v5068 = vpop.f32.mrf.mxu0
        %v5069 = vadd.f32 %v5023, %v5068
        %v5070 = vpop.f32.mrf.mxu0
        %v5071 = vadd.f32 %v5023, %v5070
        %5072 = vmatmul.bf16.gmra.mxu0 %v5047
        %v5073 = vpop.f32.mrf.mxu0
        %v5074 = vadd.f32 %v5023, %v5073
        %v5075 = vpop.f32.mrf.mxu0
        %v5076 = vadd.f32 %v5023, %v5075
        %5077 = vdwg.mxu0
        %v5078 = vmax.f32 %v5059, 0.0
        %v5079 = vmax.f32 %v5061, 0.0
        %v5080 = vmax.f32 %v5064, 0.0
        %v5081 = vmax.f32 %v5066, 0.0
        %v5082 = vmax.f32 %v5069, 0.0
        %v5083 = vmax.f32 %v5071, 0.0
        %v5084 = vmax.f32 %v5074, 0.0
        %v5085 = vmax.f32 %v5076, 0.0
        %v5086 = vpack.c.bf16 %v5079, %v5078
        %v5087 = vpack.c.bf16 %v5081, %v5080
        %v5088 = vpack.c.bf16 %v5083, %v5082
        %v5089 = vpack.c.bf16 %v5085, %v5084
        %s5090 = scalar_lea.vmem %s13, 32
        %v5091 = vld [vmem:[%s5090] sm:$0xf]
        %v5092 = vld [vmem:[%s5090 + $0x4] sm:$0xf]
        %v5093 = vld [vmem:[%s5090 + $0x8] sm:$0xf]
        %v5094 = vld [vmem:[%s5090 + $0xc] sm:$0xf]
        %v5095 = vld [vmem:[%s5090 + $0x10] sm:$0xf]
        %v5096 = vld [vmem:[%s5090 + $0x14] sm:$0xf]
        %v5097 = vld [vmem:[%s5090 + $0x18] sm:$0xf]
        %v5098 = vld [vmem:[%s5090 + $0x1c] sm:$0xf]
        %s5099 = scalar_lea.vmem %s14, 1
        %v5100 = vld [vmem:[%s5099] sm:$0x1]
        %v5102 = vperm.slane %v5100, 0
        %v5112 = vunpack.c.l.b16 %v5091
        %v5113 = vunpack.c.l.b16 %v5092
        %v5114 = vunpack.c.l.b16 %v5093
        %v5115 = vunpack.c.l.b16 %v5094
        %v5116 = vunpack.c.l.b16 %v5095
        %v5117 = vunpack.c.l.b16 %v5096
        %v5118 = vunpack.c.l.b16 %v5097
        %v5119 = vunpack.c.l.b16 %v5098
        %v5120 = vpack.c.b16 %v5113, %v5112
        %v5121 = vpack.c.b16 %v5115, %v5114
        %v5122 = vpack.c.b16 %v5117, %v5116
        %v5123 = vpack.c.b16 %v5119, %v5118
        %v5129 = vsel %vm2904, %v5086, 0
        %v5132 = vsel %vm2904, %v5087, 0
        %v5135 = vsel %vm2904, %v5088, 0
        %v5138 = vsel %vm2904, %v5089, 0
        %5140 = vmatpush.bf16.msra.mxu0 0
        %5141 = vmatpush.bf16.msra.mxu0 0
        %5142 = vmatpush.bf16.msra.mxu0 0
        %5143 = vmatpush.bf16.msra.mxu0 0
        %5144 = vmatpush.bf16.msra.mxu0 %v5123
        %5145 = vmatpush.bf16.msra.mxu0 %v5122
        %5146 = vmatpush.bf16.msra.mxu0 %v5121
        %5147 = vmatpush.bf16.msra.mxu0 %v5120
        %5148 = vmatmul.bf16.gmra.mxu0 %v5129
        %v5149 = vpop.f32.mrf.mxu0
        %v5150 = vadd.f32 %v5102, %v5149
        %v5151 = vpop.f32.mrf.mxu0
        %v5152 = vadd.f32 %v5102, %v5151
        %5153 = vmatmul.bf16.gmra.mxu0 %v5132
        %v5154 = vpop.f32.mrf.mxu0
        %v5155 = vadd.f32 %v5102, %v5154
        %v5156 = vpop.f32.mrf.mxu0
        %v5157 = vadd.f32 %v5102, %v5156
        %5158 = vmatmul.bf16.gmra.mxu0 %v5135
        %v5159 = vpop.f32.mrf.mxu0
        %v5160 = vadd.f32 %v5102, %v5159
        %v5161 = vpop.f32.mrf.mxu0
        %v5162 = vadd.f32 %v5102, %v5161
        %5163 = vmatmul.bf16.gmra.mxu0 %v5138
        %v5164 = vpop.f32.mrf.mxu0
        %v5165 = vadd.f32 %v5102, %v5164
        %v5166 = vpop.f32.mrf.mxu0
        %v5167 = vadd.f32 %v5102, %v5166
        %5168 = vdwg.mxu0
        %v5169 = vadd.f32 %v5003, %v5150
        %v5170 = vadd.f32 %v5004, %v5152
        %v5171 = vadd.f32 %v5005, %v5155
        %v5172 = vadd.f32 %v5006, %v5157
        %v5173 = vadd.f32 %v5007, %v5160
        %v5174 = vadd.f32 %v5008, %v5162
        %v5175 = vadd.f32 %v5009, %v5165
        %v5176 = vadd.f32 %v5010, %v5167
        %v5177 = vsel %vm951, %v5169, 0.0
        %5178 = vadd.xlane.f32.xlu0 %v5177
        %v5179 = vpop.xlane.xlu0 %5178
        %v5180 = vsel %vm951, %v5170, 0.0
        %5181 = vadd.xlane.f32.xlu0 %v5180
        %v5182 = vpop.xlane.xlu0 %5181
        %v5183 = vsel %vm951, %v5171, 0.0
        %5184 = vadd.xlane.f32.xlu0 %v5183
        %v5185 = vpop.xlane.xlu0 %5184
        %v5186 = vsel %vm951, %v5172, 0.0
        %5187 = vadd.xlane.f32.xlu0 %v5186
        %v5188 = vpop.xlane.xlu0 %5187
        %v5189 = vsel %vm951, %v5173, 0.0
        %5190 = vadd.xlane.f32.xlu0 %v5189
        %v5191 = vpop.xlane.xlu0 %5190
        %v5192 = vsel %vm951, %v5174, 0.0
        %5193 = vadd.xlane.f32.xlu0 %v5192
        %v5194 = vpop.xlane.xlu0 %5193
        %v5195 = vsel %vm951, %v5175, 0.0
        %5196 = vadd.xlane.f32.xlu0 %v5195
        %v5197 = vpop.xlane.xlu0 %5196
        %v5198 = vsel %vm951, %v5176, 0.0
        %5199 = vadd.xlane.f32.xlu0 %v5198
        %v5200 = vpop.xlane.xlu0 %5199
        %v5201 = vmul.f32 %v5179, %v2616
        %v5202 = vmul.f32 %v5182, %v2616
        %v5203 = vmul.f32 %v5185, %v2616
        %v5204 = vmul.f32 %v5188, %v2616
        %v5205 = vmul.f32 %v5191, %v2616
        %v5206 = vmul.f32 %v5194, %v2616
        %v5207 = vmul.f32 %v5197, %v2616
        %v5208 = vmul.f32 %v5200, %v2616
        %v5209 = vsub.f32 %v5169, %v5201
        %v5210 = vsub.f32 %v5170, %v5202
        %v5211 = vsub.f32 %v5171, %v5203
        %v5212 = vsub.f32 %v5172, %v5204
        %v5213 = vsub.f32 %v5173, %v5205
        %v5214 = vsub.f32 %v5174, %v5206
        %v5215 = vsub.f32 %v5175, %v5207
        %v5216 = vsub.f32 %v5176, %v5208
        %v5217 = vmul.f32 %v5209, %v5209
        %v5218 = vmul.f32 %v5210, %v5210
        %v5219 = vmul.f32 %v5211, %v5211
        %v5220 = vmul.f32 %v5212, %v5212
        %v5221 = vmul.f32 %v5213, %v5213
        %v5222 = vmul.f32 %v5214, %v5214
        %v5223 = vmul.f32 %v5215, %v5215
        %v5224 = vmul.f32 %v5216, %v5216
        %v5225 = vsel %vm951, %v5217, 0.0
        %5226 = vadd.xlane.f32.xlu0 %v5225
        %v5227 = vpop.xlane.xlu0 %5226
        %v5228 = vsel %vm951, %v5218, 0.0
        %5229 = vadd.xlane.f32.xlu0 %v5228
        %v5230 = vpop.xlane.xlu0 %5229
        %v5231 = vsel %vm951, %v5219, 0.0
        %5232 = vadd.xlane.f32.xlu0 %v5231
        %v5233 = vpop.xlane.xlu0 %5232
        %v5234 = vsel %vm951, %v5220, 0.0
        %5235 = vadd.xlane.f32.xlu0 %v5234
        %v5236 = vpop.xlane.xlu0 %5235
        %v5237 = vsel %vm951, %v5221, 0.0
        %5238 = vadd.xlane.f32.xlu0 %v5237
        %v5239 = vpop.xlane.xlu0 %5238
        %v5240 = vsel %vm951, %v5222, 0.0
        %5241 = vadd.xlane.f32.xlu0 %v5240
        %v5242 = vpop.xlane.xlu0 %5241
        %v5243 = vsel %vm951, %v5223, 0.0
        %5244 = vadd.xlane.f32.xlu0 %v5243
        %v5245 = vpop.xlane.xlu0 %5244
        %v5246 = vsel %vm951, %v5224, 0.0
        %5247 = vadd.xlane.f32.xlu0 %v5246
        %v5248 = vpop.xlane.xlu0 %5247
        %v5249 = vmul.f32 %v5227, %v2616
        %v5250 = vmul.f32 %v5230, %v2616
        %v5251 = vmul.f32 %v5233, %v2616
        %v5252 = vmul.f32 %v5236, %v2616
        %v5253 = vmul.f32 %v5239, %v2616
        %v5254 = vmul.f32 %v5242, %v2616
        %v5255 = vmul.f32 %v5245, %v2616
        %v5256 = vmul.f32 %v5248, %v2616
        %v5257 = vadd.f32 %v5249, 1e-05
        %v5258 = vadd.f32 %v5250, 1e-05
        %v5259 = vadd.f32 %v5251, 1e-05
        %v5260 = vadd.f32 %v5252, 1e-05
        %v5261 = vadd.f32 %v5253, 1e-05
        %v5262 = vadd.f32 %v5254, 1e-05
        %v5263 = vadd.f32 %v5255, 1e-05
        %v5264 = vadd.f32 %v5256, 1e-05
        %v5265 = vrsqrt.pop %v5257
        %v5266 = vmul.f32 %v5265, %v5257
        %v5267 = vmul.f32 %v5266, %v5265
        %v5268 = vmul.f32 0.5, %v5267
        %v5269 = vsub.f32 1.5, %v5268
        %v5270 = vmul.f32 %v5265, %v5269
        %vm5271 = vweird.f32 %v5257
        %vm5272 = vweird.f32 %v5265
        %vm5273 = vmor %vm5271, %vm5272
        %v5274 = vsel %vm5273, %v5265, %v5270
        %v5275 = vrsqrt.pop %v5258
        %v5276 = vmul.f32 %v5275, %v5258
        %v5277 = vmul.f32 %v5276, %v5275
        %v5278 = vmul.f32 0.5, %v5277
        %v5279 = vsub.f32 1.5, %v5278
        %v5280 = vmul.f32 %v5275, %v5279
        %vm5281 = vweird.f32 %v5258
        %vm5282 = vweird.f32 %v5275
        %vm5283 = vmor %vm5281, %vm5282
        %v5284 = vsel %vm5283, %v5275, %v5280
        %v5285 = vrsqrt.pop %v5259
        %v5286 = vmul.f32 %v5285, %v5259
        %v5287 = vmul.f32 %v5286, %v5285
        %v5288 = vmul.f32 0.5, %v5287
        %v5289 = vsub.f32 1.5, %v5288
        %v5290 = vmul.f32 %v5285, %v5289
        %vm5291 = vweird.f32 %v5259
        %vm5292 = vweird.f32 %v5285
        %vm5293 = vmor %vm5291, %vm5292
        %v5294 = vsel %vm5293, %v5285, %v5290
        %v5295 = vrsqrt.pop %v5260
        %v5296 = vmul.f32 %v5295, %v5260
        %v5297 = vmul.f32 %v5296, %v5295
        %v5298 = vmul.f32 0.5, %v5297
        %v5299 = vsub.f32 1.5, %v5298
        %v5300 = vmul.f32 %v5295, %v5299
        %vm5301 = vweird.f32 %v5260
        %vm5302 = vweird.f32 %v5295
        %vm5303 = vmor %vm5301, %vm5302
        %v5304 = vsel %vm5303, %v5295, %v5300
        %v5305 = vrsqrt.pop %v5261
        %v5306 = vmul.f32 %v5305, %v5261
        %v5307 = vmul.f32 %v5306, %v5305
        %v5308 = vmul.f32 0.5, %v5307
        %v5309 = vsub.f32 1.5, %v5308
        %v5310 = vmul.f32 %v5305, %v5309
        %vm5311 = vweird.f32 %v5261
        %vm5312 = vweird.f32 %v5305
        %vm5313 = vmor %vm5311, %vm5312
        %v5314 = vsel %vm5313, %v5305, %v5310
        %v5315 = vrsqrt.pop %v5262
        %v5316 = vmul.f32 %v5315, %v5262
        %v5317 = vmul.f32 %v5316, %v5315
        %v5318 = vmul.f32 0.5, %v5317
        %v5319 = vsub.f32 1.5, %v5318
        %v5320 = vmul.f32 %v5315, %v5319
        %vm5321 = vweird.f32 %v5262
        %vm5322 = vweird.f32 %v5315
        %vm5323 = vmor %vm5321, %vm5322
        %v5324 = vsel %vm5323, %v5315, %v5320
        %v5325 = vrsqrt.pop %v5263
        %v5326 = vmul.f32 %v5325, %v5263
        %v5327 = vmul.f32 %v5326, %v5325
        %v5328 = vmul.f32 0.5, %v5327
        %v5329 = vsub.f32 1.5, %v5328
        %v5330 = vmul.f32 %v5325, %v5329
        %vm5331 = vweird.f32 %v5263
        %vm5332 = vweird.f32 %v5325
        %vm5333 = vmor %vm5331, %vm5332
        %v5334 = vsel %vm5333, %v5325, %v5330
        %v5335 = vrsqrt.pop %v5264
        %v5336 = vmul.f32 %v5335, %v5264
        %v5337 = vmul.f32 %v5336, %v5335
        %v5338 = vmul.f32 0.5, %v5337
        %v5339 = vsub.f32 1.5, %v5338
        %v5340 = vmul.f32 %v5335, %v5339
        %vm5341 = vweird.f32 %v5264
        %vm5342 = vweird.f32 %v5335
        %vm5343 = vmor %vm5341, %vm5342
        %v5344 = vsel %vm5343, %v5335, %v5340
        %v5345 = vmul.f32 %v5209, %v5274
        %v5346 = vmul.f32 %v5210, %v5284
        %v5347 = vmul.f32 %v5211, %v5294
        %v5348 = vmul.f32 %v5212, %v5304
        %v5349 = vmul.f32 %v5213, %v5314
        %v5350 = vmul.f32 %v5214, %v5324
        %v5351 = vmul.f32 %v5215, %v5334
        %v5352 = vmul.f32 %v5216, %v5344
        %v5353 = vmul.f32 %v5345, %v4990
        %v5354 = vmul.f32 %v5346, %v4990
        %v5355 = vmul.f32 %v5347, %v4990
        %v5356 = vmul.f32 %v5348, %v4990
        %v5357 = vmul.f32 %v5349, %v4990
        %v5358 = vmul.f32 %v5350, %v4990
        %v5359 = vmul.f32 %v5351, %v4990
        %v5360 = vmul.f32 %v5352, %v4990
        %v5361 = vadd.f32 %v5353, %v5001
        %v5362 = vadd.f32 %v5354, %v5001
        %v5363 = vadd.f32 %v5355, %v5001
        %v5364 = vadd.f32 %v5356, %v5001
        %v5365 = vadd.f32 %v5357, %v5001
        %v5366 = vadd.f32 %v5358, %v5001
        %v5367 = vadd.f32 %v5359, %v5001
        %v5368 = vadd.f32 %v5360, %v5001
        %5369 = vst.msk [vmem:[%s660] sm:$0xff] %vm951, %v5361
        %5370 = vst.msk [vmem:[%s660 + $0x8] sm:$0xff] %vm951, %v5362
        %5371 = vst.msk [vmem:[%s660 + $0x10] sm:$0xff] %vm951, %v5363
        %5372 = vst.msk [vmem:[%s660 + $0x18] sm:$0xff] %vm951, %v5364
        %5373 = vst.msk [vmem:[%s660 + $0x20] sm:$0xff] %vm951, %v5365
        %5374 = vst.msk [vmem:[%s660 + $0x28] sm:$0xff] %vm951, %v5366
        %5375 = vst.msk [vmem:[%s660 + $0x30] sm:$0xff] %vm951, %v5367
        %5376 = vst.msk [vmem:[%s660 + $0x38] sm:$0xff] %vm951, %v5368
        %s5377 = sand.u32 %s421, 1
        %s5378 = scalar_lea.sflag [#allocation4], %s5377
        %s5379 = sand.u32 %s421, 1
        %s5380 = smul.addr %s5379, 64
        %s5381 = scalar_lea.vmem [#allocation13], %s5380
        // Predicated region
        $region113: #{tpu_custom_call.1} parent=87 // pred_check
          %p5382 = pneg %p431
        $region114: #{tpu_custom_call.1} parent=87 // pred_check_branch
          %5384 = sbr.rel (%p5382) target = $region116
        $region115: #{tpu_custom_call.1} parent=87 // pred_region
          %s5385 = smul.u32 4, %s42
          %5387 = vsyncadd %s5378, 0
          %s5388 = smul.addr %s5385, 2
          %s5389 = smul.addr %s41, 8
          %s5390 = sadd.s32 %s5388, %s5389
          %s5391 = smul.addr %s5390, 8
          %s5392 = scalar_lea.hbm %s17, %s5391
          %s5393 = sshll.u32 %s5381, 4
          %s5394 = int_to_ptr.vmem [resolvable:$true] %s5393
          %s5395 = sshll.u32 %s5392, 4
          %s5396 = int_to_ptr.hbm [resolvable:$true] %s5395
          %5401 = dma.vmem_to_hbm [thread:$0]  %s5394, 1024, %s5396, %s5378, 128, 128, 8
        $region116: #{tpu_custom_call.1} parent=87 // pred_fallthru
          _
      $region88: #{tpu_custom_call.1} parent=5 // pred_fallthru
        _
      %p5402 = scmp.le.s32.totalorder 2, %s32
      // Predicated region
      $region117: #{tpu_custom_call.1} parent=5 // pred_check
        %p5403 = pneg %p5402
      $region118: #{tpu_custom_call.1} parent=5 // pred_check_branch
        %5405 = sbr.rel (%p5403) target = $region120
      $region119: #{tpu_custom_call.1} parent=5 // pred_region
        %s5406 = ssub.s32 %s32, 2
        // Predicated region
        $region121: #{tpu_custom_call.1} parent=119 // pred_check
          %p5407 = pneg %p437
        $region122: #{tpu_custom_call.1} parent=119 // pred_check_branch
          %5409 = sbr.rel (%p5407) target = $region124
        $region123: #{tpu_custom_call.1} parent=119 // pred_region
          %s5410 = sand.u32 %s422, 1
          %s5411 = scalar_lea.sflag [#allocation4], %s5410
          %s5412 = sand.u32 %s422, 1
          %s5413 = smul.addr %s5412, 64
          %s5414 = scalar_lea.vmem [#allocation13], %s5413
          %5416 = dma.done %s5411, 1024
        $region124: #{tpu_custom_call.1} parent=119 // pred_fallthru
          _
      $region120: #{tpu_custom_call.1} parent=5 // pred_fallthru
        _
    $region6: #{tpu_custom_call.1} parent=1 // loop_footer
      %s36 = sadd.s32 1, %s32
    $region7: #{tpu_custom_call.1} parent=1 // loop_footer_branch
      %31 = sbr.rel target = $region3
    $region8: #{tpu_custom_call.1} parent=1 // loop_exit
      _
    %5417 = vsyncpa [#allocation3], 1
    %s5418 = scalar_lea.sflag [#allocation3], 1
    %5419 = vsyncpa %s5418, 1
    %5420 = vsyncpa [#allocation6], 1
    %5421 = vsyncpa [#allocation9], 1
    %5422 = vsyncpa [#allocation12], 1
    %5423 = vsyncpa [#allocation4], 1
    %s5424 = scalar_lea.sflag [#allocation4], 1
    %5425 = vsyncpa %s5424, 1

</llo_original>
